<compile_context>
chip_gen: v7x
topology: tpu7x:2x2x1
jax: 0.10.0
libtpu: 0.0.40
codegen_flags: <defaults>
</compile_context>

<pallas_src>
import functools
import math

import jax
import jax.numpy as jnp
from jax.experimental import pallas as pl
from jax.experimental.pallas import tpu as pltpu

LANE = 128


# ----------------------------------------------------------------------------
# Fused kernel: GNN1 -> LN1 -> GNN2 + residual -> LN2 -> GNN3 -> LN3 -> ZINB head
# (one grid step == one batch element; all activations stay in VMEM)
# ----------------------------------------------------------------------------
def _gnnui_zinb_kernel(x0_ref, aq_ref, ah_ref,
                       t1_ref, b1_ref, g1_ref, be1_ref,
                       t2_ref, b2_ref, g2_ref, be2_ref,
                       t3_ref, b3_ref, g3_ref, be3_ref,
                       wh_ref, bh_ref, hmask_ref, zmask_ref,
                       out_ref, *, orders, activation, inv_z, ln_eps):
    f32 = jnp.float32
    bf16 = jnp.bfloat16
    aq = aq_ref[...]            # (N, N) bf16 forward random-walk matrix
    ah = ah_ref[...]            # (N, N) bf16 backward random-walk matrix
    zmask = zmask_ref[...]      # (1, Z_PAD) 1.0 on the real z lanes

    def d_gcn(hin, theta_ref, bias_ref, act):
        # Chebyshev-style diffusion, replicating torch D_GCN exactly (x0/x1 carry
        # over between the two supports when orders >= 2).  Per-term accumulation:
        # one (N, C) @ (C, Z) bf16 matmul per diffusion term, f32 accumulator.
        x0 = hin
        y = jnp.dot(x0.astype(bf16), theta_ref[0], preferred_element_type=f32)
        m = 1
        for a in (aq, ah):
            x1 = jnp.dot(a, x0.astype(bf16), preferred_element_type=f32)
            y = y + jnp.dot(x1.astype(bf16), theta_ref[m], preferred_element_type=f32)
            m += 1
            for _ in range(2, orders + 1):
                x2 = 2.0 * jnp.dot(a, x1.astype(bf16),
                                   preferred_element_type=f32) - x0
                y = y + jnp.dot(x2.astype(bf16), theta_ref[m],
                                preferred_element_type=f32)
                m += 1
                x1, x0 = x2, x1
        y = y + bias_ref[...]
        if act == 'relu':
            y = jnp.maximum(y, 0.0)
        elif act == 'linear':
            pass
        else:
            raise ValueError(f'Activation {act} not supported.')
        return y                                       # (N, Z_PAD) f32, pad lanes 0

    def layer_norm(hh, g_ref, be_ref):
        # hh has zeros on the padded lanes, so a full-lane sum == sum over z lanes.
        mean = jnp.sum(hh, axis=-1, keepdims=True) * inv_z
        xc = (hh - mean) * zmask
        var = jnp.sum(xc * xc, axis=-1, keepdims=True) * inv_z
        return xc * jax.lax.rsqrt(var + ln_eps) * g_ref[...] + be_ref[...]

    x0 = x0_ref[0]                                      # (N, CIN_PAD) f32
    h1 = layer_norm(d_gcn(x0, t1_ref, b1_ref, 'relu'), g1_ref, be1_ref)
    h2 = layer_norm(d_gcn(h1, t2_ref, b2_ref, 'relu') + h1, g2_ref, be2_ref)
    h3 = layer_norm(d_gcn(h2, t3_ref, b3_ref, activation), g3_ref, be3_ref)

    # Merged ZINB head: one matmul producing [n | p | pi | pad] lanes.
    lin = jnp.dot(h3.astype(bf16), wh_ref[...],
                  preferred_element_type=f32) + bh_ref[...]
    t = jnp.exp(-jnp.abs(lin))                          # shared transcendental
    softplus = jnp.maximum(lin, 0.0) + jnp.log(1.0 + t)
    r = 1.0 / (1.0 + t)
    sigmoid = jnp.where(lin >= 0.0, r, t * r)           # numerically stable
    out_ref[0] = jnp.where(hmask_ref[...] > 0.5, softplus, sigmoid
                           ).astype(out_ref.dtype)


# ----------------------------------------------------------------------------
# Parameter packing (done once, outside the kernel) — shared (not batch-expanded)
# weights, reordered per diffusion term and zero-padded to lane-dense widths.
# ----------------------------------------------------------------------------
def pack_params(params, *, order, h, z, num_features,
                cin_pad=LANE, z_pad=LANE, out_pad=LANE):
    nm = 2 * order + 1

    def pad_to(a, shape):
        a = jnp.asarray(a, jnp.float32)
        out = jnp.zeros(shape, jnp.float32)
        return out.at[tuple(slice(0, s) for s in a.shape)].set(a)

    def theta_pack(theta, c_in, c_out, c_in_pad):
        # torch Theta1 row layout is c*nm + m  ->  reorder to (nm, C_in, C_out).
        t = jnp.asarray(theta, jnp.float32).reshape(c_in, nm, c_out).transpose(1, 0, 2)
        return pad_to(t, (nm, c_in_pad, z_pad)).astype(jnp.bfloat16)

    def row_pad(v, width):
        return pad_to(jnp.asarray(v, jnp.float32).reshape(1, -1), (1, width))

    # Head: concat the three 1x1-conv weight matrices -> (z, 3h), lane-pad to 128.
    w_head = jnp.concatenate([params['snb']['wn'], params['snb']['wp'],
                              params['snb']['wpi']], axis=1)            # (z, 3h)
    b_head = jnp.concatenate([params['snb']['bn'], params['snb']['bp'],
                              params['snb']['bpi']], axis=1)            # (1, 3h)

    hmask = jnp.concatenate([jnp.ones((1, h), jnp.float32),
                             jnp.zeros((1, out_pad - h), jnp.float32)], axis=1)
    zmask = jnp.concatenate([jnp.ones((1, z), jnp.float32),
                             jnp.zeros((1, z_pad - z), jnp.float32)], axis=1)

    return {
        't1': theta_pack(params['gnn1']['theta'], num_features, z, cin_pad),
        'b1': row_pad(params['gnn1']['bias'], z_pad),
        'g1': row_pad(params['ln1']['gamma'], z_pad),
        'be1': row_pad(params['ln1']['beta'], z_pad),
        't2': theta_pack(params['gnn2']['theta'], z, z, z_pad),
        'b2': row_pad(params['gnn2']['bias'], z_pad),
        'g2': row_pad(params['ln2']['gamma'], z_pad),
        'be2': row_pad(params['ln2']['beta'], z_pad),
        't3': theta_pack(params['gnn3']['theta'], z, z, z_pad),
        'b3': row_pad(params['gnn3']['bias'], z_pad),
        'g3': row_pad(params['ln3']['gamma'], z_pad),
        'be3': row_pad(params['ln3']['beta'], z_pad),
        'wh': pad_to(w_head, (z_pad, out_pad)).astype(jnp.bfloat16),
        'bh': row_pad(b_head, out_pad),
        'hmask': hmask,
        'zmask': zmask,
    }


def _vmem_limit_bytes(N, nm, cin_pad, z_pad, out_pad):
    a_bytes = 2 * N * N * 2                                          # A_q + A_h bf16
    w_bytes = (nm * cin_pad * z_pad + 2 * nm * z_pad * z_pad
               + z_pad * out_pad) * 2                                 # bf16 weights
    vec_bytes = (9 * z_pad + 3 * out_pad) * 4
    io_bytes = N * (cin_pad + out_pad) * 4                            # per-step blocks
    work_bytes = 10 * N * z_pad * 4                                   # live activations
    need = 2 * (a_bytes + w_bytes + vec_bytes + io_bytes) + work_bytes + (4 << 20)
    return int(min(100 << 20, max(32 << 20, need)))


def _cost_estimate(B, N, orders, cin_pad, z_pad, out_pad):
    nm = 2 * orders + 1
    flops = 0
    for c_in in (cin_pad, z_pad, z_pad):
        flops += 2 * orders * (2 * N * N * c_in)      # diffusion matmuls (2 supports)
        flops += nm * (2 * N * c_in * z_pad)          # per-term Theta matmuls
    flops += 2 * N * z_pad * out_pad                  # head
    flops *= B
    transcendentals = B * N * (out_pad + 3 * z_pad)
    bytes_accessed = (B * N * (cin_pad + out_pad) * 4
                      + 2 * N * N * 2
                      + (nm * (cin_pad + 2 * z_pad) * z_pad + z_pad * out_pad) * 2
                      + (9 * z_pad + 3 * out_pad) * 4)
    return pl.CostEstimate(flops=int(flops), transcendentals=int(transcendentals),
                           bytes_accessed=int(bytes_accessed))


# ----------------------------------------------------------------------------
# Forward wrapper (layout plumbing + single pallas_call with a parallel batch grid)
# ----------------------------------------------------------------------------
def gnnui_zinb_forward(packed, X, A_q, A_h, A_q_ignored, A_h_ignored, *,
                       order, activation, h, z):
    # Matches torch forward(X, A_q, A_h, A_q_ignored, A_h_ignored); last two unused.
    del A_q_ignored, A_h_ignored
    B, F_, N = X.shape
    nm = 2 * order + 1
    cin_pad = packed['t1'].shape[1]
    z_pad = packed['t2'].shape[1]
    out_pad = packed['wh'].shape[1]

    # (B, F, N) -> node-major (B, N, F), zero-padded to lane-dense (B, N, cin_pad).
    x0 = jnp.zeros((B, N, cin_pad), jnp.float32)
    x0 = x0.at[:, :, :F_].set(jnp.transpose(X, (0, 2, 1)).astype(jnp.float32))
    aq = A_q.astype(jnp.bfloat16)
    ah = A_h.astype(jnp.bfloat16)

    kernel = functools.partial(_gnnui_zinb_kernel, orders=order,
                               activation=activation, inv_z=1.0 / z, ln_eps=1e-5)

    def fixed(shape):
        nd = len(shape)
        return pl.BlockSpec(shape, lambda b, _nd=nd: (0,) * _nd)

    in_specs = [
        pl.BlockSpec((1, N, cin_pad), lambda b: (b, 0, 0)),          # x0
        fixed((N, N)), fixed((N, N)),                                 # aq, ah
        fixed((nm, cin_pad, z_pad)), fixed((1, z_pad)),               # t1, b1
        fixed((1, z_pad)), fixed((1, z_pad)),                         # g1, be1
        fixed((nm, z_pad, z_pad)), fixed((1, z_pad)),                 # t2, b2
        fixed((1, z_pad)), fixed((1, z_pad)),                         # g2, be2
        fixed((nm, z_pad, z_pad)), fixed((1, z_pad)),                 # t3, b3
        fixed((1, z_pad)), fixed((1, z_pad)),                         # g3, be3
        fixed((z_pad, out_pad)), fixed((1, out_pad)),                 # wh, bh
        fixed((1, out_pad)), fixed((1, z_pad)),                       # hmask, zmask
    ]
    out_specs = pl.BlockSpec((1, N, out_pad), lambda b: (b, 0, 0))

    out_comb = pl.pallas_call(
        kernel,
        out_shape=jax.ShapeDtypeStruct((B, N, out_pad), jnp.float32),
        grid=(B,),
        in_specs=in_specs,
        out_specs=out_specs,
        compiler_params=pltpu.CompilerParams(
            dimension_semantics=("parallel",),
            vmem_limit_bytes=_vmem_limit_bytes(N, nm, cin_pad, z_pad, out_pad)),
        cost_estimate=_cost_estimate(B, N, order, cin_pad, z_pad, out_pad),
    )(x0, aq, ah,
      packed['t1'], packed['b1'], packed['g1'], packed['be1'],
      packed['t2'], packed['b2'], packed['g2'], packed['be2'],
      packed['t3'], packed['b3'], packed['g3'], packed['be3'],
      packed['wh'], packed['bh'], packed['hmask'], packed['zmask'])

    # Unpack combined output lanes: j*h + o with j = 0:n, 1:p, 2:pi; drop padding.
    trio = out_comb[:, :, :3 * h].reshape(B, N, 3, h)
    return trio[:, :, 0, :], trio[:, :, 1, :], trio[:, :, 2, :]


# ----------------------------------------------------------------------------
# Deterministic parameter init (shapes/distributions per the module __init__)
# ----------------------------------------------------------------------------
def init_params(key, *, h, z, k, num_features):
    nm = 2 * k + 1
    keys = iter(jax.random.split(key, 16))

    def uni(shape, stdv):
        return jax.random.uniform(next(keys), shape, jnp.float32, -stdv, stdv)

    def dgcn(c_in, c_out):
        stdv = 1.0 / math.sqrt(c_out)
        return {'theta': uni((c_in * nm, c_out), stdv),   # torch Theta1 layout
                'bias': uni((1, c_out), stdv)}

    def ln(dim):
        return {'gamma': jnp.ones((dim,), jnp.float32),
                'beta': jnp.zeros((dim,), jnp.float32)}

    params = {'gnn1': dgcn(num_features, z), 'gnn2': dgcn(z, z), 'gnn3': dgcn(z, z),
              'ln1': ln(z), 'ln2': ln(z), 'ln3': ln(z)}
    s = 1.0 / math.sqrt(z)                                # 1x1 Conv2d(z, h) scale
    params['snb'] = {'wn': uni((z, h), s), 'bn': uni((1, h), s),
                     'wp': uni((z, h), s), 'bp': uni((1, h), s),
                     'wpi': uni((z, h), s), 'bpi': uni((1, h), s)}
    return params


# ----------------------------------------------------------------------------
# Pure-JAX f32 reference (mirrors the torch code, incl. the x0 carry-over quirk)
# ----------------------------------------------------------------------------
def _reference_forward(params, X, A_q, A_h, *, order, activation):
    nm = 2 * order + 1
    X_S = jnp.transpose(X, (0, 2, 1)).astype(jnp.float32)        # (B, N, F)

    def d_gcn(Xin, theta, bias, act):
        b, n, c = Xin.shape
        x0 = jnp.transpose(Xin, (1, 2, 0)).reshape(n, c * b)
        xs = [x0]
        for A in (A_q.astype(jnp.float32), A_h.astype(jnp.float32)):
            x1 = A @ x0
            xs.append(x1)
            for _ in range(2, order + 1):
                x2 = 2.0 * (A @ x1) - x0
                xs.append(x2)
                x1, x0 = x2, x1
        x = jnp.stack(xs, 0).reshape(nm, n, c, b)
        x = jnp.transpose(x, (3, 1, 2, 0)).reshape(b, n, c * nm)
        y = x @ theta + bias
        if act == 'relu':
            y = jnp.maximum(y, 0.0)
        return y

    def ln(x, gamma, beta, eps=1e-5):
        mu = jnp.mean(x, -1, keepdims=True)
        var = jnp.mean((x - mu) ** 2, -1, keepdims=True)
        return (x - mu) * jax.lax.rsqrt(var + eps) * gamma + beta

    h1 = ln(d_gcn(X_S, params['gnn1']['theta'], params['gnn1']['bias'], 'relu'),
            params['ln1']['gamma'], params['ln1']['beta'])
    h2 = ln(d_gcn(h1, params['gnn2']['theta'], params['gnn2']['bias'], 'relu') + h1,
            params['ln2']['gamma'], params['ln2']['beta'])
    h3 = ln(d_gcn(h2, params['gnn3']['theta'], params['gnn3']['bias'], activation),
            params['ln3']['gamma'], params['ln3']['beta'])
    n_l = h3 @ params['snb']['wn'] + params['snb']['bn']
    p_l = h3 @ params['snb']['wp'] + params['snb']['bp']
    pi_l = h3 @ params['snb']['wpi'] + params['snb']['bpi']
    return jax.nn.softplus(n_l), jax.nn.sigmoid(p_l), jax.nn.sigmoid(pi_l)


if __name__ == "__main__":
    B, N = 2, 16
    h_time, z, k_order, num_features = 8, 32, 2, 4
    activation = 'relu'

    key = jax.random.PRNGKey(0)
    kx, ka1, ka2, ka3, ka4, kp = jax.random.split(key, 6)

    # Module's forward consumes X of shape (batch, num_features, num_nodes).
    X = jax.random.normal(kx, (B, num_features, N), jnp.float32)

    def random_walk_matrix(kk):
        A = jax.random.uniform(kk, (N, N), jnp.float32, 0.0, 1.0)
        return A / jnp.sum(A, axis=1, keepdims=True)

    A_q = random_walk_matrix(ka1)
    A_h = random_walk_matrix(ka2)
    A_q_ignored = random_walk_matrix(ka3)   # accepted & ignored, as in the module
    A_h_ignored = random_walk_matrix(ka4)

    params = init_params(kp, h=h_time, z=z, k=k_order, num_features=num_features)
    packed = pack_params(params, order=k_order, h=h_time, z=z,
                         num_features=num_features)

    fwd = jax.jit(functools.partial(gnnui_zinb_forward, order=k_order,
                                    activation=activation, h=h_time, z=z))
    n_s, p_s, pi_s = fwd(packed, X, A_q, A_h, A_q_ignored, A_h_ignored)
    jax.block_until_ready((n_s, p_s, pi_s))

    assert n_s.shape == (B, N, h_time)
    assert p_s.shape == (B, N, h_time)
    assert pi_s.shape == (B, N, h_time)
    assert bool(jnp.all(jnp.isfinite(n_s) & jnp.isfinite(p_s) & jnp.isfinite(pi_s)))
    assert bool(jnp.all(n_s >= 0.0))
    assert bool(jnp.all((p_s > 0.0) & (p_s < 1.0)))
    assert bool(jnp.all((pi_s > 0.0) & (pi_s < 1.0)))

    # Numerical check vs. a pure-JAX f32 reference (kernel uses bf16 matmul inputs,
    # f32 accumulation / f32 recurrence carries), so tolerance is loose but meaningful.
    n_r, p_r, pi_r = _reference_forward(params, X, A_q, A_h,
                                        order=k_order, activation=activation)
    for got, want in ((n_s, n_r), (p_s, p_r), (pi_s, pi_r)):
        assert bool(jnp.max(jnp.abs(got - want)) < 0.1)

    print("KERNEL_OK")
</pallas_src>

<mosaic_0001>
module attributes {stable_mosaic.version = 11 : i64} {
  func.func @_gnnui_zinb_kernel(%arg0: i32, %arg1: memref<1x16x128xf32, #tpu.memory_space<vmem>>, %arg2: memref<16x16xbf16, #tpu.memory_space<vmem>>, %arg3: memref<16x16xbf16, #tpu.memory_space<vmem>>, %arg4: memref<5x128x128xbf16, #tpu.memory_space<vmem>>, %arg5: memref<1x128xf32, #tpu.memory_space<vmem>>, %arg6: memref<1x128xf32, #tpu.memory_space<vmem>>, %arg7: memref<1x128xf32, #tpu.memory_space<vmem>>, %arg8: memref<5x128x128xbf16, #tpu.memory_space<vmem>>, %arg9: memref<1x128xf32, #tpu.memory_space<vmem>>, %arg10: memref<1x128xf32, #tpu.memory_space<vmem>>, %arg11: memref<1x128xf32, #tpu.memory_space<vmem>>, %arg12: memref<5x128x128xbf16, #tpu.memory_space<vmem>>, %arg13: memref<1x128xf32, #tpu.memory_space<vmem>>, %arg14: memref<1x128xf32, #tpu.memory_space<vmem>>, %arg15: memref<1x128xf32, #tpu.memory_space<vmem>>, %arg16: memref<128x128xbf16, #tpu.memory_space<vmem>>, %arg17: memref<1x128xf32, #tpu.memory_space<vmem>>, %arg18: memref<1x128xf32, #tpu.memory_space<vmem>>, %arg19: memref<1x128xf32, #tpu.memory_space<vmem>>, %arg20: memref<1x16x128xf32, #tpu.memory_space<vmem>>) attributes {dimension_semantics = [#tpu.dimension_semantics<parallel>], iteration_bounds = array<i64: 2>, scalar_prefetch = 0 : i64, scratch_operands = 0 : i64, tpu.core_type = #tpu.core_type<tc>, window_params = [{transform_indices = @transform_0, window_bounds = array<i64: 1, 16, 128>}, {pipeline_mode = #tpu.pipeline_mode<synchronous>, transform_indices = @transform_1, window_bounds = array<i64: 16, 16>}, {pipeline_mode = #tpu.pipeline_mode<synchronous>, transform_indices = @transform_2, window_bounds = array<i64: 16, 16>}, {pipeline_mode = #tpu.pipeline_mode<synchronous>, transform_indices = @transform_3, window_bounds = array<i64: 5, 128, 128>}, {pipeline_mode = #tpu.pipeline_mode<synchronous>, transform_indices = @transform_4, window_bounds = array<i64: 1, 128>}, {pipeline_mode = #tpu.pipeline_mode<synchronous>, transform_indices = @transform_5, window_bounds = array<i64: 1, 128>}, {pipeline_mode = #tpu.pipeline_mode<synchronous>, transform_indices = @transform_6, window_bounds = array<i64: 1, 128>}, {pipeline_mode = #tpu.pipeline_mode<synchronous>, transform_indices = @transform_7, window_bounds = array<i64: 5, 128, 128>}, {pipeline_mode = #tpu.pipeline_mode<synchronous>, transform_indices = @transform_8, window_bounds = array<i64: 1, 128>}, {pipeline_mode = #tpu.pipeline_mode<synchronous>, transform_indices = @transform_9, window_bounds = array<i64: 1, 128>}, {pipeline_mode = #tpu.pipeline_mode<synchronous>, transform_indices = @transform_10, window_bounds = array<i64: 1, 128>}, {pipeline_mode = #tpu.pipeline_mode<synchronous>, transform_indices = @transform_11, window_bounds = array<i64: 5, 128, 128>}, {pipeline_mode = #tpu.pipeline_mode<synchronous>, transform_indices = @transform_12, window_bounds = array<i64: 1, 128>}, {pipeline_mode = #tpu.pipeline_mode<synchronous>, transform_indices = @transform_13, window_bounds = array<i64: 1, 128>}, {pipeline_mode = #tpu.pipeline_mode<synchronous>, transform_indices = @transform_14, window_bounds = array<i64: 1, 128>}, {pipeline_mode = #tpu.pipeline_mode<synchronous>, transform_indices = @transform_15, window_bounds = array<i64: 128, 128>}, {pipeline_mode = #tpu.pipeline_mode<synchronous>, transform_indices = @transform_16, window_bounds = array<i64: 1, 128>}, {pipeline_mode = #tpu.pipeline_mode<synchronous>, transform_indices = @transform_17, window_bounds = array<i64: 1, 128>}, {pipeline_mode = #tpu.pipeline_mode<synchronous>, transform_indices = @transform_18, window_bounds = array<i64: 1, 128>}, {transform_indices = @transform_19, window_bounds = array<i64: 1, 16, 128>}]} {
    %c0 = arith.constant 0 : index
    %c0_0 = arith.constant 0 : index
    %0 = vector.load %arg2[%c0, %c0_0] : memref<16x16xbf16, #tpu.memory_space<vmem>>, vector<16x16xbf16>
    %c0_1 = arith.constant 0 : index
    %c0_2 = arith.constant 0 : index
    %1 = vector.load %arg3[%c0_1, %c0_2] : memref<16x16xbf16, #tpu.memory_space<vmem>>, vector<16x16xbf16>
    %c0_3 = arith.constant 0 : index
    %c0_4 = arith.constant 0 : index
    %2 = vector.load %arg19[%c0_3, %c0_4] : memref<1x128xf32, #tpu.memory_space<vmem>>, vector<1x128xf32>
    %c0_5 = arith.constant 0 : index
    %c0_6 = arith.constant 0 : index
    %c0_7 = arith.constant 0 : index
    %3 = vector.load %arg1[%c0_5, %c0_6, %c0_7] : memref<1x16x128xf32, #tpu.memory_space<vmem>>, vector<1x16x128xf32>
    %4 = vector.shape_cast %3 : vector<1x16x128xf32> to vector<16x128xf32>
    %5 = arith.truncf %4 : vector<16x128xf32> to vector<16x128xbf16>
    %c0_8 = arith.constant 0 : index
    %c0_9 = arith.constant 0 : index
    %c0_10 = arith.constant 0 : index
    %6 = vector.load %arg4[%c0_8, %c0_9, %c0_10] : memref<5x128x128xbf16, #tpu.memory_space<vmem>>, vector<1x128x128xbf16>
    %7 = vector.shape_cast %6 : vector<1x128x128xbf16> to vector<128x128xbf16>
    %cst = arith.constant dense<0.000000e+00> : vector<16x128xf32>
    %8 = tpu.matmul %5, %7, %cst {dimension_numbers = #tpu.dot_dimension_numbers<[1], [0], [0], [1], [0, 0, 1, 1], [], []>} : vector<16x128xbf16>, vector<128x128xbf16>, vector<16x128xf32> -> vector<16x128xf32>
    %9 = arith.truncf %4 : vector<16x128xf32> to vector<16x128xbf16>
    %cst_11 = arith.constant dense<0.000000e+00> : vector<16x128xf32>
    %10 = tpu.matmul %0, %9, %cst_11 {dimension_numbers = #tpu.dot_dimension_numbers<[1], [0], [0], [1], [0, 0, 1, 1], [], []>} : vector<16x16xbf16>, vector<16x128xbf16>, vector<16x128xf32> -> vector<16x128xf32>
    %11 = arith.truncf %10 : vector<16x128xf32> to vector<16x128xbf16>
    %c1 = arith.constant 1 : index
    %c0_12 = arith.constant 0 : index
    %c0_13 = arith.constant 0 : index
    %12 = vector.load %arg4[%c1, %c0_12, %c0_13] : memref<5x128x128xbf16, #tpu.memory_space<vmem>>, vector<1x128x128xbf16>
    %13 = vector.shape_cast %12 : vector<1x128x128xbf16> to vector<128x128xbf16>
    %cst_14 = arith.constant dense<0.000000e+00> : vector<16x128xf32>
    %14 = tpu.matmul %11, %13, %cst_14 {dimension_numbers = #tpu.dot_dimension_numbers<[1], [0], [0], [1], [0, 0, 1, 1], [], []>} : vector<16x128xbf16>, vector<128x128xbf16>, vector<16x128xf32> -> vector<16x128xf32>
    %15 = arith.addf %8, %14 : vector<16x128xf32>
    %16 = arith.truncf %10 : vector<16x128xf32> to vector<16x128xbf16>
    %cst_15 = arith.constant dense<0.000000e+00> : vector<16x128xf32>
    %17 = tpu.matmul %0, %16, %cst_15 {dimension_numbers = #tpu.dot_dimension_numbers<[1], [0], [0], [1], [0, 0, 1, 1], [], []>} : vector<16x16xbf16>, vector<16x128xbf16>, vector<16x128xf32> -> vector<16x128xf32>
    %cst_16 = arith.constant 2.000000e+00 : f32
    %18 = vector.broadcast %cst_16 : f32 to vector<16x128xf32>
    %19 = arith.mulf %18, %17 : vector<16x128xf32>
    %20 = arith.subf %19, %4 : vector<16x128xf32>
    %21 = arith.truncf %20 : vector<16x128xf32> to vector<16x128xbf16>
    %c2 = arith.constant 2 : index
    %c0_17 = arith.constant 0 : index
    %c0_18 = arith.constant 0 : index
    %22 = vector.load %arg4[%c2, %c0_17, %c0_18] : memref<5x128x128xbf16, #tpu.memory_space<vmem>>, vector<1x128x128xbf16>
    %23 = vector.shape_cast %22 : vector<1x128x128xbf16> to vector<128x128xbf16>
    %cst_19 = arith.constant dense<0.000000e+00> : vector<16x128xf32>
    %24 = tpu.matmul %21, %23, %cst_19 {dimension_numbers = #tpu.dot_dimension_numbers<[1], [0], [0], [1], [0, 0, 1, 1], [], []>} : vector<16x128xbf16>, vector<128x128xbf16>, vector<16x128xf32> -> vector<16x128xf32>
    %25 = arith.addf %15, %24 : vector<16x128xf32>
    %26 = arith.truncf %10 : vector<16x128xf32> to vector<16x128xbf16>
    %cst_20 = arith.constant dense<0.000000e+00> : vector<16x128xf32>
    %27 = tpu.matmul %1, %26, %cst_20 {dimension_numbers = #tpu.dot_dimension_numbers<[1], [0], [0], [1], [0, 0, 1, 1], [], []>} : vector<16x16xbf16>, vector<16x128xbf16>, vector<16x128xf32> -> vector<16x128xf32>
    %28 = arith.truncf %27 : vector<16x128xf32> to vector<16x128xbf16>
    %c3 = arith.constant 3 : index
    %c0_21 = arith.constant 0 : index
    %c0_22 = arith.constant 0 : index
    %29 = vector.load %arg4[%c3, %c0_21, %c0_22] : memref<5x128x128xbf16, #tpu.memory_space<vmem>>, vector<1x128x128xbf16>
    %30 = vector.shape_cast %29 : vector<1x128x128xbf16> to vector<128x128xbf16>
    %cst_23 = arith.constant dense<0.000000e+00> : vector<16x128xf32>
    %31 = tpu.matmul %28, %30, %cst_23 {dimension_numbers = #tpu.dot_dimension_numbers<[1], [0], [0], [1], [0, 0, 1, 1], [], []>} : vector<16x128xbf16>, vector<128x128xbf16>, vector<16x128xf32> -> vector<16x128xf32>
    %32 = arith.addf %25, %31 : vector<16x128xf32>
    %33 = arith.truncf %27 : vector<16x128xf32> to vector<16x128xbf16>
    %cst_24 = arith.constant dense<0.000000e+00> : vector<16x128xf32>
    %34 = tpu.matmul %1, %33, %cst_24 {dimension_numbers = #tpu.dot_dimension_numbers<[1], [0], [0], [1], [0, 0, 1, 1], [], []>} : vector<16x16xbf16>, vector<16x128xbf16>, vector<16x128xf32> -> vector<16x128xf32>
    %cst_25 = arith.constant 2.000000e+00 : f32
    %35 = vector.broadcast %cst_25 : f32 to vector<16x128xf32>
    %36 = arith.mulf %35, %34 : vector<16x128xf32>
    %37 = arith.subf %36, %10 : vector<16x128xf32>
    %38 = arith.truncf %37 : vector<16x128xf32> to vector<16x128xbf16>
    %c4 = arith.constant 4 : index
    %c0_26 = arith.constant 0 : index
    %c0_27 = arith.constant 0 : index
    %39 = vector.load %arg4[%c4, %c0_26, %c0_27] : memref<5x128x128xbf16, #tpu.memory_space<vmem>>, vector<1x128x128xbf16>
    %40 = vector.shape_cast %39 : vector<1x128x128xbf16> to vector<128x128xbf16>
    %cst_28 = arith.constant dense<0.000000e+00> : vector<16x128xf32>
    %41 = tpu.matmul %38, %40, %cst_28 {dimension_numbers = #tpu.dot_dimension_numbers<[1], [0], [0], [1], [0, 0, 1, 1], [], []>} : vector<16x128xbf16>, vector<128x128xbf16>, vector<16x128xf32> -> vector<16x128xf32>
    %42 = arith.addf %32, %41 : vector<16x128xf32>
    %c0_29 = arith.constant 0 : index
    %c0_30 = arith.constant 0 : index
    %43 = vector.load %arg5[%c0_29, %c0_30] : memref<1x128xf32, #tpu.memory_space<vmem>>, vector<1x128xf32>
    %44 = vector.broadcast %43 : vector<1x128xf32> to vector<16x128xf32>
    %45 = arith.addf %42, %44 : vector<16x128xf32>
    %cst_31 = arith.constant 0.000000e+00 : f32
    %46 = vector.broadcast %cst_31 : f32 to vector<16x128xf32>
    %47 = arith.maximumf %45, %46 : vector<16x128xf32>
    %cst_32 = arith.constant dense<0.000000e+00> : vector<16xf32>
    %48 = vector.multi_reduction <add>, %47, %cst_32 [1] : vector<16x128xf32> to vector<16xf32>
    %49 = vector.shape_cast %48 : vector<16xf32> to vector<16x1xf32>
    %cst_33 = arith.constant 3.125000e-02 : f32
    %50 = vector.broadcast %cst_33 : f32 to vector<16x1xf32>
    %51 = arith.mulf %49, %50 : vector<16x1xf32>
    %52 = vector.broadcast %51 : vector<16x1xf32> to vector<16x128xf32>
    %53 = arith.subf %47, %52 : vector<16x128xf32>
    %54 = vector.broadcast %2 : vector<1x128xf32> to vector<16x128xf32>
    %55 = arith.mulf %53, %54 : vector<16x128xf32>
    %56 = arith.mulf %55, %55 : vector<16x128xf32>
    %cst_34 = arith.constant dense<0.000000e+00> : vector<16xf32>
    %57 = vector.multi_reduction <add>, %56, %cst_34 [1] : vector<16x128xf32> to vector<16xf32>
    %58 = vector.shape_cast %57 : vector<16xf32> to vector<16x1xf32>
    %cst_35 = arith.constant 3.125000e-02 : f32
    %59 = vector.broadcast %cst_35 : f32 to vector<16x1xf32>
    %60 = arith.mulf %58, %59 : vector<16x1xf32>
    %cst_36 = arith.constant 9.99999974E-6 : f32
    %61 = vector.broadcast %cst_36 : f32 to vector<16x1xf32>
    %62 = arith.addf %60, %61 : vector<16x1xf32>
    %63 = math.rsqrt %62 : vector<16x1xf32>
    %64 = vector.broadcast %63 : vector<16x1xf32> to vector<16x128xf32>
    %65 = arith.mulf %55, %64 : vector<16x128xf32>
    %c0_37 = arith.constant 0 : index
    %c0_38 = arith.constant 0 : index
    %66 = vector.load %arg6[%c0_37, %c0_38] : memref<1x128xf32, #tpu.memory_space<vmem>>, vector<1x128xf32>
    %67 = vector.broadcast %66 : vector<1x128xf32> to vector<16x128xf32>
    %68 = arith.mulf %65, %67 : vector<16x128xf32>
    %c0_39 = arith.constant 0 : index
    %c0_40 = arith.constant 0 : index
    %69 = vector.load %arg7[%c0_39, %c0_40] : memref<1x128xf32, #tpu.memory_space<vmem>>, vector<1x128xf32>
    %70 = vector.broadcast %69 : vector<1x128xf32> to vector<16x128xf32>
    %71 = arith.addf %68, %70 : vector<16x128xf32>
    %72 = arith.truncf %71 : vector<16x128xf32> to vector<16x128xbf16>
    %c0_41 = arith.constant 0 : index
    %c0_42 = arith.constant 0 : index
    %c0_43 = arith.constant 0 : index
    %73 = vector.load %arg8[%c0_41, %c0_42, %c0_43] : memref<5x128x128xbf16, #tpu.memory_space<vmem>>, vector<1x128x128xbf16>
    %74 = vector.shape_cast %73 : vector<1x128x128xbf16> to vector<128x128xbf16>
    %cst_44 = arith.constant dense<0.000000e+00> : vector<16x128xf32>
    %75 = tpu.matmul %72, %74, %cst_44 {dimension_numbers = #tpu.dot_dimension_numbers<[1], [0], [0], [1], [0, 0, 1, 1], [], []>} : vector<16x128xbf16>, vector<128x128xbf16>, vector<16x128xf32> -> vector<16x128xf32>
    %76 = arith.truncf %71 : vector<16x128xf32> to vector<16x128xbf16>
    %cst_45 = arith.constant dense<0.000000e+00> : vector<16x128xf32>
    %77 = tpu.matmul %0, %76, %cst_45 {dimension_numbers = #tpu.dot_dimension_numbers<[1], [0], [0], [1], [0, 0, 1, 1], [], []>} : vector<16x16xbf16>, vector<16x128xbf16>, vector<16x128xf32> -> vector<16x128xf32>
    %78 = arith.truncf %77 : vector<16x128xf32> to vector<16x128xbf16>
    %c1_46 = arith.constant 1 : index
    %c0_47 = arith.constant 0 : index
    %c0_48 = arith.constant 0 : index
    %79 = vector.load %arg8[%c1_46, %c0_47, %c0_48] : memref<5x128x128xbf16, #tpu.memory_space<vmem>>, vector<1x128x128xbf16>
    %80 = vector.shape_cast %79 : vector<1x128x128xbf16> to vector<128x128xbf16>
    %cst_49 = arith.constant dense<0.000000e+00> : vector<16x128xf32>
    %81 = tpu.matmul %78, %80, %cst_49 {dimension_numbers = #tpu.dot_dimension_numbers<[1], [0], [0], [1], [0, 0, 1, 1], [], []>} : vector<16x128xbf16>, vector<128x128xbf16>, vector<16x128xf32> -> vector<16x128xf32>
    %82 = arith.addf %75, %81 : vector<16x128xf32>
    %83 = arith.truncf %77 : vector<16x128xf32> to vector<16x128xbf16>
    %cst_50 = arith.constant dense<0.000000e+00> : vector<16x128xf32>
    %84 = tpu.matmul %0, %83, %cst_50 {dimension_numbers = #tpu.dot_dimension_numbers<[1], [0], [0], [1], [0, 0, 1, 1], [], []>} : vector<16x16xbf16>, vector<16x128xbf16>, vector<16x128xf32> -> vector<16x128xf32>
    %cst_51 = arith.constant 2.000000e+00 : f32
    %85 = vector.broadcast %cst_51 : f32 to vector<16x128xf32>
    %86 = arith.mulf %85, %84 : vector<16x128xf32>
    %87 = arith.subf %86, %71 : vector<16x128xf32>
    %88 = arith.truncf %87 : vector<16x128xf32> to vector<16x128xbf16>
    %c2_52 = arith.constant 2 : index
    %c0_53 = arith.constant 0 : index
    %c0_54 = arith.constant 0 : index
    %89 = vector.load %arg8[%c2_52, %c0_53, %c0_54] : memref<5x128x128xbf16, #tpu.memory_space<vmem>>, vector<1x128x128xbf16>
    %90 = vector.shape_cast %89 : vector<1x128x128xbf16> to vector<128x128xbf16>
    %cst_55 = arith.constant dense<0.000000e+00> : vector<16x128xf32>
    %91 = tpu.matmul %88, %90, %cst_55 {dimension_numbers = #tpu.dot_dimension_numbers<[1], [0], [0], [1], [0, 0, 1, 1], [], []>} : vector<16x128xbf16>, vector<128x128xbf16>, vector<16x128xf32> -> vector<16x128xf32>
    %92 = arith.addf %82, %91 : vector<16x128xf32>
    %93 = arith.truncf %77 : vector<16x128xf32> to vector<16x128xbf16>
    %cst_56 = arith.constant dense<0.000000e+00> : vector<16x128xf32>
    %94 = tpu.matmul %1, %93, %cst_56 {dimension_numbers = #tpu.dot_dimension_numbers<[1], [0], [0], [1], [0, 0, 1, 1], [], []>} : vector<16x16xbf16>, vector<16x128xbf16>, vector<16x128xf32> -> vector<16x128xf32>
    %95 = arith.truncf %94 : vector<16x128xf32> to vector<16x128xbf16>
    %c3_57 = arith.constant 3 : index
    %c0_58 = arith.constant 0 : index
    %c0_59 = arith.constant 0 : index
    %96 = vector.load %arg8[%c3_57, %c0_58, %c0_59] : memref<5x128x128xbf16, #tpu.memory_space<vmem>>, vector<1x128x128xbf16>
    %97 = vector.shape_cast %96 : vector<1x128x128xbf16> to vector<128x128xbf16>
    %cst_60 = arith.constant dense<0.000000e+00> : vector<16x128xf32>
    %98 = tpu.matmul %95, %97, %cst_60 {dimension_numbers = #tpu.dot_dimension_numbers<[1], [0], [0], [1], [0, 0, 1, 1], [], []>} : vector<16x128xbf16>, vector<128x128xbf16>, vector<16x128xf32> -> vector<16x128xf32>
    %99 = arith.addf %92, %98 : vector<16x128xf32>
    %100 = arith.truncf %94 : vector<16x128xf32> to vector<16x128xbf16>
    %cst_61 = arith.constant dense<0.000000e+00> : vector<16x128xf32>
    %101 = tpu.matmul %1, %100, %cst_61 {dimension_numbers = #tpu.dot_dimension_numbers<[1], [0], [0], [1], [0, 0, 1, 1], [], []>} : vector<16x16xbf16>, vector<16x128xbf16>, vector<16x128xf32> -> vector<16x128xf32>
    %cst_62 = arith.constant 2.000000e+00 : f32
    %102 = vector.broadcast %cst_62 : f32 to vector<16x128xf32>
    %103 = arith.mulf %102, %101 : vector<16x128xf32>
    %104 = arith.subf %103, %77 : vector<16x128xf32>
    %105 = arith.truncf %104 : vector<16x128xf32> to vector<16x128xbf16>
    %c4_63 = arith.constant 4 : index
    %c0_64 = arith.constant 0 : index
    %c0_65 = arith.constant 0 : index
    %106 = vector.load %arg8[%c4_63, %c0_64, %c0_65] : memref<5x128x128xbf16, #tpu.memory_space<vmem>>, vector<1x128x128xbf16>
    %107 = vector.shape_cast %106 : vector<1x128x128xbf16> to vector<128x128xbf16>
    %cst_66 = arith.constant dense<0.000000e+00> : vector<16x128xf32>
    %108 = tpu.matmul %105, %107, %cst_66 {dimension_numbers = #tpu.dot_dimension_numbers<[1], [0], [0], [1], [0, 0, 1, 1], [], []>} : vector<16x128xbf16>, vector<128x128xbf16>, vector<16x128xf32> -> vector<16x128xf32>
    %109 = arith.addf %99, %108 : vector<16x128xf32>
    %c0_67 = arith.constant 0 : index
    %c0_68 = arith.constant 0 : index
    %110 = vector.load %arg9[%c0_67, %c0_68] : memref<1x128xf32, #tpu.memory_space<vmem>>, vector<1x128xf32>
    %111 = vector.broadcast %110 : vector<1x128xf32> to vector<16x128xf32>
    %112 = arith.addf %109, %111 : vector<16x128xf32>
    %cst_69 = arith.constant 0.000000e+00 : f32
    %113 = vector.broadcast %cst_69 : f32 to vector<16x128xf32>
    %114 = arith.maximumf %112, %113 : vector<16x128xf32>
    %115 = arith.addf %114, %71 : vector<16x128xf32>
    %cst_70 = arith.constant dense<0.000000e+00> : vector<16xf32>
    %116 = vector.multi_reduction <add>, %115, %cst_70 [1] : vector<16x128xf32> to vector<16xf32>
    %117 = vector.shape_cast %116 : vector<16xf32> to vector<16x1xf32>
    %cst_71 = arith.constant 3.125000e-02 : f32
    %118 = vector.broadcast %cst_71 : f32 to vector<16x1xf32>
    %119 = arith.mulf %117, %118 : vector<16x1xf32>
    %120 = vector.broadcast %119 : vector<16x1xf32> to vector<16x128xf32>
    %121 = arith.subf %115, %120 : vector<16x128xf32>
    %122 = vector.broadcast %2 : vector<1x128xf32> to vector<16x128xf32>
    %123 = arith.mulf %121, %122 : vector<16x128xf32>
    %124 = arith.mulf %123, %123 : vector<16x128xf32>
    %cst_72 = arith.constant dense<0.000000e+00> : vector<16xf32>
    %125 = vector.multi_reduction <add>, %124, %cst_72 [1] : vector<16x128xf32> to vector<16xf32>
    %126 = vector.shape_cast %125 : vector<16xf32> to vector<16x1xf32>
    %cst_73 = arith.constant 3.125000e-02 : f32
    %127 = vector.broadcast %cst_73 : f32 to vector<16x1xf32>
    %128 = arith.mulf %126, %127 : vector<16x1xf32>
    %cst_74 = arith.constant 9.99999974E-6 : f32
    %129 = vector.broadcast %cst_74 : f32 to vector<16x1xf32>
    %130 = arith.addf %128, %129 : vector<16x1xf32>
    %131 = math.rsqrt %130 : vector<16x1xf32>
    %132 = vector.broadcast %131 : vector<16x1xf32> to vector<16x128xf32>
    %133 = arith.mulf %123, %132 : vector<16x128xf32>
    %c0_75 = arith.constant 0 : index
    %c0_76 = arith.constant 0 : index
    %134 = vector.load %arg10[%c0_75, %c0_76] : memref<1x128xf32, #tpu.memory_space<vmem>>, vector<1x128xf32>
    %135 = vector.broadcast %134 : vector<1x128xf32> to vector<16x128xf32>
    %136 = arith.mulf %133, %135 : vector<16x128xf32>
    %c0_77 = arith.constant 0 : index
    %c0_78 = arith.constant 0 : index
    %137 = vector.load %arg11[%c0_77, %c0_78] : memref<1x128xf32, #tpu.memory_space<vmem>>, vector<1x128xf32>
    %138 = vector.broadcast %137 : vector<1x128xf32> to vector<16x128xf32>
    %139 = arith.addf %136, %138 : vector<16x128xf32>
    %140 = arith.truncf %139 : vector<16x128xf32> to vector<16x128xbf16>
    %c0_79 = arith.constant 0 : index
    %c0_80 = arith.constant 0 : index
    %c0_81 = arith.constant 0 : index
    %141 = vector.load %arg12[%c0_79, %c0_80, %c0_81] : memref<5x128x128xbf16, #tpu.memory_space<vmem>>, vector<1x128x128xbf16>
    %142 = vector.shape_cast %141 : vector<1x128x128xbf16> to vector<128x128xbf16>
    %cst_82 = arith.constant dense<0.000000e+00> : vector<16x128xf32>
    %143 = tpu.matmul %140, %142, %cst_82 {dimension_numbers = #tpu.dot_dimension_numbers<[1], [0], [0], [1], [0, 0, 1, 1], [], []>} : vector<16x128xbf16>, vector<128x128xbf16>, vector<16x128xf32> -> vector<16x128xf32>
    %144 = arith.truncf %139 : vector<16x128xf32> to vector<16x128xbf16>
    %cst_83 = arith.constant dense<0.000000e+00> : vector<16x128xf32>
    %145 = tpu.matmul %0, %144, %cst_83 {dimension_numbers = #tpu.dot_dimension_numbers<[1], [0], [0], [1], [0, 0, 1, 1], [], []>} : vector<16x16xbf16>, vector<16x128xbf16>, vector<16x128xf32> -> vector<16x128xf32>
    %146 = arith.truncf %145 : vector<16x128xf32> to vector<16x128xbf16>
    %c1_84 = arith.constant 1 : index
    %c0_85 = arith.constant 0 : index
    %c0_86 = arith.constant 0 : index
    %147 = vector.load %arg12[%c1_84, %c0_85, %c0_86] : memref<5x128x128xbf16, #tpu.memory_space<vmem>>, vector<1x128x128xbf16>
    %148 = vector.shape_cast %147 : vector<1x128x128xbf16> to vector<128x128xbf16>
    %cst_87 = arith.constant dense<0.000000e+00> : vector<16x128xf32>
    %149 = tpu.matmul %146, %148, %cst_87 {dimension_numbers = #tpu.dot_dimension_numbers<[1], [0], [0], [1], [0, 0, 1, 1], [], []>} : vector<16x128xbf16>, vector<128x128xbf16>, vector<16x128xf32> -> vector<16x128xf32>
    %150 = arith.addf %143, %149 : vector<16x128xf32>
    %151 = arith.truncf %145 : vector<16x128xf32> to vector<16x128xbf16>
    %cst_88 = arith.constant dense<0.000000e+00> : vector<16x128xf32>
    %152 = tpu.matmul %0, %151, %cst_88 {dimension_numbers = #tpu.dot_dimension_numbers<[1], [0], [0], [1], [0, 0, 1, 1], [], []>} : vector<16x16xbf16>, vector<16x128xbf16>, vector<16x128xf32> -> vector<16x128xf32>
    %cst_89 = arith.constant 2.000000e+00 : f32
    %153 = vector.broadcast %cst_89 : f32 to vector<16x128xf32>
    %154 = arith.mulf %153, %152 : vector<16x128xf32>
    %155 = arith.subf %154, %139 : vector<16x128xf32>
    %156 = arith.truncf %155 : vector<16x128xf32> to vector<16x128xbf16>
    %c2_90 = arith.constant 2 : index
    %c0_91 = arith.constant 0 : index
    %c0_92 = arith.constant 0 : index
    %157 = vector.load %arg12[%c2_90, %c0_91, %c0_92] : memref<5x128x128xbf16, #tpu.memory_space<vmem>>, vector<1x128x128xbf16>
    %158 = vector.shape_cast %157 : vector<1x128x128xbf16> to vector<128x128xbf16>
    %cst_93 = arith.constant dense<0.000000e+00> : vector<16x128xf32>
    %159 = tpu.matmul %156, %158, %cst_93 {dimension_numbers = #tpu.dot_dimension_numbers<[1], [0], [0], [1], [0, 0, 1, 1], [], []>} : vector<16x128xbf16>, vector<128x128xbf16>, vector<16x128xf32> -> vector<16x128xf32>
    %160 = arith.addf %150, %159 : vector<16x128xf32>
    %161 = arith.truncf %145 : vector<16x128xf32> to vector<16x128xbf16>
    %cst_94 = arith.constant dense<0.000000e+00> : vector<16x128xf32>
    %162 = tpu.matmul %1, %161, %cst_94 {dimension_numbers = #tpu.dot_dimension_numbers<[1], [0], [0], [1], [0, 0, 1, 1], [], []>} : vector<16x16xbf16>, vector<16x128xbf16>, vector<16x128xf32> -> vector<16x128xf32>
    %163 = arith.truncf %162 : vector<16x128xf32> to vector<16x128xbf16>
    %c3_95 = arith.constant 3 : index
    %c0_96 = arith.constant 0 : index
    %c0_97 = arith.constant 0 : index
    %164 = vector.load %arg12[%c3_95, %c0_96, %c0_97] : memref<5x128x128xbf16, #tpu.memory_space<vmem>>, vector<1x128x128xbf16>
    %165 = vector.shape_cast %164 : vector<1x128x128xbf16> to vector<128x128xbf16>
    %cst_98 = arith.constant dense<0.000000e+00> : vector<16x128xf32>
    %166 = tpu.matmul %163, %165, %cst_98 {dimension_numbers = #tpu.dot_dimension_numbers<[1], [0], [0], [1], [0, 0, 1, 1], [], []>} : vector<16x128xbf16>, vector<128x128xbf16>, vector<16x128xf32> -> vector<16x128xf32>
    %167 = arith.addf %160, %166 : vector<16x128xf32>
    %168 = arith.truncf %162 : vector<16x128xf32> to vector<16x128xbf16>
    %cst_99 = arith.constant dense<0.000000e+00> : vector<16x128xf32>
    %169 = tpu.matmul %1, %168, %cst_99 {dimension_numbers = #tpu.dot_dimension_numbers<[1], [0], [0], [1], [0, 0, 1, 1], [], []>} : vector<16x16xbf16>, vector<16x128xbf16>, vector<16x128xf32> -> vector<16x128xf32>
    %cst_100 = arith.constant 2.000000e+00 : f32
    %170 = vector.broadcast %cst_100 : f32 to vector<16x128xf32>
    %171 = arith.mulf %170, %169 : vector<16x128xf32>
    %172 = arith.subf %171, %145 : vector<16x128xf32>
    %173 = arith.truncf %172 : vector<16x128xf32> to vector<16x128xbf16>
    %c4_101 = arith.constant 4 : index
    %c0_102 = arith.constant 0 : index
    %c0_103 = arith.constant 0 : index
    %174 = vector.load %arg12[%c4_101, %c0_102, %c0_103] : memref<5x128x128xbf16, #tpu.memory_space<vmem>>, vector<1x128x128xbf16>
    %175 = vector.shape_cast %174 : vector<1x128x128xbf16> to vector<128x128xbf16>
    %cst_104 = arith.constant dense<0.000000e+00> : vector<16x128xf32>
    %176 = tpu.matmul %173, %175, %cst_104 {dimension_numbers = #tpu.dot_dimension_numbers<[1], [0], [0], [1], [0, 0, 1, 1], [], []>} : vector<16x128xbf16>, vector<128x128xbf16>, vector<16x128xf32> -> vector<16x128xf32>
    %177 = arith.addf %167, %176 : vector<16x128xf32>
    %c0_105 = arith.constant 0 : index
    %c0_106 = arith.constant 0 : index
    %178 = vector.load %arg13[%c0_105, %c0_106] : memref<1x128xf32, #tpu.memory_space<vmem>>, vector<1x128xf32>
    %179 = vector.broadcast %178 : vector<1x128xf32> to vector<16x128xf32>
    %180 = arith.addf %177, %179 : vector<16x128xf32>
    %cst_107 = arith.constant 0.000000e+00 : f32
    %181 = vector.broadcast %cst_107 : f32 to vector<16x128xf32>
    %182 = arith.maximumf %180, %181 : vector<16x128xf32>
    %cst_108 = arith.constant dense<0.000000e+00> : vector<16xf32>
    %183 = vector.multi_reduction <add>, %182, %cst_108 [1] : vector<16x128xf32> to vector<16xf32>
    %184 = vector.shape_cast %183 : vector<16xf32> to vector<16x1xf32>
    %cst_109 = arith.constant 3.125000e-02 : f32
    %185 = vector.broadcast %cst_109 : f32 to vector<16x1xf32>
    %186 = arith.mulf %184, %185 : vector<16x1xf32>
    %187 = vector.broadcast %186 : vector<16x1xf32> to vector<16x128xf32>
    %188 = arith.subf %182, %187 : vector<16x128xf32>
    %189 = vector.broadcast %2 : vector<1x128xf32> to vector<16x128xf32>
    %190 = arith.mulf %188, %189 : vector<16x128xf32>
    %191 = arith.mulf %190, %190 : vector<16x128xf32>
    %cst_110 = arith.constant dense<0.000000e+00> : vector<16xf32>
    %192 = vector.multi_reduction <add>, %191, %cst_110 [1] : vector<16x128xf32> to vector<16xf32>
    %193 = vector.shape_cast %192 : vector<16xf32> to vector<16x1xf32>
    %cst_111 = arith.constant 3.125000e-02 : f32
    %194 = vector.broadcast %cst_111 : f32 to vector<16x1xf32>
    %195 = arith.mulf %193, %194 : vector<16x1xf32>
    %cst_112 = arith.constant 9.99999974E-6 : f32
    %196 = vector.broadcast %cst_112 : f32 to vector<16x1xf32>
    %197 = arith.addf %195, %196 : vector<16x1xf32>
    %198 = math.rsqrt %197 : vector<16x1xf32>
    %199 = vector.broadcast %198 : vector<16x1xf32> to vector<16x128xf32>
    %200 = arith.mulf %190, %199 : vector<16x128xf32>
    %c0_113 = arith.constant 0 : index
    %c0_114 = arith.constant 0 : index
    %201 = vector.load %arg14[%c0_113, %c0_114] : memref<1x128xf32, #tpu.memory_space<vmem>>, vector<1x128xf32>
    %202 = vector.broadcast %201 : vector<1x128xf32> to vector<16x128xf32>
    %203 = arith.mulf %200, %202 : vector<16x128xf32>
    %c0_115 = arith.constant 0 : index
    %c0_116 = arith.constant 0 : index
    %204 = vector.load %arg15[%c0_115, %c0_116] : memref<1x128xf32, #tpu.memory_space<vmem>>, vector<1x128xf32>
    %205 = vector.broadcast %204 : vector<1x128xf32> to vector<16x128xf32>
    %206 = arith.addf %203, %205 : vector<16x128xf32>
    %207 = arith.truncf %206 : vector<16x128xf32> to vector<16x128xbf16>
    %c0_117 = arith.constant 0 : index
    %c0_118 = arith.constant 0 : index
    %208 = vector.load %arg16[%c0_117, %c0_118] : memref<128x128xbf16, #tpu.memory_space<vmem>>, vector<128x128xbf16>
    %cst_119 = arith.constant dense<0.000000e+00> : vector<16x128xf32>
    %209 = tpu.matmul %207, %208, %cst_119 {dimension_numbers = #tpu.dot_dimension_numbers<[1], [0], [0], [1], [0, 0, 1, 1], [], []>} : vector<16x128xbf16>, vector<128x128xbf16>, vector<16x128xf32> -> vector<16x128xf32>
    %c0_120 = arith.constant 0 : index
    %c0_121 = arith.constant 0 : index
    %210 = vector.load %arg17[%c0_120, %c0_121] : memref<1x128xf32, #tpu.memory_space<vmem>>, vector<1x128xf32>
    %211 = vector.broadcast %210 : vector<1x128xf32> to vector<16x128xf32>
    %212 = arith.addf %209, %211 : vector<16x128xf32>
    %213 = math.absf %212 : vector<16x128xf32>
    %cst_122 = arith.constant 0.000000e+00 : f32
    %214 = vector.broadcast %cst_122 : f32 to vector<16x128xf32>
    %215 = arith.subf %214, %213 : vector<16x128xf32>
    %216 = math.exp %215 : vector<16x128xf32>
    %cst_123 = arith.constant 0.000000e+00 : f32
    %217 = vector.broadcast %cst_123 : f32 to vector<16x128xf32>
    %218 = arith.maximumf %212, %217 : vector<16x128xf32>
    %cst_124 = arith.constant 1.000000e+00 : f32
    %219 = vector.broadcast %cst_124 : f32 to vector<16x128xf32>
    %220 = arith.addf %219, %216 : vector<16x128xf32>
    %221 = math.log %220 : vector<16x128xf32>
    %222 = arith.addf %218, %221 : vector<16x128xf32>
    %cst_125 = arith.constant 1.000000e+00 : f32
    %223 = vector.broadcast %cst_125 : f32 to vector<16x128xf32>
    %224 = arith.addf %223, %216 : vector<16x128xf32>
    %cst_126 = arith.constant 1.000000e+00 : f32
    %225 = vector.broadcast %cst_126 : f32 to vector<16x128xf32>
    %226 = arith.divf %225, %224 : vector<16x128xf32>
    %cst_127 = arith.constant 0.000000e+00 : f32
    %227 = vector.broadcast %cst_127 : f32 to vector<16x128xf32>
    %228 = arith.cmpf oge, %212, %227 : vector<16x128xf32>
    %229 = arith.mulf %216, %226 : vector<16x128xf32>
    %230 = arith.select %228, %226, %229 : vector<16x128xi1>, vector<16x128xf32>
    %c0_128 = arith.constant 0 : index
    %c0_129 = arith.constant 0 : index
    %231 = vector.load %arg18[%c0_128, %c0_129] : memref<1x128xf32, #tpu.memory_space<vmem>>, vector<1x128xf32>
    %cst_130 = arith.constant 5.000000e-01 : f32
    %232 = vector.broadcast %cst_130 : f32 to vector<1x128xf32>
    %233 = arith.cmpf ogt, %231, %232 : vector<1x128xf32>
    %234 = vector.shape_cast %233 : vector<1x128xi1> to vector<1x128xi1>
    %235 = vector.broadcast %234 : vector<1x128xi1> to vector<16x128xi1>
    %236 = arith.select %235, %222, %230 : vector<16x128xi1>, vector<16x128xf32>
    %c0_131 = arith.constant 0 : index
    %c0_132 = arith.constant 0 : index
    %c0_133 = arith.constant 0 : index
    %237 = vector.load %arg20[%c0_131, %c0_132, %c0_133] : memref<1x16x128xf32, #tpu.memory_space<vmem>>, vector<1x16x128xf32>
    %238 = vector.shape_cast %237 : vector<1x16x128xf32> to vector<16x128xf32>
    %239 = vector.shape_cast %236 : vector<16x128xf32> to vector<1x16x128xf32>
    tpu.vector_store %arg20[%c0_131, %c0_132, %c0_133], %239 {strides = array<i32>} : memref<1x16x128xf32, #tpu.memory_space<vmem>>, vector<1x16x128xf32>,
    return
  }
  func.func @transform_0(%arg0: i32) -> (i32, i32, i32) {
    %c0_i32 = arith.constant 0 : i32
    %c0_i32_0 = arith.constant 0 : i32
    %c0_i32_1 = arith.constant 0 : i32
    return %arg0, %c0_i32, %c0_i32_0 : i32, i32, i32
  }
  func.func @transform_1(%arg0: i32) -> (i32, i32) {
    %c0_i32 = arith.constant 0 : i32
    %c0_i32_0 = arith.constant 0 : i32
    %c0_i32_1 = arith.constant 0 : i32
    return %c0_i32, %c0_i32_0 : i32, i32
  }
  func.func @transform_2(%arg0: i32) -> (i32, i32) {
    %c0_i32 = arith.constant 0 : i32
    %c0_i32_0 = arith.constant 0 : i32
    %c0_i32_1 = arith.constant 0 : i32
    return %c0_i32, %c0_i32_0 : i32, i32
  }
  func.func @transform_3(%arg0: i32) -> (i32, i32, i32) {
    %c0_i32 = arith.constant 0 : i32
    %c0_i32_0 = arith.constant 0 : i32
    %c0_i32_1 = arith.constant 0 : i32
    %c0_i32_2 = arith.constant 0 : i32
    return %c0_i32, %c0_i32_0, %c0_i32_1 : i32, i32, i32
  }
  func.func @transform_4(%arg0: i32) -> (i32, i32) {
    %c0_i32 = arith.constant 0 : i32
    %c0_i32_0 = arith.constant 0 : i32
    %c0_i32_1 = arith.constant 0 : i32
    return %c0_i32, %c0_i32_0 : i32, i32
  }
  func.func @transform_5(%arg0: i32) -> (i32, i32) {
    %c0_i32 = arith.constant 0 : i32
    %c0_i32_0 = arith.constant 0 : i32
    %c0_i32_1 = arith.constant 0 : i32
    return %c0_i32, %c0_i32_0 : i32, i32
  }
  func.func @transform_6(%arg0: i32) -> (i32, i32) {
    %c0_i32 = arith.constant 0 : i32
    %c0_i32_0 = arith.constant 0 : i32
    %c0_i32_1 = arith.constant 0 : i32
    return %c0_i32, %c0_i32_0 : i32, i32
  }
  func.func @transform_7(%arg0: i32) -> (i32, i32, i32) {
    %c0_i32 = arith.constant 0 : i32
    %c0_i32_0 = arith.constant 0 : i32
    %c0_i32_1 = arith.constant 0 : i32
    %c0_i32_2 = arith.constant 0 : i32
    return %c0_i32, %c0_i32_0, %c0_i32_1 : i32, i32, i32
  }
  func.func @transform_8(%arg0: i32) -> (i32, i32) {
    %c0_i32 = arith.constant 0 : i32
    %c0_i32_0 = arith.constant 0 : i32
    %c0_i32_1 = arith.constant 0 : i32
    return %c0_i32, %c0_i32_0 : i32, i32
  }
  func.func @transform_9(%arg0: i32) -> (i32, i32) {
    %c0_i32 = arith.constant 0 : i32
    %c0_i32_0 = arith.constant 0 : i32
    %c0_i32_1 = arith.constant 0 : i32
    return %c0_i32, %c0_i32_0 : i32, i32
  }
  func.func @transform_10(%arg0: i32) -> (i32, i32) {
    %c0_i32 = arith.constant 0 : i32
    %c0_i32_0 = arith.constant 0 : i32
    %c0_i32_1 = arith.constant 0 : i32
    return %c0_i32, %c0_i32_0 : i32, i32
  }
  func.func @transform_11(%arg0: i32) -> (i32, i32, i32) {
    %c0_i32 = arith.constant 0 : i32
    %c0_i32_0 = arith.constant 0 : i32
    %c0_i32_1 = arith.constant 0 : i32
    %c0_i32_2 = arith.constant 0 : i32
    return %c0_i32, %c0_i32_0, %c0_i32_1 : i32, i32, i32
  }
  func.func @transform_12(%arg0: i32) -> (i32, i32) {
    %c0_i32 = arith.constant 0 : i32
    %c0_i32_0 = arith.constant 0 : i32
    %c0_i32_1 = arith.constant 0 : i32
    return %c0_i32, %c0_i32_0 : i32, i32
  }
  func.func @transform_13(%arg0: i32) -> (i32, i32) {
    %c0_i32 = arith.constant 0 : i32
    %c0_i32_0 = arith.constant 0 : i32
    %c0_i32_1 = arith.constant 0 : i32
    return %c0_i32, %c0_i32_0 : i32, i32
  }
  func.func @transform_14(%arg0: i32) -> (i32, i32) {
    %c0_i32 = arith.constant 0 : i32
    %c0_i32_0 = arith.constant 0 : i32
    %c0_i32_1 = arith.constant 0 : i32
    return %c0_i32, %c0_i32_0 : i32, i32
  }
  func.func @transform_15(%arg0: i32) -> (i32, i32) {
    %c0_i32 = arith.constant 0 : i32
    %c0_i32_0 = arith.constant 0 : i32
    %c0_i32_1 = arith.constant 0 : i32
    return %c0_i32, %c0_i32_0 : i32, i32
  }
  func.func @transform_16(%arg0: i32) -> (i32, i32) {
    %c0_i32 = arith.constant 0 : i32
    %c0_i32_0 = arith.constant 0 : i32
    %c0_i32_1 = arith.constant 0 : i32
    return %c0_i32, %c0_i32_0 : i32, i32
  }
  func.func @transform_17(%arg0: i32) -> (i32, i32) {
    %c0_i32 = arith.constant 0 : i32
    %c0_i32_0 = arith.constant 0 : i32
    %c0_i32_1 = arith.constant 0 : i32
    return %c0_i32, %c0_i32_0 : i32, i32
  }
  func.func @transform_18(%arg0: i32) -> (i32, i32) {
    %c0_i32 = arith.constant 0 : i32
    %c0_i32_0 = arith.constant 0 : i32
    %c0_i32_1 = arith.constant 0 : i32
    return %c0_i32, %c0_i32_0 : i32, i32
  }
  func.func @transform_19(%arg0: i32) -> (i32, i32, i32) {
    %c0_i32 = arith.constant 0 : i32
    %c0_i32_0 = arith.constant 0 : i32
    %c0_i32_1 = arith.constant 0 : i32
    return %arg0, %c0_i32, %c0_i32_0 : i32, i32, i32
  }
}

</mosaic_0001>

<llo_original>
// kernel: gnnui_zinb_forward.1
$region0: #{gnnui_zinb_forward.1}
  #allocation0 [shape = 'u32[]', space=smem, size = 0x4, offset = 0x4, fixed_abs, tag = 'smem constant byte address 0x4 - core index']
  #allocation1 [shape = 'u32[144,128]{1,0:T(1,128)}', space=vmem, size = 0x12000, scoped, tag = 'internal scratch']
  %s0 = inlined_call_operand.vmem [shape: f32[2,16,128], index: 0, kind: input, shape index: {}]
  %s1 = inlined_call_operand.vmem [shape: bf16[16,16], index: 1, kind: input, shape index: {}]
  %s2 = inlined_call_operand.vmem [shape: bf16[16,16], index: 2, kind: input, shape index: {}]
  %s3 = inlined_call_operand.hbm [shape: bf16[5,128,128], index: 3, kind: input, shape index: {}]
  %s4 = inlined_call_operand.vmem [shape: f32[1,128], index: 4, kind: input, shape index: {}]
  %s5 = inlined_call_operand.vmem [shape: f32[1,128], index: 5, kind: input, shape index: {}]
  %s6 = inlined_call_operand.vmem [shape: f32[1,128], index: 6, kind: input, shape index: {}]
  %s7 = inlined_call_operand.hbm [shape: bf16[5,128,128], index: 7, kind: input, shape index: {}]
  %s8 = inlined_call_operand.vmem [shape: f32[1,128], index: 8, kind: input, shape index: {}]
  %s9 = inlined_call_operand.vmem [shape: f32[1,128], index: 9, kind: input, shape index: {}]
  %s10 = inlined_call_operand.vmem [shape: f32[1,128], index: 10, kind: input, shape index: {}]
  %s11 = inlined_call_operand.hbm [shape: bf16[5,128,128], index: 11, kind: input, shape index: {}]
  %s12 = inlined_call_operand.vmem [shape: f32[1,128], index: 12, kind: input, shape index: {}]
  %s13 = inlined_call_operand.vmem [shape: f32[1,128], index: 13, kind: input, shape index: {}]
  %s14 = inlined_call_operand.vmem [shape: f32[1,128], index: 14, kind: input, shape index: {}]
  %s15 = inlined_call_operand.vmem [shape: bf16[128,128], index: 15, kind: input, shape index: {}]
  %s16 = inlined_call_operand.vmem [shape: f32[1,128], index: 16, kind: input, shape index: {}]
  %s17 = inlined_call_operand.vmem [shape: f32[1,128], index: 17, kind: input, shape index: {}]
  %s18 = inlined_call_operand.vmem [shape: f32[1,128], index: 18, kind: input, shape index: {}]
  %s19 = inlined_call_operand.vmem [shape: f32[2,16,128], index: 19, kind: output, shape index: {}]
  %s20 = sld [smem:[#allocation0]]
  $region121: #{gnnui_zinb_forward.1} parent=0
    _
  %s22 = ssub.s32 1, %s20
  %s23 = scalar_select 0, %s22, %s20
  $region1: #{gnnui_zinb_forward.1} parent=0
    #allocation2 [shape = 'u8[163840]{0}', space=vmem, size = 0x28000, scoped, tag = 'input window, operand 3, single buffered']
    #allocation3 [shape = 's32[2]{0}', space=sflag, size = 0x8, scoped, tag = 'scoped memory for gnnui_zinb_forward.1']
    #allocation4 [shape = 'u8[163840]{0}', space=vmem, size = 0x28000, scoped, tag = 'input window, operand 7, single buffered']
    #allocation5 [shape = 's32[1]{0}', space=sflag, size = 0x4, scoped, tag = 'scoped memory for gnnui_zinb_forward.1']
    #allocation6 [shape = 'u8[163840]{0}', space=vmem, size = 0x28000, scoped, tag = 'input window, operand 11, single buffered']
    %24 = vsyncpa [#allocation3], 0
    %25 = vsyncpa [#allocation5], 0
    loop: start=0, step=1, limit=4
    $region2: #{gnnui_zinb_forward.1} parent=1 // loop_pre_header
      _
    $region3: #{gnnui_zinb_forward.1} parent=1 // loop_header
      %s27 = sphi 0, %s31
      %p28 = scmp.ge.s32.totalorder %s27, 4
      %s37 = sphi 0, %s39
      %s40 = sphi 0, %s37
      %s41 = sphi 0, %s40
      %s57 = sphi 0, %s41
      %s61 = sphi 0, %s61
      %s63 = sphi 0, %s61
      %s64 = sphi 0, %s63
      %s78 = sphi 0, %s64
      %s82 = sphi 0, %s82
      %s84 = sphi 0, %s82
      %s85 = sphi 0, %s84
      %s99 = sphi 0, %s85
      %s103 = sphi 0, %s103
      %s105 = sphi 0, %s103
      %s106 = sphi 0, %s105
      %s120 = sphi 0, %s106
      %s124 = sphi 0, %s124
      %s126 = sphi 0, %s124
      %s127 = sphi 0, %s126
      %s141 = sphi 0, %s127
      %s145 = sphi 0, %s145
      %s147 = sphi 0, %s145
      %s148 = sphi 0, %s147
      %s162 = sphi 0, %s148
      %s166 = sphi 0, %s166
      %s168 = sphi 0, %s166
      %s169 = sphi 0, %s168
      %s183 = sphi 0, %s169
      %s187 = sphi 0, %s187
      %s189 = sphi 0, %s187
      %s190 = sphi 0, %s189
      %s204 = sphi 0, %s190
      %s208 = sphi 0, %s208
      %s210 = sphi 0, %s208
      %s211 = sphi 0, %s210
      %s225 = sphi 0, %s211
      %s229 = sphi 0, %s229
      %s231 = sphi 0, %s229
      %s232 = sphi 0, %s231
      %s246 = sphi 0, %s232
      %s250 = sphi 0, %s250
      %s252 = sphi 0, %s250
      %s253 = sphi 0, %s252
      %s267 = sphi 0, %s253
      %s271 = sphi 0, %s271
      %s273 = sphi 0, %s271
      %s274 = sphi 0, %s273
      %s288 = sphi 0, %s274
      %s292 = sphi 0, %s292
      %s294 = sphi 0, %s292
      %s295 = sphi 0, %s294
      %s309 = sphi 0, %s295
      %s313 = sphi 0, %s313
      %s315 = sphi 0, %s313
      %s316 = sphi 0, %s315
      %s330 = sphi 0, %s316
      %s334 = sphi 0, %s334
      %s336 = sphi 0, %s334
      %s337 = sphi 0, %s336
      %s351 = sphi 0, %s337
      %s355 = sphi 0, %s355
      %s357 = sphi 0, %s355
      %s358 = sphi 0, %s357
      %s372 = sphi 0, %s358
      %s376 = sphi 0, %s376
      %s378 = sphi 0, %s376
      %s379 = sphi 0, %s378
      %s393 = sphi 0, %s379
      %s397 = sphi 0, %s397
      %s399 = sphi 0, %s397
      %s400 = sphi 0, %s399
      %s414 = sphi 0, %s400
      %s418 = sphi 0, %s418
      %s420 = sphi 0, %s418
      %s421 = sphi 0, %s420
      %s435 = sphi 0, %s421
      %s441 = sphi 0, %s443
      %s444 = sphi 0, %s441
      %s445 = sphi 0, %s444
      %s461 = sphi 0, %s445
    $region4: #{gnnui_zinb_forward.1} parent=1 // loop_header_branch
      %30 = sbr.rel (%p28) target = $region8
    $region5: #{gnnui_zinb_forward.1} parent=1 // loop_body
      %s32 = ssub.s32 %s27, 1
      %s33 = ssub.s32 %s27, 2
      %s34 = sadd.s32 %s27, 1
      %s35 = ssub.s32 %s27, %s34
      %p36 = scmp.eq.s32.totalorder %s35, 0
      %s38 = sadd.s32 %s37, 1
      %s39 = scalar_select %p36, %s37, %s38
      %p42 = pneg %p36
      %p43 = scmp.eq.s32.totalorder %s27, 1
      %p44 = por %p42, %p43
      %p45 = scmp.ne.s32.totalorder %s37, %s40
      %p46 = scmp.eq.s32.totalorder %s27, 0
      %p47 = por %p45, %p46
      %p48 = scmp.ne.s32.totalorder %s37, %s40
      %p49 = scmp.eq.s32.totalorder %s32, 1
      %p50 = por %p48, %p49
      %p51 = scmp.ne.s32.totalorder %s40, %s41
      %p52 = scmp.eq.s32.totalorder %s32, 0
      %p53 = por %p51, %p52
      %p54 = scmp.ne.s32.totalorder %s40, %s41
      %p55 = scmp.eq.s32.totalorder %s33, 1
      %p56 = por %p54, %p55
      %p58 = scmp.ne.s32.totalorder %s41, %s57
      %p59 = scmp.eq.s32.totalorder %s33, 0
      %p60 = por %p58, %p59
      %s62 = sadd.s32 %s61, 1
      %p65 = scmp.eq.s32.totalorder %s27, 1
      %p66 = scmp.ne.s32.totalorder %s61, %s63
      %p67 = scmp.eq.s32.totalorder %s27, 0
      %p68 = por %p66, %p67
      %p69 = scmp.ne.s32.totalorder %s61, %s63
      %p70 = scmp.eq.s32.totalorder %s32, 1
      %p71 = por %p69, %p70
      %p72 = scmp.ne.s32.totalorder %s63, %s64
      %p73 = scmp.eq.s32.totalorder %s32, 0
      %p74 = por %p72, %p73
      %p75 = scmp.ne.s32.totalorder %s63, %s64
      %p76 = scmp.eq.s32.totalorder %s33, 1
      %p77 = por %p75, %p76
      %p79 = scmp.ne.s32.totalorder %s64, %s78
      %p80 = scmp.eq.s32.totalorder %s33, 0
      %p81 = por %p79, %p80
      %s83 = sadd.s32 %s82, 1
      %p86 = scmp.eq.s32.totalorder %s27, 1
      %p87 = scmp.ne.s32.totalorder %s82, %s84
      %p88 = scmp.eq.s32.totalorder %s27, 0
      %p89 = por %p87, %p88
      %p90 = scmp.ne.s32.totalorder %s82, %s84
      %p91 = scmp.eq.s32.totalorder %s32, 1
      %p92 = por %p90, %p91
      %p93 = scmp.ne.s32.totalorder %s84, %s85
      %p94 = scmp.eq.s32.totalorder %s32, 0
      %p95 = por %p93, %p94
      %p96 = scmp.ne.s32.totalorder %s84, %s85
      %p97 = scmp.eq.s32.totalorder %s33, 1
      %p98 = por %p96, %p97
      %p100 = scmp.ne.s32.totalorder %s85, %s99
      %p101 = scmp.eq.s32.totalorder %s33, 0
      %p102 = por %p100, %p101
      %s104 = sadd.s32 %s103, 1
      %p107 = scmp.eq.s32.totalorder %s27, 1
      %p108 = scmp.ne.s32.totalorder %s103, %s105
      %p109 = scmp.eq.s32.totalorder %s27, 0
      %p110 = por %p108, %p109
      %p111 = scmp.ne.s32.totalorder %s103, %s105
      %p112 = scmp.eq.s32.totalorder %s32, 1
      %p113 = por %p111, %p112
      %p114 = scmp.ne.s32.totalorder %s105, %s106
      %p115 = scmp.eq.s32.totalorder %s32, 0
      %p116 = por %p114, %p115
      %p117 = scmp.ne.s32.totalorder %s105, %s106
      %p118 = scmp.eq.s32.totalorder %s33, 1
      %p119 = por %p117, %p118
      %p121 = scmp.ne.s32.totalorder %s106, %s120
      %p122 = scmp.eq.s32.totalorder %s33, 0
      %p123 = por %p121, %p122
      %s125 = sadd.s32 %s124, 1
      %p128 = scmp.eq.s32.totalorder %s27, 1
      %p129 = scmp.ne.s32.totalorder %s124, %s126
      %p130 = scmp.eq.s32.totalorder %s27, 0
      %p131 = por %p129, %p130
      %p132 = scmp.ne.s32.totalorder %s124, %s126
      %p133 = scmp.eq.s32.totalorder %s32, 1
      %p134 = por %p132, %p133
      %p135 = scmp.ne.s32.totalorder %s126, %s127
      %p136 = scmp.eq.s32.totalorder %s32, 0
      %p137 = por %p135, %p136
      %p138 = scmp.ne.s32.totalorder %s126, %s127
      %p139 = scmp.eq.s32.totalorder %s33, 1
      %p140 = por %p138, %p139
      %p142 = scmp.ne.s32.totalorder %s127, %s141
      %p143 = scmp.eq.s32.totalorder %s33, 0
      %p144 = por %p142, %p143
      %s146 = sadd.s32 %s145, 1
      %p149 = scmp.eq.s32.totalorder %s27, 1
      %p150 = scmp.ne.s32.totalorder %s145, %s147
      %p151 = scmp.eq.s32.totalorder %s27, 0
      %p152 = por %p150, %p151
      %p153 = scmp.ne.s32.totalorder %s145, %s147
      %p154 = scmp.eq.s32.totalorder %s32, 1
      %p155 = por %p153, %p154
      %p156 = scmp.ne.s32.totalorder %s147, %s148
      %p157 = scmp.eq.s32.totalorder %s32, 0
      %p158 = por %p156, %p157
      %p159 = scmp.ne.s32.totalorder %s147, %s148
      %p160 = scmp.eq.s32.totalorder %s33, 1
      %p161 = por %p159, %p160
      %p163 = scmp.ne.s32.totalorder %s148, %s162
      %p164 = scmp.eq.s32.totalorder %s33, 0
      %p165 = por %p163, %p164
      %s167 = sadd.s32 %s166, 1
      %p170 = scmp.eq.s32.totalorder %s27, 1
      %p171 = scmp.ne.s32.totalorder %s166, %s168
      %p172 = scmp.eq.s32.totalorder %s27, 0
      %p173 = por %p171, %p172
      %p174 = scmp.ne.s32.totalorder %s166, %s168
      %p175 = scmp.eq.s32.totalorder %s32, 1
      %p176 = por %p174, %p175
      %p177 = scmp.ne.s32.totalorder %s168, %s169
      %p178 = scmp.eq.s32.totalorder %s32, 0
      %p179 = por %p177, %p178
      %p180 = scmp.ne.s32.totalorder %s168, %s169
      %p181 = scmp.eq.s32.totalorder %s33, 1
      %p182 = por %p180, %p181
      %p184 = scmp.ne.s32.totalorder %s169, %s183
      %p185 = scmp.eq.s32.totalorder %s33, 0
      %p186 = por %p184, %p185
      %s188 = sadd.s32 %s187, 1
      %p191 = scmp.eq.s32.totalorder %s27, 1
      %p192 = scmp.ne.s32.totalorder %s187, %s189
      %p193 = scmp.eq.s32.totalorder %s27, 0
      %p194 = por %p192, %p193
      %p195 = scmp.ne.s32.totalorder %s187, %s189
      %p196 = scmp.eq.s32.totalorder %s32, 1
      %p197 = por %p195, %p196
      %p198 = scmp.ne.s32.totalorder %s189, %s190
      %p199 = scmp.eq.s32.totalorder %s32, 0
      %p200 = por %p198, %p199
      %p201 = scmp.ne.s32.totalorder %s189, %s190
      %p202 = scmp.eq.s32.totalorder %s33, 1
      %p203 = por %p201, %p202
      %p205 = scmp.ne.s32.totalorder %s190, %s204
      %p206 = scmp.eq.s32.totalorder %s33, 0
      %p207 = por %p205, %p206
      %s209 = sadd.s32 %s208, 1
      %p212 = scmp.eq.s32.totalorder %s27, 1
      %p213 = scmp.ne.s32.totalorder %s208, %s210
      %p214 = scmp.eq.s32.totalorder %s27, 0
      %p215 = por %p213, %p214
      %p216 = scmp.ne.s32.totalorder %s208, %s210
      %p217 = scmp.eq.s32.totalorder %s32, 1
      %p218 = por %p216, %p217
      %p219 = scmp.ne.s32.totalorder %s210, %s211
      %p220 = scmp.eq.s32.totalorder %s32, 0
      %p221 = por %p219, %p220
      %p222 = scmp.ne.s32.totalorder %s210, %s211
      %p223 = scmp.eq.s32.totalorder %s33, 1
      %p224 = por %p222, %p223
      %p226 = scmp.ne.s32.totalorder %s211, %s225
      %p227 = scmp.eq.s32.totalorder %s33, 0
      %p228 = por %p226, %p227
      %s230 = sadd.s32 %s229, 1
      %p233 = scmp.eq.s32.totalorder %s27, 1
      %p234 = scmp.ne.s32.totalorder %s229, %s231
      %p235 = scmp.eq.s32.totalorder %s27, 0
      %p236 = por %p234, %p235
      %p237 = scmp.ne.s32.totalorder %s229, %s231
      %p238 = scmp.eq.s32.totalorder %s32, 1
      %p239 = por %p237, %p238
      %p240 = scmp.ne.s32.totalorder %s231, %s232
      %p241 = scmp.eq.s32.totalorder %s32, 0
      %p242 = por %p240, %p241
      %p243 = scmp.ne.s32.totalorder %s231, %s232
      %p244 = scmp.eq.s32.totalorder %s33, 1
      %p245 = por %p243, %p244
      %p247 = scmp.ne.s32.totalorder %s232, %s246
      %p248 = scmp.eq.s32.totalorder %s33, 0
      %p249 = por %p247, %p248
      %s251 = sadd.s32 %s250, 1
      %p254 = scmp.eq.s32.totalorder %s27, 1
      %p255 = scmp.ne.s32.totalorder %s250, %s252
      %p256 = scmp.eq.s32.totalorder %s27, 0
      %p257 = por %p255, %p256
      %p258 = scmp.ne.s32.totalorder %s250, %s252
      %p259 = scmp.eq.s32.totalorder %s32, 1
      %p260 = por %p258, %p259
      %p261 = scmp.ne.s32.totalorder %s252, %s253
      %p262 = scmp.eq.s32.totalorder %s32, 0
      %p263 = por %p261, %p262
      %p264 = scmp.ne.s32.totalorder %s252, %s253
      %p265 = scmp.eq.s32.totalorder %s33, 1
      %p266 = por %p264, %p265
      %p268 = scmp.ne.s32.totalorder %s253, %s267
      %p269 = scmp.eq.s32.totalorder %s33, 0
      %p270 = por %p268, %p269
      %s272 = sadd.s32 %s271, 1
      %p275 = scmp.eq.s32.totalorder %s27, 1
      %p276 = scmp.ne.s32.totalorder %s271, %s273
      %p277 = scmp.eq.s32.totalorder %s27, 0
      %p278 = por %p276, %p277
      %p279 = scmp.ne.s32.totalorder %s271, %s273
      %p280 = scmp.eq.s32.totalorder %s32, 1
      %p281 = por %p279, %p280
      %p282 = scmp.ne.s32.totalorder %s273, %s274
      %p283 = scmp.eq.s32.totalorder %s32, 0
      %p284 = por %p282, %p283
      %p285 = scmp.ne.s32.totalorder %s273, %s274
      %p286 = scmp.eq.s32.totalorder %s33, 1
      %p287 = por %p285, %p286
      %p289 = scmp.ne.s32.totalorder %s274, %s288
      %p290 = scmp.eq.s32.totalorder %s33, 0
      %p291 = por %p289, %p290
      %s293 = sadd.s32 %s292, 1
      %p296 = scmp.eq.s32.totalorder %s27, 1
      %p297 = scmp.ne.s32.totalorder %s292, %s294
      %p298 = scmp.eq.s32.totalorder %s27, 0
      %p299 = por %p297, %p298
      %p300 = scmp.ne.s32.totalorder %s292, %s294
      %p301 = scmp.eq.s32.totalorder %s32, 1
      %p302 = por %p300, %p301
      %p303 = scmp.ne.s32.totalorder %s294, %s295
      %p304 = scmp.eq.s32.totalorder %s32, 0
      %p305 = por %p303, %p304
      %p306 = scmp.ne.s32.totalorder %s294, %s295
      %p307 = scmp.eq.s32.totalorder %s33, 1
      %p308 = por %p306, %p307
      %p310 = scmp.ne.s32.totalorder %s295, %s309
      %p311 = scmp.eq.s32.totalorder %s33, 0
      %p312 = por %p310, %p311
      %s314 = sadd.s32 %s313, 1
      %p317 = scmp.eq.s32.totalorder %s27, 1
      %p318 = scmp.ne.s32.totalorder %s313, %s315
      %p319 = scmp.eq.s32.totalorder %s27, 0
      %p320 = por %p318, %p319
      %p321 = scmp.ne.s32.totalorder %s313, %s315
      %p322 = scmp.eq.s32.totalorder %s32, 1
      %p323 = por %p321, %p322
      %p324 = scmp.ne.s32.totalorder %s315, %s316
      %p325 = scmp.eq.s32.totalorder %s32, 0
      %p326 = por %p324, %p325
      %p327 = scmp.ne.s32.totalorder %s315, %s316
      %p328 = scmp.eq.s32.totalorder %s33, 1
      %p329 = por %p327, %p328
      %p331 = scmp.ne.s32.totalorder %s316, %s330
      %p332 = scmp.eq.s32.totalorder %s33, 0
      %p333 = por %p331, %p332
      %s335 = sadd.s32 %s334, 1
      %p338 = scmp.eq.s32.totalorder %s27, 1
      %p339 = scmp.ne.s32.totalorder %s334, %s336
      %p340 = scmp.eq.s32.totalorder %s27, 0
      %p341 = por %p339, %p340
      %p342 = scmp.ne.s32.totalorder %s334, %s336
      %p343 = scmp.eq.s32.totalorder %s32, 1
      %p344 = por %p342, %p343
      %p345 = scmp.ne.s32.totalorder %s336, %s337
      %p346 = scmp.eq.s32.totalorder %s32, 0
      %p347 = por %p345, %p346
      %p348 = scmp.ne.s32.totalorder %s336, %s337
      %p349 = scmp.eq.s32.totalorder %s33, 1
      %p350 = por %p348, %p349
      %p352 = scmp.ne.s32.totalorder %s337, %s351
      %p353 = scmp.eq.s32.totalorder %s33, 0
      %p354 = por %p352, %p353
      %s356 = sadd.s32 %s355, 1
      %p359 = scmp.eq.s32.totalorder %s27, 1
      %p360 = scmp.ne.s32.totalorder %s355, %s357
      %p361 = scmp.eq.s32.totalorder %s27, 0
      %p362 = por %p360, %p361
      %p363 = scmp.ne.s32.totalorder %s355, %s357
      %p364 = scmp.eq.s32.totalorder %s32, 1
      %p365 = por %p363, %p364
      %p366 = scmp.ne.s32.totalorder %s357, %s358
      %p367 = scmp.eq.s32.totalorder %s32, 0
      %p368 = por %p366, %p367
      %p369 = scmp.ne.s32.totalorder %s357, %s358
      %p370 = scmp.eq.s32.totalorder %s33, 1
      %p371 = por %p369, %p370
      %p373 = scmp.ne.s32.totalorder %s358, %s372
      %p374 = scmp.eq.s32.totalorder %s33, 0
      %p375 = por %p373, %p374
      %s377 = sadd.s32 %s376, 1
      %p380 = scmp.eq.s32.totalorder %s27, 1
      %p381 = scmp.ne.s32.totalorder %s376, %s378
      %p382 = scmp.eq.s32.totalorder %s27, 0
      %p383 = por %p381, %p382
      %p384 = scmp.ne.s32.totalorder %s376, %s378
      %p385 = scmp.eq.s32.totalorder %s32, 1
      %p386 = por %p384, %p385
      %p387 = scmp.ne.s32.totalorder %s378, %s379
      %p388 = scmp.eq.s32.totalorder %s32, 0
      %p389 = por %p387, %p388
      %p390 = scmp.ne.s32.totalorder %s378, %s379
      %p391 = scmp.eq.s32.totalorder %s33, 1
      %p392 = por %p390, %p391
      %p394 = scmp.ne.s32.totalorder %s379, %s393
      %p395 = scmp.eq.s32.totalorder %s33, 0
      %p396 = por %p394, %p395
      %s398 = sadd.s32 %s397, 1
      %p401 = scmp.eq.s32.totalorder %s27, 1
      %p402 = scmp.ne.s32.totalorder %s397, %s399
      %p403 = scmp.eq.s32.totalorder %s27, 0
      %p404 = por %p402, %p403
      %p405 = scmp.ne.s32.totalorder %s397, %s399
      %p406 = scmp.eq.s32.totalorder %s32, 1
      %p407 = por %p405, %p406
      %p408 = scmp.ne.s32.totalorder %s399, %s400
      %p409 = scmp.eq.s32.totalorder %s32, 0
      %p410 = por %p408, %p409
      %p411 = scmp.ne.s32.totalorder %s399, %s400
      %p412 = scmp.eq.s32.totalorder %s33, 1
      %p413 = por %p411, %p412
      %p415 = scmp.ne.s32.totalorder %s400, %s414
      %p416 = scmp.eq.s32.totalorder %s33, 0
      %p417 = por %p415, %p416
      %s419 = sadd.s32 %s418, 1
      %p422 = scmp.eq.s32.totalorder %s27, 1
      %p423 = scmp.ne.s32.totalorder %s418, %s420
      %p424 = scmp.eq.s32.totalorder %s27, 0
      %p425 = por %p423, %p424
      %p426 = scmp.ne.s32.totalorder %s418, %s420
      %p427 = scmp.eq.s32.totalorder %s32, 1
      %p428 = por %p426, %p427
      %p429 = scmp.ne.s32.totalorder %s420, %s421
      %p430 = scmp.eq.s32.totalorder %s32, 0
      %p431 = por %p429, %p430
      %p432 = scmp.ne.s32.totalorder %s420, %s421
      %p433 = scmp.eq.s32.totalorder %s33, 1
      %p434 = por %p432, %p433
      %p436 = scmp.ne.s32.totalorder %s421, %s435
      %p437 = scmp.eq.s32.totalorder %s33, 0
      %p438 = por %p436, %p437
      %s439 = ssub.s32 %s27, %s34
      %p440 = scmp.eq.s32.totalorder %s439, 0
      %s442 = sadd.s32 %s441, 1
      %s443 = scalar_select %p440, %s441, %s442
      %p446 = pneg %p440
      %p447 = scmp.eq.s32.totalorder %s27, 1
      %p448 = por %p446, %p447
      %p449 = scmp.ne.s32.totalorder %s441, %s444
      %p450 = scmp.eq.s32.totalorder %s27, 0
      %p451 = por %p449, %p450
      %p452 = scmp.ne.s32.totalorder %s441, %s444
      %p453 = scmp.eq.s32.totalorder %s32, 1
      %p454 = por %p452, %p453
      %p455 = scmp.ne.s32.totalorder %s444, %s445
      %p456 = scmp.eq.s32.totalorder %s32, 0
      %p457 = por %p455, %p456
      %p458 = scmp.ne.s32.totalorder %s444, %s445
      %p459 = scmp.eq.s32.totalorder %s33, 1
      %p460 = por %p458, %p459
      %p462 = scmp.ne.s32.totalorder %s445, %s461
      %p463 = scmp.eq.s32.totalorder %s33, 0
      %p464 = por %p462, %p463
      %p465 = scmp.le.s32.totalorder 1, %s27
      %p466 = scmp.lt.s32.totalorder %s27, 3
      %p467 = pnand %p465, %p466
      %p468 = pneg %p467
      // Predicated region
      $region9: #{gnnui_zinb_forward.1} parent=5 // pred_check
        _
      $region10: #{gnnui_zinb_forward.1} parent=5 // pred_check_branch
        %470 = sbr.rel (%p467) target = $region12
      $region11: #{gnnui_zinb_forward.1} parent=5 // pred_region
        %s471 = ssub.s32 %s27, 1
        // Predicated region
        $region13: #{gnnui_zinb_forward.1} parent=11 // pred_check
          %p472 = pneg %p74
        $region14: #{gnnui_zinb_forward.1} parent=11 // pred_check_branch
          %474 = sbr.rel (%p472) target = $region16
        $region15: #{gnnui_zinb_forward.1} parent=11 // pred_region
          _
        $region16: #{gnnui_zinb_forward.1} parent=11 // pred_fallthru
          _
        // Predicated region
        $region17: #{gnnui_zinb_forward.1} parent=11 // pred_check
          %p475 = pneg %p95
        $region18: #{gnnui_zinb_forward.1} parent=11 // pred_check_branch
          %477 = sbr.rel (%p475) target = $region20
        $region19: #{gnnui_zinb_forward.1} parent=11 // pred_region
          _
        $region20: #{gnnui_zinb_forward.1} parent=11 // pred_fallthru
          _
        // Predicated region
        $region21: #{gnnui_zinb_forward.1} parent=11 // pred_check
          %p478 = pneg %p116
        $region22: #{gnnui_zinb_forward.1} parent=11 // pred_check_branch
          %480 = sbr.rel (%p478) target = $region24
        $region23: #{gnnui_zinb_forward.1} parent=11 // pred_region
          %s482 = ssub.s32 5120, 5120
          %483 = vsyncadd [#allocation3], %s482
          %s484 = sshll.u32 [#allocation2], 4
          %s485 = int_to_ptr.vmem [resolvable:$true] %s484
          %490 = dma.hbm_to_vmem [thread:$0]  %s3, 5120, %s485, [#allocation3], 64, 64, 4
        $region24: #{gnnui_zinb_forward.1} parent=11 // pred_fallthru
          _
        // Predicated region
        $region25: #{gnnui_zinb_forward.1} parent=11 // pred_check
          %p491 = pneg %p137
        $region26: #{gnnui_zinb_forward.1} parent=11 // pred_check_branch
          %493 = sbr.rel (%p491) target = $region28
        $region27: #{gnnui_zinb_forward.1} parent=11 // pred_region
          _
        $region28: #{gnnui_zinb_forward.1} parent=11 // pred_fallthru
          _
        // Predicated region
        $region29: #{gnnui_zinb_forward.1} parent=11 // pred_check
          %p494 = pneg %p158
        $region30: #{gnnui_zinb_forward.1} parent=11 // pred_check_branch
          %496 = sbr.rel (%p494) target = $region32
        $region31: #{gnnui_zinb_forward.1} parent=11 // pred_region
          _
        $region32: #{gnnui_zinb_forward.1} parent=11 // pred_fallthru
          _
        // Predicated region
        $region33: #{gnnui_zinb_forward.1} parent=11 // pred_check
          %p497 = pneg %p179
        $region34: #{gnnui_zinb_forward.1} parent=11 // pred_check_branch
          %499 = sbr.rel (%p497) target = $region36
        $region35: #{gnnui_zinb_forward.1} parent=11 // pred_region
          _
        $region36: #{gnnui_zinb_forward.1} parent=11 // pred_fallthru
          _
        // Predicated region
        $region37: #{gnnui_zinb_forward.1} parent=11 // pred_check
          %p500 = pneg %p200
        $region38: #{gnnui_zinb_forward.1} parent=11 // pred_check_branch
          %502 = sbr.rel (%p500) target = $region40
        $region39: #{gnnui_zinb_forward.1} parent=11 // pred_region
          %s504 = ssub.s32 5120, 5120
          %505 = vsyncadd [#allocation5], %s504
          %s506 = sshll.u32 [#allocation4], 4
          %s507 = int_to_ptr.vmem [resolvable:$true] %s506
          %512 = dma.hbm_to_vmem [thread:$0]  %s7, 5120, %s507, [#allocation5], 64, 64, 4
        $region40: #{gnnui_zinb_forward.1} parent=11 // pred_fallthru
          _
        // Predicated region
        $region41: #{gnnui_zinb_forward.1} parent=11 // pred_check
          %p513 = pneg %p221
        $region42: #{gnnui_zinb_forward.1} parent=11 // pred_check_branch
          %515 = sbr.rel (%p513) target = $region44
        $region43: #{gnnui_zinb_forward.1} parent=11 // pred_region
          _
        $region44: #{gnnui_zinb_forward.1} parent=11 // pred_fallthru
          _
        // Predicated region
        $region45: #{gnnui_zinb_forward.1} parent=11 // pred_check
          %p516 = pneg %p242
        $region46: #{gnnui_zinb_forward.1} parent=11 // pred_check_branch
          %518 = sbr.rel (%p516) target = $region48
        $region47: #{gnnui_zinb_forward.1} parent=11 // pred_region
          _
        $region48: #{gnnui_zinb_forward.1} parent=11 // pred_fallthru
          _
        // Predicated region
        $region49: #{gnnui_zinb_forward.1} parent=11 // pred_check
          %p519 = pneg %p263
        $region50: #{gnnui_zinb_forward.1} parent=11 // pred_check_branch
          %521 = sbr.rel (%p519) target = $region52
        $region51: #{gnnui_zinb_forward.1} parent=11 // pred_region
          _
        $region52: #{gnnui_zinb_forward.1} parent=11 // pred_fallthru
          _
        // Predicated region
        $region53: #{gnnui_zinb_forward.1} parent=11 // pred_check
          %p522 = pneg %p284
        $region54: #{gnnui_zinb_forward.1} parent=11 // pred_check_branch
          %524 = sbr.rel (%p522) target = $region56
        $region55: #{gnnui_zinb_forward.1} parent=11 // pred_region
          %s526 = ssub.s32 5120, 5120
          %527 = vsyncadd [#allocation5], %s526
          %s528 = sshll.u32 [#allocation6], 4
          %s529 = int_to_ptr.vmem [resolvable:$true] %s528
          %534 = dma.hbm_to_vmem [thread:$0]  %s11, 5120, %s529, [#allocation5], 64, 64, 4
        $region56: #{gnnui_zinb_forward.1} parent=11 // pred_fallthru
          _
        // Predicated region
        $region57: #{gnnui_zinb_forward.1} parent=11 // pred_check
          %p535 = pneg %p305
        $region58: #{gnnui_zinb_forward.1} parent=11 // pred_check_branch
          %537 = sbr.rel (%p535) target = $region60
        $region59: #{gnnui_zinb_forward.1} parent=11 // pred_region
          _
        $region60: #{gnnui_zinb_forward.1} parent=11 // pred_fallthru
          _
        // Predicated region
        $region61: #{gnnui_zinb_forward.1} parent=11 // pred_check
          %p538 = pneg %p326
        $region62: #{gnnui_zinb_forward.1} parent=11 // pred_check_branch
          %540 = sbr.rel (%p538) target = $region64
        $region63: #{gnnui_zinb_forward.1} parent=11 // pred_region
          _
        $region64: #{gnnui_zinb_forward.1} parent=11 // pred_fallthru
          _
        // Predicated region
        $region65: #{gnnui_zinb_forward.1} parent=11 // pred_check
          %p541 = pneg %p347
        $region66: #{gnnui_zinb_forward.1} parent=11 // pred_check_branch
          %543 = sbr.rel (%p541) target = $region68
        $region67: #{gnnui_zinb_forward.1} parent=11 // pred_region
          _
        $region68: #{gnnui_zinb_forward.1} parent=11 // pred_fallthru
          _
        // Predicated region
        $region69: #{gnnui_zinb_forward.1} parent=11 // pred_check
          %p544 = pneg %p368
        $region70: #{gnnui_zinb_forward.1} parent=11 // pred_check_branch
          %546 = sbr.rel (%p544) target = $region72
        $region71: #{gnnui_zinb_forward.1} parent=11 // pred_region
          _
        $region72: #{gnnui_zinb_forward.1} parent=11 // pred_fallthru
          _
        // Predicated region
        $region73: #{gnnui_zinb_forward.1} parent=11 // pred_check
          %p547 = pneg %p389
        $region74: #{gnnui_zinb_forward.1} parent=11 // pred_check_branch
          %549 = sbr.rel (%p547) target = $region76
        $region75: #{gnnui_zinb_forward.1} parent=11 // pred_region
          _
        $region76: #{gnnui_zinb_forward.1} parent=11 // pred_fallthru
          _
        // Predicated region
        $region77: #{gnnui_zinb_forward.1} parent=11 // pred_check
          %p550 = pneg %p410
        $region78: #{gnnui_zinb_forward.1} parent=11 // pred_check_branch
          %552 = sbr.rel (%p550) target = $region80
        $region79: #{gnnui_zinb_forward.1} parent=11 // pred_region
          _
        $region80: #{gnnui_zinb_forward.1} parent=11 // pred_fallthru
          _
        // Predicated region
        $region81: #{gnnui_zinb_forward.1} parent=11 // pred_check
          %p553 = pneg %p431
        $region82: #{gnnui_zinb_forward.1} parent=11 // pred_check_branch
          %555 = sbr.rel (%p553) target = $region84
        $region83: #{gnnui_zinb_forward.1} parent=11 // pred_region
          _
        $region84: #{gnnui_zinb_forward.1} parent=11 // pred_fallthru
          _
      $region12: #{gnnui_zinb_forward.1} parent=5 // pred_fallthru
        _
      %p556 = scmp.lt.s32.totalorder %s27, 2
      // Predicated region
      $region85: #{gnnui_zinb_forward.1} parent=5 // pred_check
        %p557 = pneg %p556
      $region86: #{gnnui_zinb_forward.1} parent=5 // pred_check_branch
        %559 = sbr.rel (%p557) target = $region88
      $region87: #{gnnui_zinb_forward.1} parent=5 // pred_region
        // Predicated region
        $region89: #{gnnui_zinb_forward.1} parent=87 // pred_check
          %p560 = pneg %p47
        $region90: #{gnnui_zinb_forward.1} parent=87 // pred_check_branch
          %562 = sbr.rel (%p560) target = $region92
        $region91: #{gnnui_zinb_forward.1} parent=87 // pred_region
          %p563 = scmp.lt.s32.totalorder %s27, 1
          %s564 = scalar_select %p563, %s27, 1
          %s565 = smul.addr %s564, 2
          %s566 = smul.addr %s565, 8
          %s567 = scalar_lea.vmem %s0, %s566
        $region92: #{gnnui_zinb_forward.1} parent=87 // pred_fallthru
          _
      $region88: #{gnnui_zinb_forward.1} parent=5 // pred_fallthru
        _
      %p568 = scmp.le.s32.totalorder 1, %s27
      %p569 = scmp.lt.s32.totalorder %s27, 3
      %p570 = pnand %p568, %p569
      %p571 = pneg %p570
      // Predicated region
      $region93: #{gnnui_zinb_forward.1} parent=5 // pred_check
        _
      $region94: #{gnnui_zinb_forward.1} parent=5 // pred_check_branch
        %573 = sbr.rel (%p570) target = $region96
      $region95: #{gnnui_zinb_forward.1} parent=5 // pred_region
        %s574 = ssub.s32 %s27, 1
        // Predicated region
        $region97: #{gnnui_zinb_forward.1} parent=95 // pred_check
          %p575 = pneg %p116
        $region98: #{gnnui_zinb_forward.1} parent=95 // pred_check_branch
          %577 = sbr.rel (%p575) target = $region100
        $region99: #{gnnui_zinb_forward.1} parent=95 // pred_region
          %578 = dma.done [#allocation3], 5120
        $region100: #{gnnui_zinb_forward.1} parent=95 // pred_fallthru
          _
        // Predicated region
        $region101: #{gnnui_zinb_forward.1} parent=95 // pred_check
          %p579 = pneg %p200
        $region102: #{gnnui_zinb_forward.1} parent=95 // pred_check_branch
          %581 = sbr.rel (%p579) target = $region104
        $region103: #{gnnui_zinb_forward.1} parent=95 // pred_region
          %582 = dma.done [#allocation5], 5120
        $region104: #{gnnui_zinb_forward.1} parent=95 // pred_fallthru
          _
        // Predicated region
        $region105: #{gnnui_zinb_forward.1} parent=95 // pred_check
          %p583 = pneg %p284
        $region106: #{gnnui_zinb_forward.1} parent=95 // pred_check_branch
          %585 = sbr.rel (%p583) target = $region108
        $region107: #{gnnui_zinb_forward.1} parent=95 // pred_region
          %586 = dma.done [#allocation5], 5120
        $region108: #{gnnui_zinb_forward.1} parent=95 // pred_fallthru
          _
        %p587 = scmp.lt.s32.totalorder %s32, 1
        %s588 = scalar_select %p587, %s32, 1
        %s589 = smul.addr %s588, 2
        %s590 = smul.addr %s589, 8
        %s591 = scalar_lea.vmem %s0, %s590
        %p592 = pneg %p53
        %p593 = pneg %p50
        %p594 = pneg %p74
        %p595 = pneg %p71
        %p596 = pneg %p95
        %p597 = pneg %p92
        %p598 = pneg %p116
        %p599 = pneg %p113
        %p600 = pneg %p137
        %p601 = pneg %p134
        %p602 = pneg %p158
        %p603 = pneg %p155
        %p604 = pneg %p179
        %p605 = pneg %p176
        %p606 = pneg %p200
        %p607 = pneg %p197
        %p608 = pneg %p221
        %p609 = pneg %p218
        %p610 = pneg %p242
        %p611 = pneg %p239
        %p612 = pneg %p263
        %p613 = pneg %p260
        %p614 = pneg %p284
        %p615 = pneg %p281
        %p616 = pneg %p305
        %p617 = pneg %p302
        %p618 = pneg %p326
        %p619 = pneg %p323
        %p620 = pneg %p347
        %p621 = pneg %p344
        %p622 = pneg %p368
        %p623 = pneg %p365
        %p624 = pneg %p389
        %p625 = pneg %p386
        %p626 = pneg %p410
        %p627 = pneg %p407
        %p628 = pneg %p431
        %p629 = pneg %p428
        %p630 = pneg %p457
        %p631 = pneg %p454
        %p632 = scmp.lt.s32.totalorder %s32, 1
        %s633 = scalar_select %p632, %s32, 1
        %s634 = smul.addr %s633, 2
        %s635 = smul.addr %s634, 8
        %s636 = scalar_lea.vmem %s19, %s635
        %p637 = scmp.lt.s32.totalorder %s32, 1
        %s638 = scalar_select %p637, %s32, 1
        %s639 = smul.addr %s638, 2
        %s640 = smul.addr %s639, 8
        %s641 = scalar_lea.vmem %s0, %s640
        %p642 = scmp.lt.s32.totalorder %s32, 1
        %s643 = scalar_select %p642, %s32, 1
        %s644 = smul.addr %s643, 2
        %s645 = smul.addr %s644, 8
        %s646 = scalar_lea.vmem %s19, %s645
        %v648 = vld [vmem:[%s1] sm:$0xf]
        %v649 = vld [vmem:[%s1 + $0x4] sm:$0xf]
        %v650 = vld [vmem:[%s2] sm:$0xf]
        %v651 = vld [vmem:[%s2 + $0x4] sm:$0xf]
        %v652 = vld [vmem:[%s18] sm:$0x1]
        %v653 = vld [vmem:[%s641] sm:$0xff]
        %v654 = vld [vmem:[%s641 + $0x8] sm:$0xff]
        %v655 = vpack.c.bf16 %v654, %v653
        %v656 = vld [vmem:[#allocation2] sm:$0xf]
        %v657 = vld [vmem:[#allocation2 + $0x4] sm:$0xf]
        %v658 = vld [vmem:[#allocation2 + $0x8] sm:$0xf]
        %v659 = vld [vmem:[#allocation2 + $0xc] sm:$0xf]
        %v660 = vld [vmem:[#allocation2 + $0x10] sm:$0xf]
        %v661 = vld [vmem:[#allocation2 + $0x14] sm:$0xf]
        %v662 = vld [vmem:[#allocation2 + $0x18] sm:$0xf]
        %v663 = vld [vmem:[#allocation2 + $0x1c] sm:$0xf]
        %v664 = vld [vmem:[#allocation2 + $0x20] sm:$0xf]
        %v665 = vld [vmem:[#allocation2 + $0x24] sm:$0xf]
        %v666 = vld [vmem:[#allocation2 + $0x28] sm:$0xf]
        %v667 = vld [vmem:[#allocation2 + $0x2c] sm:$0xf]
        %v668 = vld [vmem:[#allocation2 + $0x30] sm:$0xf]
        %v669 = vld [vmem:[#allocation2 + $0x34] sm:$0xf]
        %v670 = vld [vmem:[#allocation2 + $0x38] sm:$0xf]
        %v671 = vld [vmem:[#allocation2 + $0x3c] sm:$0xf]
        %v674 = vunpack.c.l.b16 %v648
        %v675 = vunpack.c.l.b16 %v649
        %v676 = vpack.c.b16 %v675, %v674
        %vm677 = vcmask 130048
        %v679 = vsel %vm677, %v676, 0
        %681 = vmatprep.subr.bf16.mxu0 0
        %682 = vmatpush1.bf16.msra.mxu0 %v655
        %683 = vmatprep.subr.bf16.mxu0 0
        %684 = vmatpush1.bf16.msra.mxu0 0
        %685 = vmatprep.subr.bf16.mxu0 0
        %686 = vmatpush1.bf16.msra.mxu0 0
        %687 = vmatprep.subr.bf16.mxu0 0
        %688 = vmatpush1.bf16.msra.mxu0 0
        %689 = vmatprep.subr.bf16.mxu0 0
        %690 = vmatpush1.bf16.msra.mxu0 0
        %691 = vmatprep.subr.bf16.mxu0 0
        %692 = vmatpush1.bf16.msra.mxu0 0
        %693 = vmatprep.subr.bf16.mxu0 0
        %694 = vmatpush1.bf16.msra.mxu0 0
        %695 = vmatprep.subr.bf16.mxu0 0
        %696 = vmatpush1.bf16.msra.mxu0 0
        %697 = vmatprep.subr.bf16.mxu0 0
        %698 = vmatpush1.bf16.msra.mxu0 0
        %699 = vmatprep.subr.bf16.mxu0 0
        %700 = vmatpush1.bf16.msra.mxu0 0
        %701 = vmatprep.subr.bf16.mxu0 0
        %702 = vmatpush1.bf16.msra.mxu0 0
        %703 = vmatprep.subr.bf16.mxu0 0
        %704 = vmatpush1.bf16.msra.mxu0 0
        %705 = vmatprep.subr.bf16.mxu0 0
        %706 = vmatpush1.bf16.msra.mxu0 0
        %707 = vmatprep.subr.bf16.mxu0 0
        %708 = vmatpush1.bf16.msra.mxu0 0
        %709 = vmatprep.subr.bf16.mxu0 0
        %710 = vmatpush1.bf16.msra.mxu0 0
        %711 = vmatprep.subr.bf16.mxu0 0
        %712 = vmatpush1.bf16.msra.mxu0 0
        %713 = vmatprep.mubr.bf16.mxu0 0
        %714 = vmatmul.mubr.bf16.gmra.mrb[0].mxu0 %v679
        %v715 = vpop.f32.mrb[0].mxu0
        %v716 = vadd.f32 0.0, %v715
        %v717 = vpop.f32.mrb[0].mxu0
        %v718 = vpop.f32.mrb[0].mxu0
        %v719 = vadd.f32 0.0, %v718
        %v720 = vpop.f32.mrb[0].mxu0
        %721 = vdwg.mxu0
        %v722 = vpack.c.bf16 %v719, %v716
        %s723 = scalar_lea.vmem [#allocation2], 64
        %v724 = vld [vmem:[%s723] sm:$0xf]
        %v725 = vld [vmem:[%s723 + $0x4] sm:$0xf]
        %v726 = vld [vmem:[%s723 + $0x8] sm:$0xf]
        %v727 = vld [vmem:[%s723 + $0xc] sm:$0xf]
        %v728 = vld [vmem:[%s723 + $0x10] sm:$0xf]
        %v729 = vld [vmem:[%s723 + $0x14] sm:$0xf]
        %v730 = vld [vmem:[%s723 + $0x18] sm:$0xf]
        %v731 = vld [vmem:[%s723 + $0x1c] sm:$0xf]
        %v732 = vld [vmem:[%s723 + $0x20] sm:$0xf]
        %v733 = vld [vmem:[%s723 + $0x24] sm:$0xf]
        %v734 = vld [vmem:[%s723 + $0x28] sm:$0xf]
        %v735 = vld [vmem:[%s723 + $0x2c] sm:$0xf]
        %v736 = vld [vmem:[%s723 + $0x30] sm:$0xf]
        %v737 = vld [vmem:[%s723 + $0x34] sm:$0xf]
        %v738 = vld [vmem:[%s723 + $0x38] sm:$0xf]
        %v739 = vld [vmem:[%s723 + $0x3c] sm:$0xf]
        %v756 = vunpack.c.l.b16 %v724
        %v757 = vunpack.c.l.b16 %v725
        %v758 = vunpack.c.l.b16 %v726
        %v759 = vunpack.c.l.b16 %v727
        %v760 = vunpack.c.l.b16 %v728
        %v761 = vunpack.c.l.b16 %v729
        %v762 = vunpack.c.l.b16 %v730
        %v763 = vunpack.c.l.b16 %v731
        %v764 = vunpack.c.l.b16 %v732
        %v765 = vunpack.c.l.b16 %v733
        %v766 = vunpack.c.l.b16 %v734
        %v767 = vunpack.c.l.b16 %v735
        %v768 = vunpack.c.l.b16 %v736
        %v769 = vunpack.c.l.b16 %v737
        %v770 = vunpack.c.l.b16 %v738
        %v771 = vunpack.c.l.b16 %v739
        %v772 = vpack.c.b16 %v757, %v756
        %v773 = vpack.c.b16 %v759, %v758
        %v774 = vpack.c.b16 %v761, %v760
        %v775 = vpack.c.b16 %v763, %v762
        %v776 = vpack.c.b16 %v765, %v764
        %v777 = vpack.c.b16 %v767, %v766
        %v778 = vpack.c.b16 %v769, %v768
        %v779 = vpack.c.b16 %v771, %v770
        %788 = vmatprep.subr.bf16.mxu0 0
        %789 = vmatpush1.bf16.msra.mxu0 %v772
        %790 = vmatprep.subr.bf16.mxu0 0
        %791 = vmatpush1.bf16.msra.mxu0 %v773
        %792 = vmatprep.subr.bf16.mxu0 0
        %793 = vmatpush1.bf16.msra.mxu0 %v774
        %794 = vmatprep.subr.bf16.mxu0 0
        %795 = vmatpush1.bf16.msra.mxu0 %v775
        %796 = vmatprep.subr.bf16.mxu0 0
        %797 = vmatpush1.bf16.msra.mxu0 %v776
        %798 = vmatprep.subr.bf16.mxu0 0
        %799 = vmatpush1.bf16.msra.mxu0 %v777
        %800 = vmatprep.subr.bf16.mxu0 0
        %801 = vmatpush1.bf16.msra.mxu0 %v778
        %802 = vmatprep.subr.bf16.mxu0 0
        %803 = vmatpush1.bf16.msra.mxu0 %v779
        %804 = vmatprep.subr.bf16.mxu0 0
        %805 = vmatpush1.bf16.msra.mxu0 0
        %806 = vmatprep.subr.bf16.mxu0 0
        %807 = vmatpush1.bf16.msra.mxu0 0
        %808 = vmatprep.subr.bf16.mxu0 0
        %809 = vmatpush1.bf16.msra.mxu0 0
        %810 = vmatprep.subr.bf16.mxu0 0
        %811 = vmatpush1.bf16.msra.mxu0 0
        %812 = vmatprep.subr.bf16.mxu0 0
        %813 = vmatpush1.bf16.msra.mxu0 0
        %814 = vmatprep.subr.bf16.mxu0 0
        %815 = vmatpush1.bf16.msra.mxu0 0
        %816 = vmatprep.subr.bf16.mxu0 0
        %817 = vmatpush1.bf16.msra.mxu0 0
        %818 = vmatprep.subr.bf16.mxu0 0
        %819 = vmatpush1.bf16.msra.mxu0 0
        %820 = vmatprep.mubr.bf16.mxu0 0
        %821 = vmatmul.mubr.bf16.gmra.mrb[0].mxu0 %v722
        %v822 = vpop.f32.mrb[0].mxu0
        %v823 = vadd.f32 0.0, %v822
        %v824 = vpop.f32.mrb[0].mxu0
        %v825 = vpop.f32.mrb[0].mxu0
        %v826 = vadd.f32 0.0, %v825
        %v827 = vpop.f32.mrb[0].mxu0
        %828 = vdwg.mxu0
        %v845 = vunpack.c.l.b16 %v656
        %v846 = vunpack.c.l.b16 %v657
        %v847 = vunpack.c.l.b16 %v658
        %v848 = vunpack.c.l.b16 %v659
        %v849 = vunpack.c.l.b16 %v660
        %v850 = vunpack.c.l.b16 %v661
        %v851 = vunpack.c.l.b16 %v662
        %v852 = vunpack.c.l.b16 %v663
        %v853 = vunpack.c.l.b16 %v664
        %v854 = vunpack.c.l.b16 %v665
        %v855 = vunpack.c.l.b16 %v666
        %v856 = vunpack.c.l.b16 %v667
        %v857 = vunpack.c.l.b16 %v668
        %v858 = vunpack.c.l.b16 %v669
        %v859 = vunpack.c.l.b16 %v670
        %v860 = vunpack.c.l.b16 %v671
        %v861 = vpack.c.b16 %v846, %v845
        %v862 = vpack.c.b16 %v848, %v847
        %v863 = vpack.c.b16 %v850, %v849
        %v864 = vpack.c.b16 %v852, %v851
        %v865 = vpack.c.b16 %v854, %v853
        %v866 = vpack.c.b16 %v856, %v855
        %v867 = vpack.c.b16 %v858, %v857
        %v868 = vpack.c.b16 %v860, %v859
        %877 = vmatprep.subr.bf16.mxu0 0
        %878 = vmatpush1.bf16.msra.mxu0 %v861
        %879 = vmatprep.subr.bf16.mxu0 0
        %880 = vmatpush1.bf16.msra.mxu0 %v862
        %881 = vmatprep.subr.bf16.mxu0 0
        %882 = vmatpush1.bf16.msra.mxu0 %v863
        %883 = vmatprep.subr.bf16.mxu0 0
        %884 = vmatpush1.bf16.msra.mxu0 %v864
        %885 = vmatprep.subr.bf16.mxu0 0
        %886 = vmatpush1.bf16.msra.mxu0 %v865
        %887 = vmatprep.subr.bf16.mxu0 0
        %888 = vmatpush1.bf16.msra.mxu0 %v866
        %889 = vmatprep.subr.bf16.mxu0 0
        %890 = vmatpush1.bf16.msra.mxu0 %v867
        %891 = vmatprep.subr.bf16.mxu0 0
        %892 = vmatpush1.bf16.msra.mxu0 %v868
        %893 = vmatprep.subr.bf16.mxu0 0
        %894 = vmatpush1.bf16.msra.mxu0 0
        %895 = vmatprep.subr.bf16.mxu0 0
        %896 = vmatpush1.bf16.msra.mxu0 0
        %897 = vmatprep.subr.bf16.mxu0 0
        %898 = vmatpush1.bf16.msra.mxu0 0
        %899 = vmatprep.subr.bf16.mxu0 0
        %900 = vmatpush1.bf16.msra.mxu0 0
        %901 = vmatprep.subr.bf16.mxu0 0
        %902 = vmatpush1.bf16.msra.mxu0 0
        %903 = vmatprep.subr.bf16.mxu0 0
        %904 = vmatpush1.bf16.msra.mxu0 0
        %905 = vmatprep.subr.bf16.mxu0 0
        %906 = vmatpush1.bf16.msra.mxu0 0
        %907 = vmatprep.subr.bf16.mxu0 0
        %908 = vmatpush1.bf16.msra.mxu0 0
        %909 = vmatprep.mubr.bf16.mxu0 0
        %910 = vmatmul.mubr.bf16.gmra.mrb[0].mxu0 %v655
        %v911 = vpop.f32.mrb[0].mxu0
        %v912 = vadd.f32 %v823, %v911
        %v913 = vpop.f32.mrb[0].mxu0
        %v914 = vpop.f32.mrb[0].mxu0
        %v915 = vadd.f32 %v826, %v914
        %v916 = vpop.f32.mrb[0].mxu0
        %917 = vdwg.mxu0
        %918 = vmatprep.subr.bf16.mxu0 0
        %919 = vmatpush1.bf16.msra.mxu0 %v722
        %920 = vmatprep.subr.bf16.mxu0 0
        %921 = vmatpush1.bf16.msra.mxu0 0
        %922 = vmatprep.subr.bf16.mxu0 0
        %923 = vmatpush1.bf16.msra.mxu0 0
        %924 = vmatprep.subr.bf16.mxu0 0
        %925 = vmatpush1.bf16.msra.mxu0 0
        %926 = vmatprep.subr.bf16.mxu0 0
        %927 = vmatpush1.bf16.msra.mxu0 0
        %928 = vmatprep.subr.bf16.mxu0 0
        %929 = vmatpush1.bf16.msra.mxu0 0
        %930 = vmatprep.subr.bf16.mxu0 0
        %931 = vmatpush1.bf16.msra.mxu0 0
        %932 = vmatprep.subr.bf16.mxu0 0
        %933 = vmatpush1.bf16.msra.mxu0 0
        %934 = vmatprep.subr.bf16.mxu0 0
        %935 = vmatpush1.bf16.msra.mxu0 0
        %936 = vmatprep.subr.bf16.mxu0 0
        %937 = vmatpush1.bf16.msra.mxu0 0
        %938 = vmatprep.subr.bf16.mxu0 0
        %939 = vmatpush1.bf16.msra.mxu0 0
        %940 = vmatprep.subr.bf16.mxu0 0
        %941 = vmatpush1.bf16.msra.mxu0 0
        %942 = vmatprep.subr.bf16.mxu0 0
        %943 = vmatpush1.bf16.msra.mxu0 0
        %944 = vmatprep.subr.bf16.mxu0 0
        %945 = vmatpush1.bf16.msra.mxu0 0
        %946 = vmatprep.subr.bf16.mxu0 0
        %947 = vmatpush1.bf16.msra.mxu0 0
        %948 = vmatprep.subr.bf16.mxu0 0
        %949 = vmatpush1.bf16.msra.mxu0 0
        %950 = vmatprep.mubr.bf16.mxu0 0
        %951 = vmatmul.mubr.bf16.gmra.mrb[0].mxu0 %v679
        %v952 = vpop.f32.mrb[0].mxu0
        %v953 = vadd.f32 0.0, %v952
        %v954 = vpop.f32.mrb[0].mxu0
        %v955 = vpop.f32.mrb[0].mxu0
        %v956 = vadd.f32 0.0, %v955
        %v957 = vpop.f32.mrb[0].mxu0
        %958 = vdwg.mxu0
        %v959 = vmul.f32 %v953, 2.0
        %v960 = vmul.f32 %v956, 2.0
        %v961 = vsub.f32 %v959, %v653
        %v962 = vsub.f32 %v960, %v654
        %v963 = vpack.c.bf16 %v962, %v961
        %s964 = scalar_lea.vmem [#allocation2], 128
        %v965 = vld [vmem:[%s964] sm:$0xf]
        %v966 = vld [vmem:[%s964 + $0x4] sm:$0xf]
        %v967 = vld [vmem:[%s964 + $0x8] sm:$0xf]
        %v968 = vld [vmem:[%s964 + $0xc] sm:$0xf]
        %v969 = vld [vmem:[%s964 + $0x10] sm:$0xf]
        %v970 = vld [vmem:[%s964 + $0x14] sm:$0xf]
        %v971 = vld [vmem:[%s964 + $0x18] sm:$0xf]
        %v972 = vld [vmem:[%s964 + $0x1c] sm:$0xf]
        %v973 = vld [vmem:[%s964 + $0x20] sm:$0xf]
        %v974 = vld [vmem:[%s964 + $0x24] sm:$0xf]
        %v975 = vld [vmem:[%s964 + $0x28] sm:$0xf]
        %v976 = vld [vmem:[%s964 + $0x2c] sm:$0xf]
        %v977 = vld [vmem:[%s964 + $0x30] sm:$0xf]
        %v978 = vld [vmem:[%s964 + $0x34] sm:$0xf]
        %v979 = vld [vmem:[%s964 + $0x38] sm:$0xf]
        %v980 = vld [vmem:[%s964 + $0x3c] sm:$0xf]
        %v997 = vunpack.c.l.b16 %v965
        %v998 = vunpack.c.l.b16 %v966
        %v999 = vunpack.c.l.b16 %v967
        %v1000 = vunpack.c.l.b16 %v968
        %v1001 = vunpack.c.l.b16 %v969
        %v1002 = vunpack.c.l.b16 %v970
        %v1003 = vunpack.c.l.b16 %v971
        %v1004 = vunpack.c.l.b16 %v972
        %v1005 = vunpack.c.l.b16 %v973
        %v1006 = vunpack.c.l.b16 %v974
        %v1007 = vunpack.c.l.b16 %v975
        %v1008 = vunpack.c.l.b16 %v976
        %v1009 = vunpack.c.l.b16 %v977
        %v1010 = vunpack.c.l.b16 %v978
        %v1011 = vunpack.c.l.b16 %v979
        %v1012 = vunpack.c.l.b16 %v980
        %v1013 = vpack.c.b16 %v998, %v997
        %v1014 = vpack.c.b16 %v1000, %v999
        %v1015 = vpack.c.b16 %v1002, %v1001
        %v1016 = vpack.c.b16 %v1004, %v1003
        %v1017 = vpack.c.b16 %v1006, %v1005
        %v1018 = vpack.c.b16 %v1008, %v1007
        %v1019 = vpack.c.b16 %v1010, %v1009
        %v1020 = vpack.c.b16 %v1012, %v1011
        %1029 = vmatprep.subr.bf16.mxu0 0
        %1030 = vmatpush1.bf16.msra.mxu0 %v1013
        %1031 = vmatprep.subr.bf16.mxu0 0
        %1032 = vmatpush1.bf16.msra.mxu0 %v1014
        %1033 = vmatprep.subr.bf16.mxu0 0
        %1034 = vmatpush1.bf16.msra.mxu0 %v1015
        %1035 = vmatprep.subr.bf16.mxu0 0
        %1036 = vmatpush1.bf16.msra.mxu0 %v1016
        %1037 = vmatprep.subr.bf16.mxu0 0
        %1038 = vmatpush1.bf16.msra.mxu0 %v1017
        %1039 = vmatprep.subr.bf16.mxu0 0
        %1040 = vmatpush1.bf16.msra.mxu0 %v1018
        %1041 = vmatprep.subr.bf16.mxu0 0
        %1042 = vmatpush1.bf16.msra.mxu0 %v1019
        %1043 = vmatprep.subr.bf16.mxu0 0
        %1044 = vmatpush1.bf16.msra.mxu0 %v1020
        %1045 = vmatprep.subr.bf16.mxu0 0
        %1046 = vmatpush1.bf16.msra.mxu0 0
        %1047 = vmatprep.subr.bf16.mxu0 0
        %1048 = vmatpush1.bf16.msra.mxu0 0
        %1049 = vmatprep.subr.bf16.mxu0 0
        %1050 = vmatpush1.bf16.msra.mxu0 0
        %1051 = vmatprep.subr.bf16.mxu0 0
        %1052 = vmatpush1.bf16.msra.mxu0 0
        %1053 = vmatprep.subr.bf16.mxu0 0
        %1054 = vmatpush1.bf16.msra.mxu0 0
        %1055 = vmatprep.subr.bf16.mxu0 0
        %1056 = vmatpush1.bf16.msra.mxu0 0
        %1057 = vmatprep.subr.bf16.mxu0 0
        %1058 = vmatpush1.bf16.msra.mxu0 0
        %1059 = vmatprep.subr.bf16.mxu0 0
        %1060 = vmatpush1.bf16.msra.mxu0 0
        %1061 = vmatprep.mubr.bf16.mxu0 0
        %1062 = vmatmul.mubr.bf16.gmra.mrb[0].mxu0 %v963
        %v1063 = vpop.f32.mrb[0].mxu0
        %v1064 = vadd.f32 0.0, %v1063
        %v1065 = vpop.f32.mrb[0].mxu0
        %v1066 = vpop.f32.mrb[0].mxu0
        %v1067 = vadd.f32 0.0, %v1066
        %v1068 = vpop.f32.mrb[0].mxu0
        %1069 = vdwg.mxu0
        %v1070 = vadd.f32 %v912, %v1064
        %v1071 = vadd.f32 %v915, %v1067
        %v1074 = vunpack.c.l.b16 %v650
        %v1075 = vunpack.c.l.b16 %v651
        %v1076 = vpack.c.b16 %v1075, %v1074
        %v1078 = vsel %vm677, %v1076, 0
        %1080 = vmatprep.subr.bf16.mxu0 0
        %1081 = vmatpush1.bf16.msra.mxu0 %v722
        %1082 = vmatprep.subr.bf16.mxu0 0
        %1083 = vmatpush1.bf16.msra.mxu0 0
        %1084 = vmatprep.subr.bf16.mxu0 0
        %1085 = vmatpush1.bf16.msra.mxu0 0
        %1086 = vmatprep.subr.bf16.mxu0 0
        %1087 = vmatpush1.bf16.msra.mxu0 0
        %1088 = vmatprep.subr.bf16.mxu0 0
        %1089 = vmatpush1.bf16.msra.mxu0 0
        %1090 = vmatprep.subr.bf16.mxu0 0
        %1091 = vmatpush1.bf16.msra.mxu0 0
        %1092 = vmatprep.subr.bf16.mxu0 0
        %1093 = vmatpush1.bf16.msra.mxu0 0
        %1094 = vmatprep.subr.bf16.mxu0 0
        %1095 = vmatpush1.bf16.msra.mxu0 0
        %1096 = vmatprep.subr.bf16.mxu0 0
        %1097 = vmatpush1.bf16.msra.mxu0 0
        %1098 = vmatprep.subr.bf16.mxu0 0
        %1099 = vmatpush1.bf16.msra.mxu0 0
        %1100 = vmatprep.subr.bf16.mxu0 0
        %1101 = vmatpush1.bf16.msra.mxu0 0
        %1102 = vmatprep.subr.bf16.mxu0 0
        %1103 = vmatpush1.bf16.msra.mxu0 0
        %1104 = vmatprep.subr.bf16.mxu0 0
        %1105 = vmatpush1.bf16.msra.mxu0 0
        %1106 = vmatprep.subr.bf16.mxu0 0
        %1107 = vmatpush1.bf16.msra.mxu0 0
        %1108 = vmatprep.subr.bf16.mxu0 0
        %1109 = vmatpush1.bf16.msra.mxu0 0
        %1110 = vmatprep.subr.bf16.mxu0 0
        %1111 = vmatpush1.bf16.msra.mxu0 0
        %1112 = vmatprep.mubr.bf16.mxu0 0
        %1113 = vmatmul.mubr.bf16.gmra.mrb[0].mxu0 %v1078
        %v1114 = vpop.f32.mrb[0].mxu0
        %v1115 = vadd.f32 0.0, %v1114
        %v1116 = vpop.f32.mrb[0].mxu0
        %v1117 = vpop.f32.mrb[0].mxu0
        %v1118 = vadd.f32 0.0, %v1117
        %v1119 = vpop.f32.mrb[0].mxu0
        %1120 = vdwg.mxu0
        %v1121 = vpack.c.bf16 %v1118, %v1115
        %s1122 = scalar_lea.vmem [#allocation2], 192
        %v1123 = vld [vmem:[%s1122] sm:$0xf]
        %v1124 = vld [vmem:[%s1122 + $0x4] sm:$0xf]
        %v1125 = vld [vmem:[%s1122 + $0x8] sm:$0xf]
        %v1126 = vld [vmem:[%s1122 + $0xc] sm:$0xf]
        %v1127 = vld [vmem:[%s1122 + $0x10] sm:$0xf]
        %v1128 = vld [vmem:[%s1122 + $0x14] sm:$0xf]
        %v1129 = vld [vmem:[%s1122 + $0x18] sm:$0xf]
        %v1130 = vld [vmem:[%s1122 + $0x1c] sm:$0xf]
        %v1131 = vld [vmem:[%s1122 + $0x20] sm:$0xf]
        %v1132 = vld [vmem:[%s1122 + $0x24] sm:$0xf]
        %v1133 = vld [vmem:[%s1122 + $0x28] sm:$0xf]
        %v1134 = vld [vmem:[%s1122 + $0x2c] sm:$0xf]
        %v1135 = vld [vmem:[%s1122 + $0x30] sm:$0xf]
        %v1136 = vld [vmem:[%s1122 + $0x34] sm:$0xf]
        %v1137 = vld [vmem:[%s1122 + $0x38] sm:$0xf]
        %v1138 = vld [vmem:[%s1122 + $0x3c] sm:$0xf]
        %v1155 = vunpack.c.l.b16 %v1123
        %v1156 = vunpack.c.l.b16 %v1124
        %v1157 = vunpack.c.l.b16 %v1125
        %v1158 = vunpack.c.l.b16 %v1126
        %v1159 = vunpack.c.l.b16 %v1127
        %v1160 = vunpack.c.l.b16 %v1128
        %v1161 = vunpack.c.l.b16 %v1129
        %v1162 = vunpack.c.l.b16 %v1130
        %v1163 = vunpack.c.l.b16 %v1131
        %v1164 = vunpack.c.l.b16 %v1132
        %v1165 = vunpack.c.l.b16 %v1133
        %v1166 = vunpack.c.l.b16 %v1134
        %v1167 = vunpack.c.l.b16 %v1135
        %v1168 = vunpack.c.l.b16 %v1136
        %v1169 = vunpack.c.l.b16 %v1137
        %v1170 = vunpack.c.l.b16 %v1138
        %v1171 = vpack.c.b16 %v1156, %v1155
        %v1172 = vpack.c.b16 %v1158, %v1157
        %v1173 = vpack.c.b16 %v1160, %v1159
        %v1174 = vpack.c.b16 %v1162, %v1161
        %v1175 = vpack.c.b16 %v1164, %v1163
        %v1176 = vpack.c.b16 %v1166, %v1165
        %v1177 = vpack.c.b16 %v1168, %v1167
        %v1178 = vpack.c.b16 %v1170, %v1169
        %1187 = vmatprep.subr.bf16.mxu0 0
        %1188 = vmatpush1.bf16.msra.mxu0 %v1171
        %1189 = vmatprep.subr.bf16.mxu0 0
        %1190 = vmatpush1.bf16.msra.mxu0 %v1172
        %1191 = vmatprep.subr.bf16.mxu0 0
        %1192 = vmatpush1.bf16.msra.mxu0 %v1173
        %1193 = vmatprep.subr.bf16.mxu0 0
        %1194 = vmatpush1.bf16.msra.mxu0 %v1174
        %1195 = vmatprep.subr.bf16.mxu0 0
        %1196 = vmatpush1.bf16.msra.mxu0 %v1175
        %1197 = vmatprep.subr.bf16.mxu0 0
        %1198 = vmatpush1.bf16.msra.mxu0 %v1176
        %1199 = vmatprep.subr.bf16.mxu0 0
        %1200 = vmatpush1.bf16.msra.mxu0 %v1177
        %1201 = vmatprep.subr.bf16.mxu0 0
        %1202 = vmatpush1.bf16.msra.mxu0 %v1178
        %1203 = vmatprep.subr.bf16.mxu0 0
        %1204 = vmatpush1.bf16.msra.mxu0 0
        %1205 = vmatprep.subr.bf16.mxu0 0
        %1206 = vmatpush1.bf16.msra.mxu0 0
        %1207 = vmatprep.subr.bf16.mxu0 0
        %1208 = vmatpush1.bf16.msra.mxu0 0
        %1209 = vmatprep.subr.bf16.mxu0 0
        %1210 = vmatpush1.bf16.msra.mxu0 0
        %1211 = vmatprep.subr.bf16.mxu0 0
        %1212 = vmatpush1.bf16.msra.mxu0 0
        %1213 = vmatprep.subr.bf16.mxu0 0
        %1214 = vmatpush1.bf16.msra.mxu0 0
        %1215 = vmatprep.subr.bf16.mxu0 0
        %1216 = vmatpush1.bf16.msra.mxu0 0
        %1217 = vmatprep.subr.bf16.mxu0 0
        %1218 = vmatpush1.bf16.msra.mxu0 0
        %1219 = vmatprep.mubr.bf16.mxu0 0
        %1220 = vmatmul.mubr.bf16.gmra.mrb[0].mxu0 %v1121
        %v1221 = vpop.f32.mrb[0].mxu0
        %v1222 = vadd.f32 0.0, %v1221
        %v1223 = vpop.f32.mrb[0].mxu0
        %v1224 = vpop.f32.mrb[0].mxu0
        %v1225 = vadd.f32 0.0, %v1224
        %v1226 = vpop.f32.mrb[0].mxu0
        %1227 = vdwg.mxu0
        %v1228 = vadd.f32 %v1070, %v1222
        %v1229 = vadd.f32 %v1071, %v1225
        %1230 = vmatprep.subr.bf16.mxu0 0
        %1231 = vmatpush1.bf16.msra.mxu0 %v1121
        %1232 = vmatprep.subr.bf16.mxu0 0
        %1233 = vmatpush1.bf16.msra.mxu0 0
        %1234 = vmatprep.subr.bf16.mxu0 0
        %1235 = vmatpush1.bf16.msra.mxu0 0
        %1236 = vmatprep.subr.bf16.mxu0 0
        %1237 = vmatpush1.bf16.msra.mxu0 0
        %1238 = vmatprep.subr.bf16.mxu0 0
        %1239 = vmatpush1.bf16.msra.mxu0 0
        %1240 = vmatprep.subr.bf16.mxu0 0
        %1241 = vmatpush1.bf16.msra.mxu0 0
        %1242 = vmatprep.subr.bf16.mxu0 0
        %1243 = vmatpush1.bf16.msra.mxu0 0
        %1244 = vmatprep.subr.bf16.mxu0 0
        %1245 = vmatpush1.bf16.msra.mxu0 0
        %1246 = vmatprep.subr.bf16.mxu0 0
        %1247 = vmatpush1.bf16.msra.mxu0 0
        %1248 = vmatprep.subr.bf16.mxu0 0
        %1249 = vmatpush1.bf16.msra.mxu0 0
        %1250 = vmatprep.subr.bf16.mxu0 0
        %1251 = vmatpush1.bf16.msra.mxu0 0
        %1252 = vmatprep.subr.bf16.mxu0 0
        %1253 = vmatpush1.bf16.msra.mxu0 0
        %1254 = vmatprep.subr.bf16.mxu0 0
        %1255 = vmatpush1.bf16.msra.mxu0 0
        %1256 = vmatprep.subr.bf16.mxu0 0
        %1257 = vmatpush1.bf16.msra.mxu0 0
        %1258 = vmatprep.subr.bf16.mxu0 0
        %1259 = vmatpush1.bf16.msra.mxu0 0
        %1260 = vmatprep.subr.bf16.mxu0 0
        %1261 = vmatpush1.bf16.msra.mxu0 0
        %1262 = vmatprep.mubr.bf16.mxu0 0
        %1263 = vmatmul.mubr.bf16.gmra.mrb[0].mxu0 %v1078
        %v1264 = vpop.f32.mrb[0].mxu0
        %v1265 = vadd.f32 0.0, %v1264
        %v1266 = vpop.f32.mrb[0].mxu0
        %v1267 = vpop.f32.mrb[0].mxu0
        %v1268 = vadd.f32 0.0, %v1267
        %v1269 = vpop.f32.mrb[0].mxu0
        %1270 = vdwg.mxu0
        %v1271 = vmul.f32 %v1265, 2.0
        %v1272 = vmul.f32 %v1268, 2.0
        %v1273 = vsub.f32 %v1271, %v716
        %v1274 = vsub.f32 %v1272, %v719
        %v1275 = vpack.c.bf16 %v1274, %v1273
        %s1276 = scalar_lea.vmem [#allocation2], 256
        %v1277 = vld [vmem:[%s1276] sm:$0xf]
        %v1278 = vld [vmem:[%s1276 + $0x4] sm:$0xf]
        %v1279 = vld [vmem:[%s1276 + $0x8] sm:$0xf]
        %v1280 = vld [vmem:[%s1276 + $0xc] sm:$0xf]
        %v1281 = vld [vmem:[%s1276 + $0x10] sm:$0xf]
        %v1282 = vld [vmem:[%s1276 + $0x14] sm:$0xf]
        %v1283 = vld [vmem:[%s1276 + $0x18] sm:$0xf]
        %v1284 = vld [vmem:[%s1276 + $0x1c] sm:$0xf]
        %v1285 = vld [vmem:[%s1276 + $0x20] sm:$0xf]
        %v1286 = vld [vmem:[%s1276 + $0x24] sm:$0xf]
        %v1287 = vld [vmem:[%s1276 + $0x28] sm:$0xf]
        %v1288 = vld [vmem:[%s1276 + $0x2c] sm:$0xf]
        %v1289 = vld [vmem:[%s1276 + $0x30] sm:$0xf]
        %v1290 = vld [vmem:[%s1276 + $0x34] sm:$0xf]
        %v1291 = vld [vmem:[%s1276 + $0x38] sm:$0xf]
        %v1292 = vld [vmem:[%s1276 + $0x3c] sm:$0xf]
        %v1309 = vunpack.c.l.b16 %v1277
        %v1310 = vunpack.c.l.b16 %v1278
        %v1311 = vunpack.c.l.b16 %v1279
        %v1312 = vunpack.c.l.b16 %v1280
        %v1313 = vunpack.c.l.b16 %v1281
        %v1314 = vunpack.c.l.b16 %v1282
        %v1315 = vunpack.c.l.b16 %v1283
        %v1316 = vunpack.c.l.b16 %v1284
        %v1317 = vunpack.c.l.b16 %v1285
        %v1318 = vunpack.c.l.b16 %v1286
        %v1319 = vunpack.c.l.b16 %v1287
        %v1320 = vunpack.c.l.b16 %v1288
        %v1321 = vunpack.c.l.b16 %v1289
        %v1322 = vunpack.c.l.b16 %v1290
        %v1323 = vunpack.c.l.b16 %v1291
        %v1324 = vunpack.c.l.b16 %v1292
        %v1325 = vpack.c.b16 %v1310, %v1309
        %v1326 = vpack.c.b16 %v1312, %v1311
        %v1327 = vpack.c.b16 %v1314, %v1313
        %v1328 = vpack.c.b16 %v1316, %v1315
        %v1329 = vpack.c.b16 %v1318, %v1317
        %v1330 = vpack.c.b16 %v1320, %v1319
        %v1331 = vpack.c.b16 %v1322, %v1321
        %v1332 = vpack.c.b16 %v1324, %v1323
        %1341 = vmatprep.subr.bf16.mxu0 0
        %1342 = vmatpush1.bf16.msra.mxu0 %v1325
        %1343 = vmatprep.subr.bf16.mxu0 0
        %1344 = vmatpush1.bf16.msra.mxu0 %v1326
        %1345 = vmatprep.subr.bf16.mxu0 0
        %1346 = vmatpush1.bf16.msra.mxu0 %v1327
        %1347 = vmatprep.subr.bf16.mxu0 0
        %1348 = vmatpush1.bf16.msra.mxu0 %v1328
        %1349 = vmatprep.subr.bf16.mxu0 0
        %1350 = vmatpush1.bf16.msra.mxu0 %v1329
        %1351 = vmatprep.subr.bf16.mxu0 0
        %1352 = vmatpush1.bf16.msra.mxu0 %v1330
        %1353 = vmatprep.subr.bf16.mxu0 0
        %1354 = vmatpush1.bf16.msra.mxu0 %v1331
        %1355 = vmatprep.subr.bf16.mxu0 0
        %1356 = vmatpush1.bf16.msra.mxu0 %v1332
        %1357 = vmatprep.subr.bf16.mxu0 0
        %1358 = vmatpush1.bf16.msra.mxu0 0
        %1359 = vmatprep.subr.bf16.mxu0 0
        %1360 = vmatpush1.bf16.msra.mxu0 0
        %1361 = vmatprep.subr.bf16.mxu0 0
        %1362 = vmatpush1.bf16.msra.mxu0 0
        %1363 = vmatprep.subr.bf16.mxu0 0
        %1364 = vmatpush1.bf16.msra.mxu0 0
        %1365 = vmatprep.subr.bf16.mxu0 0
        %1366 = vmatpush1.bf16.msra.mxu0 0
        %1367 = vmatprep.subr.bf16.mxu0 0
        %1368 = vmatpush1.bf16.msra.mxu0 0
        %1369 = vmatprep.subr.bf16.mxu0 0
        %1370 = vmatpush1.bf16.msra.mxu0 0
        %1371 = vmatprep.subr.bf16.mxu0 0
        %1372 = vmatpush1.bf16.msra.mxu0 0
        %1373 = vmatprep.mubr.bf16.mxu0 0
        %1374 = vmatmul.mubr.bf16.gmra.mrb[0].mxu0 %v1275
        %v1375 = vpop.f32.mrb[0].mxu0
        %v1376 = vadd.f32 0.0, %v1375
        %v1377 = vpop.f32.mrb[0].mxu0
        %v1378 = vpop.f32.mrb[0].mxu0
        %v1379 = vadd.f32 0.0, %v1378
        %v1380 = vpop.f32.mrb[0].mxu0
        %1381 = vdwg.mxu0
        %v1382 = vadd.f32 %v1228, %v1376
        %v1383 = vadd.f32 %v1229, %v1379
        %v1384 = vld [vmem:[%s4] sm:$0x1]
        %v1386 = vlaneseq
        %v1387 = vshrl.u32 %v1386, 7
        %v1388 = vsub.s32 0, %v1387
        %v1389 = vrot.slane %v1384, %v1388
        %v1391 = vadd.f32 %v1382, %v1389
        %v1392 = vadd.f32 %v1383, %v1389
        %v1393 = vmax.f32 %v1391, 0.0
        %v1394 = vmax.f32 %v1392, 0.0
        %1395 = vadd.xlane.f32.xlu0 %v1393
        %v1396 = vpop.xlane.xlu0 %1395
        %1397 = vadd.xlane.f32.xlu0 %v1394
        %v1398 = vpop.xlane.xlu0 %1397
        %v1399 = vmul.f32 %v1396, 0.03125
        %v1400 = vmul.f32 %v1398, 0.03125
        %v1401 = vsub.f32 %v1393, %v1399
        %v1402 = vsub.f32 %v1394, %v1400
        %v1404 = vlaneseq
        %v1405 = vshrl.u32 %v1404, 7
        %v1406 = vsub.s32 0, %v1405
        %v1407 = vrot.slane %v652, %v1406
        %v1409 = vmul.f32 %v1401, %v1407
        %v1410 = vmul.f32 %v1402, %v1407
        %v1411 = vmul.f32 %v1409, %v1409
        %v1412 = vmul.f32 %v1410, %v1410
        %1413 = vadd.xlane.f32.xlu0 %v1411
        %v1414 = vpop.xlane.xlu0 %1413
        %1415 = vadd.xlane.f32.xlu0 %v1412
        %v1416 = vpop.xlane.xlu0 %1415
        %v1417 = vmul.f32 %v1414, 0.03125
        %v1418 = vmul.f32 %v1416, 0.03125
        %v1419 = vadd.f32 %v1417, 1e-05
        %v1420 = vadd.f32 %v1418, 1e-05
        %v1421 = vrsqrt.pop %v1419
        %v1422 = vrsqrt.pop %v1420
        %v1423 = vmul.f32 %v1409, %v1421
        %v1424 = vmul.f32 %v1410, %v1422
        %v1425 = vld [vmem:[%s5] sm:$0x1]
        %v1427 = vlaneseq
        %v1428 = vshrl.u32 %v1427, 7
        %v1429 = vsub.s32 0, %v1428
        %v1430 = vrot.slane %v1425, %v1429
        %v1432 = vmul.f32 %v1423, %v1430
        %v1433 = vmul.f32 %v1424, %v1430
        %v1434 = vld [vmem:[%s6] sm:$0x1]
        %v1436 = vlaneseq
        %v1437 = vshrl.u32 %v1436, 7
        %v1438 = vsub.s32 0, %v1437
        %v1439 = vrot.slane %v1434, %v1438
        %v1441 = vadd.f32 %v1432, %v1439
        %v1442 = vadd.f32 %v1433, %v1439
        %v1443 = vpack.c.bf16 %v1442, %v1441
        %v1444 = vld [vmem:[#allocation4] sm:$0xf]
        %v1445 = vld [vmem:[#allocation4 + $0x4] sm:$0xf]
        %v1446 = vld [vmem:[#allocation4 + $0x8] sm:$0xf]
        %v1447 = vld [vmem:[#allocation4 + $0xc] sm:$0xf]
        %v1448 = vld [vmem:[#allocation4 + $0x10] sm:$0xf]
        %v1449 = vld [vmem:[#allocation4 + $0x14] sm:$0xf]
        %v1450 = vld [vmem:[#allocation4 + $0x18] sm:$0xf]
        %v1451 = vld [vmem:[#allocation4 + $0x1c] sm:$0xf]
        %v1452 = vld [vmem:[#allocation4 + $0x20] sm:$0xf]
        %v1453 = vld [vmem:[#allocation4 + $0x24] sm:$0xf]
        %v1454 = vld [vmem:[#allocation4 + $0x28] sm:$0xf]
        %v1455 = vld [vmem:[#allocation4 + $0x2c] sm:$0xf]
        %v1456 = vld [vmem:[#allocation4 + $0x30] sm:$0xf]
        %v1457 = vld [vmem:[#allocation4 + $0x34] sm:$0xf]
        %v1458 = vld [vmem:[#allocation4 + $0x38] sm:$0xf]
        %v1459 = vld [vmem:[#allocation4 + $0x3c] sm:$0xf]
        %1460 = vmatprep.subr.bf16.mxu0 0
        %1461 = vmatpush1.bf16.msra.mxu0 %v1443
        %1462 = vmatprep.subr.bf16.mxu0 0
        %1463 = vmatpush1.bf16.msra.mxu0 0
        %1464 = vmatprep.subr.bf16.mxu0 0
        %1465 = vmatpush1.bf16.msra.mxu0 0
        %1466 = vmatprep.subr.bf16.mxu0 0
        %1467 = vmatpush1.bf16.msra.mxu0 0
        %1468 = vmatprep.subr.bf16.mxu0 0
        %1469 = vmatpush1.bf16.msra.mxu0 0
        %1470 = vmatprep.subr.bf16.mxu0 0
        %1471 = vmatpush1.bf16.msra.mxu0 0
        %1472 = vmatprep.subr.bf16.mxu0 0
        %1473 = vmatpush1.bf16.msra.mxu0 0
        %1474 = vmatprep.subr.bf16.mxu0 0
        %1475 = vmatpush1.bf16.msra.mxu0 0
        %1476 = vmatprep.subr.bf16.mxu0 0
        %1477 = vmatpush1.bf16.msra.mxu0 0
        %1478 = vmatprep.subr.bf16.mxu0 0
        %1479 = vmatpush1.bf16.msra.mxu0 0
        %1480 = vmatprep.subr.bf16.mxu0 0
        %1481 = vmatpush1.bf16.msra.mxu0 0
        %1482 = vmatprep.subr.bf16.mxu0 0
        %1483 = vmatpush1.bf16.msra.mxu0 0
        %1484 = vmatprep.subr.bf16.mxu0 0
        %1485 = vmatpush1.bf16.msra.mxu0 0
        %1486 = vmatprep.subr.bf16.mxu0 0
        %1487 = vmatpush1.bf16.msra.mxu0 0
        %1488 = vmatprep.subr.bf16.mxu0 0
        %1489 = vmatpush1.bf16.msra.mxu0 0
        %1490 = vmatprep.subr.bf16.mxu0 0
        %1491 = vmatpush1.bf16.msra.mxu0 0
        %1492 = vmatprep.mubr.bf16.mxu0 0
        %1493 = vmatmul.mubr.bf16.gmra.mrb[0].mxu0 %v679
        %v1494 = vpop.f32.mrb[0].mxu0
        %v1495 = vadd.f32 0.0, %v1494
        %v1496 = vpop.f32.mrb[0].mxu0
        %v1497 = vpop.f32.mrb[0].mxu0
        %v1498 = vadd.f32 0.0, %v1497
        %v1499 = vpop.f32.mrb[0].mxu0
        %1500 = vdwg.mxu0
        %v1501 = vpack.c.bf16 %v1498, %v1495
        %s1502 = scalar_lea.vmem [#allocation4], 64
        %v1503 = vld [vmem:[%s1502] sm:$0xf]
        %v1504 = vld [vmem:[%s1502 + $0x4] sm:$0xf]
        %v1505 = vld [vmem:[%s1502 + $0x8] sm:$0xf]
        %v1506 = vld [vmem:[%s1502 + $0xc] sm:$0xf]
        %v1507 = vld [vmem:[%s1502 + $0x10] sm:$0xf]
        %v1508 = vld [vmem:[%s1502 + $0x14] sm:$0xf]
        %v1509 = vld [vmem:[%s1502 + $0x18] sm:$0xf]
        %v1510 = vld [vmem:[%s1502 + $0x1c] sm:$0xf]
        %v1511 = vld [vmem:[%s1502 + $0x20] sm:$0xf]
        %v1512 = vld [vmem:[%s1502 + $0x24] sm:$0xf]
        %v1513 = vld [vmem:[%s1502 + $0x28] sm:$0xf]
        %v1514 = vld [vmem:[%s1502 + $0x2c] sm:$0xf]
        %v1515 = vld [vmem:[%s1502 + $0x30] sm:$0xf]
        %v1516 = vld [vmem:[%s1502 + $0x34] sm:$0xf]
        %v1517 = vld [vmem:[%s1502 + $0x38] sm:$0xf]
        %v1518 = vld [vmem:[%s1502 + $0x3c] sm:$0xf]
        %v1535 = vunpack.c.l.b16 %v1503
        %v1536 = vunpack.c.l.b16 %v1504
        %v1537 = vunpack.c.l.b16 %v1505
        %v1538 = vunpack.c.l.b16 %v1506
        %v1539 = vunpack.c.l.b16 %v1507
        %v1540 = vunpack.c.l.b16 %v1508
        %v1541 = vunpack.c.l.b16 %v1509
        %v1542 = vunpack.c.l.b16 %v1510
        %v1543 = vunpack.c.l.b16 %v1511
        %v1544 = vunpack.c.l.b16 %v1512
        %v1545 = vunpack.c.l.b16 %v1513
        %v1546 = vunpack.c.l.b16 %v1514
        %v1547 = vunpack.c.l.b16 %v1515
        %v1548 = vunpack.c.l.b16 %v1516
        %v1549 = vunpack.c.l.b16 %v1517
        %v1550 = vunpack.c.l.b16 %v1518
        %v1551 = vpack.c.b16 %v1536, %v1535
        %v1552 = vpack.c.b16 %v1538, %v1537
        %v1553 = vpack.c.b16 %v1540, %v1539
        %v1554 = vpack.c.b16 %v1542, %v1541
        %v1555 = vpack.c.b16 %v1544, %v1543
        %v1556 = vpack.c.b16 %v1546, %v1545
        %v1557 = vpack.c.b16 %v1548, %v1547
        %v1558 = vpack.c.b16 %v1550, %v1549
        %1567 = vmatprep.subr.bf16.mxu0 0
        %1568 = vmatpush1.bf16.msra.mxu0 %v1551
        %1569 = vmatprep.subr.bf16.mxu0 0
        %1570 = vmatpush1.bf16.msra.mxu0 %v1552
        %1571 = vmatprep.subr.bf16.mxu0 0
        %1572 = vmatpush1.bf16.msra.mxu0 %v1553
        %1573 = vmatprep.subr.bf16.mxu0 0
        %1574 = vmatpush1.bf16.msra.mxu0 %v1554
        %1575 = vmatprep.subr.bf16.mxu0 0
        %1576 = vmatpush1.bf16.msra.mxu0 %v1555
        %1577 = vmatprep.subr.bf16.mxu0 0
        %1578 = vmatpush1.bf16.msra.mxu0 %v1556
        %1579 = vmatprep.subr.bf16.mxu0 0
        %1580 = vmatpush1.bf16.msra.mxu0 %v1557
        %1581 = vmatprep.subr.bf16.mxu0 0
        %1582 = vmatpush1.bf16.msra.mxu0 %v1558
        %1583 = vmatprep.subr.bf16.mxu0 0
        %1584 = vmatpush1.bf16.msra.mxu0 0
        %1585 = vmatprep.subr.bf16.mxu0 0
        %1586 = vmatpush1.bf16.msra.mxu0 0
        %1587 = vmatprep.subr.bf16.mxu0 0
        %1588 = vmatpush1.bf16.msra.mxu0 0
        %1589 = vmatprep.subr.bf16.mxu0 0
        %1590 = vmatpush1.bf16.msra.mxu0 0
        %1591 = vmatprep.subr.bf16.mxu0 0
        %1592 = vmatpush1.bf16.msra.mxu0 0
        %1593 = vmatprep.subr.bf16.mxu0 0
        %1594 = vmatpush1.bf16.msra.mxu0 0
        %1595 = vmatprep.subr.bf16.mxu0 0
        %1596 = vmatpush1.bf16.msra.mxu0 0
        %1597 = vmatprep.subr.bf16.mxu0 0
        %1598 = vmatpush1.bf16.msra.mxu0 0
        %1599 = vmatprep.mubr.bf16.mxu0 0
        %1600 = vmatmul.mubr.bf16.gmra.mrb[0].mxu0 %v1501
        %v1601 = vpop.f32.mrb[0].mxu0
        %v1602 = vadd.f32 0.0, %v1601
        %v1603 = vpop.f32.mrb[0].mxu0
        %v1604 = vpop.f32.mrb[0].mxu0
        %v1605 = vadd.f32 0.0, %v1604
        %v1606 = vpop.f32.mrb[0].mxu0
        %1607 = vdwg.mxu0
        %v1624 = vunpack.c.l.b16 %v1444
        %v1625 = vunpack.c.l.b16 %v1445
        %v1626 = vunpack.c.l.b16 %v1446
        %v1627 = vunpack.c.l.b16 %v1447
        %v1628 = vunpack.c.l.b16 %v1448
        %v1629 = vunpack.c.l.b16 %v1449
        %v1630 = vunpack.c.l.b16 %v1450
        %v1631 = vunpack.c.l.b16 %v1451
        %v1632 = vunpack.c.l.b16 %v1452
        %v1633 = vunpack.c.l.b16 %v1453
        %v1634 = vunpack.c.l.b16 %v1454
        %v1635 = vunpack.c.l.b16 %v1455
        %v1636 = vunpack.c.l.b16 %v1456
        %v1637 = vunpack.c.l.b16 %v1457
        %v1638 = vunpack.c.l.b16 %v1458
        %v1639 = vunpack.c.l.b16 %v1459
        %v1640 = vpack.c.b16 %v1625, %v1624
        %v1641 = vpack.c.b16 %v1627, %v1626
        %v1642 = vpack.c.b16 %v1629, %v1628
        %v1643 = vpack.c.b16 %v1631, %v1630
        %v1644 = vpack.c.b16 %v1633, %v1632
        %v1645 = vpack.c.b16 %v1635, %v1634
        %v1646 = vpack.c.b16 %v1637, %v1636
        %v1647 = vpack.c.b16 %v1639, %v1638
        %1656 = vmatprep.subr.bf16.mxu0 0
        %1657 = vmatpush1.bf16.msra.mxu0 %v1640
        %1658 = vmatprep.subr.bf16.mxu0 0
        %1659 = vmatpush1.bf16.msra.mxu0 %v1641
        %1660 = vmatprep.subr.bf16.mxu0 0
        %1661 = vmatpush1.bf16.msra.mxu0 %v1642
        %1662 = vmatprep.subr.bf16.mxu0 0
        %1663 = vmatpush1.bf16.msra.mxu0 %v1643
        %1664 = vmatprep.subr.bf16.mxu0 0
        %1665 = vmatpush1.bf16.msra.mxu0 %v1644
        %1666 = vmatprep.subr.bf16.mxu0 0
        %1667 = vmatpush1.bf16.msra.mxu0 %v1645
        %1668 = vmatprep.subr.bf16.mxu0 0
        %1669 = vmatpush1.bf16.msra.mxu0 %v1646
        %1670 = vmatprep.subr.bf16.mxu0 0
        %1671 = vmatpush1.bf16.msra.mxu0 %v1647
        %1672 = vmatprep.subr.bf16.mxu0 0
        %1673 = vmatpush1.bf16.msra.mxu0 0
        %1674 = vmatprep.subr.bf16.mxu0 0
        %1675 = vmatpush1.bf16.msra.mxu0 0
        %1676 = vmatprep.subr.bf16.mxu0 0
        %1677 = vmatpush1.bf16.msra.mxu0 0
        %1678 = vmatprep.subr.bf16.mxu0 0
        %1679 = vmatpush1.bf16.msra.mxu0 0
        %1680 = vmatprep.subr.bf16.mxu0 0
        %1681 = vmatpush1.bf16.msra.mxu0 0
        %1682 = vmatprep.subr.bf16.mxu0 0
        %1683 = vmatpush1.bf16.msra.mxu0 0
        %1684 = vmatprep.subr.bf16.mxu0 0
        %1685 = vmatpush1.bf16.msra.mxu0 0
        %1686 = vmatprep.subr.bf16.mxu0 0
        %1687 = vmatpush1.bf16.msra.mxu0 0
        %1688 = vmatprep.mubr.bf16.mxu0 0
        %1689 = vmatmul.mubr.bf16.gmra.mrb[0].mxu0 %v1443
        %v1690 = vpop.f32.mrb[0].mxu0
        %v1691 = vadd.f32 %v1602, %v1690
        %v1692 = vpop.f32.mrb[0].mxu0
        %v1693 = vpop.f32.mrb[0].mxu0
        %v1694 = vadd.f32 %v1605, %v1693
        %v1695 = vpop.f32.mrb[0].mxu0
        %1696 = vdwg.mxu0
        %1697 = vmatprep.subr.bf16.mxu0 0
        %1698 = vmatpush1.bf16.msra.mxu0 %v1501
        %1699 = vmatprep.subr.bf16.mxu0 0
        %1700 = vmatpush1.bf16.msra.mxu0 0
        %1701 = vmatprep.subr.bf16.mxu0 0
        %1702 = vmatpush1.bf16.msra.mxu0 0
        %1703 = vmatprep.subr.bf16.mxu0 0
        %1704 = vmatpush1.bf16.msra.mxu0 0
        %1705 = vmatprep.subr.bf16.mxu0 0
        %1706 = vmatpush1.bf16.msra.mxu0 0
        %1707 = vmatprep.subr.bf16.mxu0 0
        %1708 = vmatpush1.bf16.msra.mxu0 0
        %1709 = vmatprep.subr.bf16.mxu0 0
        %1710 = vmatpush1.bf16.msra.mxu0 0
        %1711 = vmatprep.subr.bf16.mxu0 0
        %1712 = vmatpush1.bf16.msra.mxu0 0
        %1713 = vmatprep.subr.bf16.mxu0 0
        %1714 = vmatpush1.bf16.msra.mxu0 0
        %1715 = vmatprep.subr.bf16.mxu0 0
        %1716 = vmatpush1.bf16.msra.mxu0 0
        %1717 = vmatprep.subr.bf16.mxu0 0
        %1718 = vmatpush1.bf16.msra.mxu0 0
        %1719 = vmatprep.subr.bf16.mxu0 0
        %1720 = vmatpush1.bf16.msra.mxu0 0
        %1721 = vmatprep.subr.bf16.mxu0 0
        %1722 = vmatpush1.bf16.msra.mxu0 0
        %1723 = vmatprep.subr.bf16.mxu0 0
        %1724 = vmatpush1.bf16.msra.mxu0 0
        %1725 = vmatprep.subr.bf16.mxu0 0
        %1726 = vmatpush1.bf16.msra.mxu0 0
        %1727 = vmatprep.subr.bf16.mxu0 0
        %1728 = vmatpush1.bf16.msra.mxu0 0
        %1729 = vmatprep.mubr.bf16.mxu0 0
        %1730 = vmatmul.mubr.bf16.gmra.mrb[0].mxu0 %v679
        %v1731 = vpop.f32.mrb[0].mxu0
        %v1732 = vadd.f32 0.0, %v1731
        %v1733 = vpop.f32.mrb[0].mxu0
        %v1734 = vpop.f32.mrb[0].mxu0
        %v1735 = vadd.f32 0.0, %v1734
        %v1736 = vpop.f32.mrb[0].mxu0
        %1737 = vdwg.mxu0
        %v1738 = vmul.f32 %v1732, 2.0
        %v1739 = vmul.f32 %v1735, 2.0
        %v1740 = vsub.f32 %v1738, %v1441
        %v1741 = vsub.f32 %v1739, %v1442
        %v1742 = vpack.c.bf16 %v1741, %v1740
        %s1743 = scalar_lea.vmem [#allocation4], 128
        %v1744 = vld [vmem:[%s1743] sm:$0xf]
        %v1745 = vld [vmem:[%s1743 + $0x4] sm:$0xf]
        %v1746 = vld [vmem:[%s1743 + $0x8] sm:$0xf]
        %v1747 = vld [vmem:[%s1743 + $0xc] sm:$0xf]
        %v1748 = vld [vmem:[%s1743 + $0x10] sm:$0xf]
        %v1749 = vld [vmem:[%s1743 + $0x14] sm:$0xf]
        %v1750 = vld [vmem:[%s1743 + $0x18] sm:$0xf]
        %v1751 = vld [vmem:[%s1743 + $0x1c] sm:$0xf]
        %v1752 = vld [vmem:[%s1743 + $0x20] sm:$0xf]
        %v1753 = vld [vmem:[%s1743 + $0x24] sm:$0xf]
        %v1754 = vld [vmem:[%s1743 + $0x28] sm:$0xf]
        %v1755 = vld [vmem:[%s1743 + $0x2c] sm:$0xf]
        %v1756 = vld [vmem:[%s1743 + $0x30] sm:$0xf]
        %v1757 = vld [vmem:[%s1743 + $0x34] sm:$0xf]
        %v1758 = vld [vmem:[%s1743 + $0x38] sm:$0xf]
        %v1759 = vld [vmem:[%s1743 + $0x3c] sm:$0xf]
        %v1776 = vunpack.c.l.b16 %v1744
        %v1777 = vunpack.c.l.b16 %v1745
        %v1778 = vunpack.c.l.b16 %v1746
        %v1779 = vunpack.c.l.b16 %v1747
        %v1780 = vunpack.c.l.b16 %v1748
        %v1781 = vunpack.c.l.b16 %v1749
        %v1782 = vunpack.c.l.b16 %v1750
        %v1783 = vunpack.c.l.b16 %v1751
        %v1784 = vunpack.c.l.b16 %v1752
        %v1785 = vunpack.c.l.b16 %v1753
        %v1786 = vunpack.c.l.b16 %v1754
        %v1787 = vunpack.c.l.b16 %v1755
        %v1788 = vunpack.c.l.b16 %v1756
        %v1789 = vunpack.c.l.b16 %v1757
        %v1790 = vunpack.c.l.b16 %v1758
        %v1791 = vunpack.c.l.b16 %v1759
        %v1792 = vpack.c.b16 %v1777, %v1776
        %v1793 = vpack.c.b16 %v1779, %v1778
        %v1794 = vpack.c.b16 %v1781, %v1780
        %v1795 = vpack.c.b16 %v1783, %v1782
        %v1796 = vpack.c.b16 %v1785, %v1784
        %v1797 = vpack.c.b16 %v1787, %v1786
        %v1798 = vpack.c.b16 %v1789, %v1788
        %v1799 = vpack.c.b16 %v1791, %v1790
        %1808 = vmatprep.subr.bf16.mxu0 0
        %1809 = vmatpush1.bf16.msra.mxu0 %v1792
        %1810 = vmatprep.subr.bf16.mxu0 0
        %1811 = vmatpush1.bf16.msra.mxu0 %v1793
        %1812 = vmatprep.subr.bf16.mxu0 0
        %1813 = vmatpush1.bf16.msra.mxu0 %v1794
        %1814 = vmatprep.subr.bf16.mxu0 0
        %1815 = vmatpush1.bf16.msra.mxu0 %v1795
        %1816 = vmatprep.subr.bf16.mxu0 0
        %1817 = vmatpush1.bf16.msra.mxu0 %v1796
        %1818 = vmatprep.subr.bf16.mxu0 0
        %1819 = vmatpush1.bf16.msra.mxu0 %v1797
        %1820 = vmatprep.subr.bf16.mxu0 0
        %1821 = vmatpush1.bf16.msra.mxu0 %v1798
        %1822 = vmatprep.subr.bf16.mxu0 0
        %1823 = vmatpush1.bf16.msra.mxu0 %v1799
        %1824 = vmatprep.subr.bf16.mxu0 0
        %1825 = vmatpush1.bf16.msra.mxu0 0
        %1826 = vmatprep.subr.bf16.mxu0 0
        %1827 = vmatpush1.bf16.msra.mxu0 0
        %1828 = vmatprep.subr.bf16.mxu0 0
        %1829 = vmatpush1.bf16.msra.mxu0 0
        %1830 = vmatprep.subr.bf16.mxu0 0
        %1831 = vmatpush1.bf16.msra.mxu0 0
        %1832 = vmatprep.subr.bf16.mxu0 0
        %1833 = vmatpush1.bf16.msra.mxu0 0
        %1834 = vmatprep.subr.bf16.mxu0 0
        %1835 = vmatpush1.bf16.msra.mxu0 0
        %1836 = vmatprep.subr.bf16.mxu0 0
        %1837 = vmatpush1.bf16.msra.mxu0 0
        %1838 = vmatprep.subr.bf16.mxu0 0
        %1839 = vmatpush1.bf16.msra.mxu0 0
        %1840 = vmatprep.mubr.bf16.mxu0 0
        %1841 = vmatmul.mubr.bf16.gmra.mrb[0].mxu0 %v1742
        %v1842 = vpop.f32.mrb[0].mxu0
        %v1843 = vadd.f32 0.0, %v1842
        %v1844 = vpop.f32.mrb[0].mxu0
        %v1845 = vpop.f32.mrb[0].mxu0
        %v1846 = vadd.f32 0.0, %v1845
        %v1847 = vpop.f32.mrb[0].mxu0
        %1848 = vdwg.mxu0
        %v1849 = vadd.f32 %v1691, %v1843
        %v1850 = vadd.f32 %v1694, %v1846
        %1851 = vmatprep.subr.bf16.mxu0 0
        %1852 = vmatpush1.bf16.msra.mxu0 %v1501
        %1853 = vmatprep.subr.bf16.mxu0 0
        %1854 = vmatpush1.bf16.msra.mxu0 0
        %1855 = vmatprep.subr.bf16.mxu0 0
        %1856 = vmatpush1.bf16.msra.mxu0 0
        %1857 = vmatprep.subr.bf16.mxu0 0
        %1858 = vmatpush1.bf16.msra.mxu0 0
        %1859 = vmatprep.subr.bf16.mxu0 0
        %1860 = vmatpush1.bf16.msra.mxu0 0
        %1861 = vmatprep.subr.bf16.mxu0 0
        %1862 = vmatpush1.bf16.msra.mxu0 0
        %1863 = vmatprep.subr.bf16.mxu0 0
        %1864 = vmatpush1.bf16.msra.mxu0 0
        %1865 = vmatprep.subr.bf16.mxu0 0
        %1866 = vmatpush1.bf16.msra.mxu0 0
        %1867 = vmatprep.subr.bf16.mxu0 0
        %1868 = vmatpush1.bf16.msra.mxu0 0
        %1869 = vmatprep.subr.bf16.mxu0 0
        %1870 = vmatpush1.bf16.msra.mxu0 0
        %1871 = vmatprep.subr.bf16.mxu0 0
        %1872 = vmatpush1.bf16.msra.mxu0 0
        %1873 = vmatprep.subr.bf16.mxu0 0
        %1874 = vmatpush1.bf16.msra.mxu0 0
        %1875 = vmatprep.subr.bf16.mxu0 0
        %1876 = vmatpush1.bf16.msra.mxu0 0
        %1877 = vmatprep.subr.bf16.mxu0 0
        %1878 = vmatpush1.bf16.msra.mxu0 0
        %1879 = vmatprep.subr.bf16.mxu0 0
        %1880 = vmatpush1.bf16.msra.mxu0 0
        %1881 = vmatprep.subr.bf16.mxu0 0
        %1882 = vmatpush1.bf16.msra.mxu0 0
        %1883 = vmatprep.mubr.bf16.mxu0 0
        %1884 = vmatmul.mubr.bf16.gmra.mrb[0].mxu0 %v1078
        %v1885 = vpop.f32.mrb[0].mxu0
        %v1886 = vadd.f32 0.0, %v1885
        %v1887 = vpop.f32.mrb[0].mxu0
        %v1888 = vpop.f32.mrb[0].mxu0
        %v1889 = vadd.f32 0.0, %v1888
        %v1890 = vpop.f32.mrb[0].mxu0
        %1891 = vdwg.mxu0
        %v1892 = vpack.c.bf16 %v1889, %v1886
        %s1893 = scalar_lea.vmem [#allocation4], 192
        %v1894 = vld [vmem:[%s1893] sm:$0xf]
        %v1895 = vld [vmem:[%s1893 + $0x4] sm:$0xf]
        %v1896 = vld [vmem:[%s1893 + $0x8] sm:$0xf]
        %v1897 = vld [vmem:[%s1893 + $0xc] sm:$0xf]
        %v1898 = vld [vmem:[%s1893 + $0x10] sm:$0xf]
        %v1899 = vld [vmem:[%s1893 + $0x14] sm:$0xf]
        %v1900 = vld [vmem:[%s1893 + $0x18] sm:$0xf]
        %v1901 = vld [vmem:[%s1893 + $0x1c] sm:$0xf]
        %v1902 = vld [vmem:[%s1893 + $0x20] sm:$0xf]
        %v1903 = vld [vmem:[%s1893 + $0x24] sm:$0xf]
        %v1904 = vld [vmem:[%s1893 + $0x28] sm:$0xf]
        %v1905 = vld [vmem:[%s1893 + $0x2c] sm:$0xf]
        %v1906 = vld [vmem:[%s1893 + $0x30] sm:$0xf]
        %v1907 = vld [vmem:[%s1893 + $0x34] sm:$0xf]
        %v1908 = vld [vmem:[%s1893 + $0x38] sm:$0xf]
        %v1909 = vld [vmem:[%s1893 + $0x3c] sm:$0xf]
        %v1926 = vunpack.c.l.b16 %v1894
        %v1927 = vunpack.c.l.b16 %v1895
        %v1928 = vunpack.c.l.b16 %v1896
        %v1929 = vunpack.c.l.b16 %v1897
        %v1930 = vunpack.c.l.b16 %v1898
        %v1931 = vunpack.c.l.b16 %v1899
        %v1932 = vunpack.c.l.b16 %v1900
        %v1933 = vunpack.c.l.b16 %v1901
        %v1934 = vunpack.c.l.b16 %v1902
        %v1935 = vunpack.c.l.b16 %v1903
        %v1936 = vunpack.c.l.b16 %v1904
        %v1937 = vunpack.c.l.b16 %v1905
        %v1938 = vunpack.c.l.b16 %v1906
        %v1939 = vunpack.c.l.b16 %v1907
        %v1940 = vunpack.c.l.b16 %v1908
        %v1941 = vunpack.c.l.b16 %v1909
        %v1942 = vpack.c.b16 %v1927, %v1926
        %v1943 = vpack.c.b16 %v1929, %v1928
        %v1944 = vpack.c.b16 %v1931, %v1930
        %v1945 = vpack.c.b16 %v1933, %v1932
        %v1946 = vpack.c.b16 %v1935, %v1934
        %v1947 = vpack.c.b16 %v1937, %v1936
        %v1948 = vpack.c.b16 %v1939, %v1938
        %v1949 = vpack.c.b16 %v1941, %v1940
        %1958 = vmatprep.subr.bf16.mxu0 0
        %1959 = vmatpush1.bf16.msra.mxu0 %v1942
        %1960 = vmatprep.subr.bf16.mxu0 0
        %1961 = vmatpush1.bf16.msra.mxu0 %v1943
        %1962 = vmatprep.subr.bf16.mxu0 0
        %1963 = vmatpush1.bf16.msra.mxu0 %v1944
        %1964 = vmatprep.subr.bf16.mxu0 0
        %1965 = vmatpush1.bf16.msra.mxu0 %v1945
        %1966 = vmatprep.subr.bf16.mxu0 0
        %1967 = vmatpush1.bf16.msra.mxu0 %v1946
        %1968 = vmatprep.subr.bf16.mxu0 0
        %1969 = vmatpush1.bf16.msra.mxu0 %v1947
        %1970 = vmatprep.subr.bf16.mxu0 0
        %1971 = vmatpush1.bf16.msra.mxu0 %v1948
        %1972 = vmatprep.subr.bf16.mxu0 0
        %1973 = vmatpush1.bf16.msra.mxu0 %v1949
        %1974 = vmatprep.subr.bf16.mxu0 0
        %1975 = vmatpush1.bf16.msra.mxu0 0
        %1976 = vmatprep.subr.bf16.mxu0 0
        %1977 = vmatpush1.bf16.msra.mxu0 0
        %1978 = vmatprep.subr.bf16.mxu0 0
        %1979 = vmatpush1.bf16.msra.mxu0 0
        %1980 = vmatprep.subr.bf16.mxu0 0
        %1981 = vmatpush1.bf16.msra.mxu0 0
        %1982 = vmatprep.subr.bf16.mxu0 0
        %1983 = vmatpush1.bf16.msra.mxu0 0
        %1984 = vmatprep.subr.bf16.mxu0 0
        %1985 = vmatpush1.bf16.msra.mxu0 0
        %1986 = vmatprep.subr.bf16.mxu0 0
        %1987 = vmatpush1.bf16.msra.mxu0 0
        %1988 = vmatprep.subr.bf16.mxu0 0
        %1989 = vmatpush1.bf16.msra.mxu0 0
        %1990 = vmatprep.mubr.bf16.mxu0 0
        %1991 = vmatmul.mubr.bf16.gmra.mrb[0].mxu0 %v1892
        %v1992 = vpop.f32.mrb[0].mxu0
        %v1993 = vadd.f32 0.0, %v1992
        %v1994 = vpop.f32.mrb[0].mxu0
        %v1995 = vpop.f32.mrb[0].mxu0
        %v1996 = vadd.f32 0.0, %v1995
        %v1997 = vpop.f32.mrb[0].mxu0
        %1998 = vdwg.mxu0
        %v1999 = vadd.f32 %v1849, %v1993
        %v2000 = vadd.f32 %v1850, %v1996
        %2001 = vmatprep.subr.bf16.mxu0 0
        %2002 = vmatpush1.bf16.msra.mxu0 %v1892
        %2003 = vmatprep.subr.bf16.mxu0 0
        %2004 = vmatpush1.bf16.msra.mxu0 0
        %2005 = vmatprep.subr.bf16.mxu0 0
        %2006 = vmatpush1.bf16.msra.mxu0 0
        %2007 = vmatprep.subr.bf16.mxu0 0
        %2008 = vmatpush1.bf16.msra.mxu0 0
        %2009 = vmatprep.subr.bf16.mxu0 0
        %2010 = vmatpush1.bf16.msra.mxu0 0
        %2011 = vmatprep.subr.bf16.mxu0 0
        %2012 = vmatpush1.bf16.msra.mxu0 0
        %2013 = vmatprep.subr.bf16.mxu0 0
        %2014 = vmatpush1.bf16.msra.mxu0 0
        %2015 = vmatprep.subr.bf16.mxu0 0
        %2016 = vmatpush1.bf16.msra.mxu0 0
        %2017 = vmatprep.subr.bf16.mxu0 0
        %2018 = vmatpush1.bf16.msra.mxu0 0
        %2019 = vmatprep.subr.bf16.mxu0 0
        %2020 = vmatpush1.bf16.msra.mxu0 0
        %2021 = vmatprep.subr.bf16.mxu0 0
        %2022 = vmatpush1.bf16.msra.mxu0 0
        %2023 = vmatprep.subr.bf16.mxu0 0
        %2024 = vmatpush1.bf16.msra.mxu0 0
        %2025 = vmatprep.subr.bf16.mxu0 0
        %2026 = vmatpush1.bf16.msra.mxu0 0
        %2027 = vmatprep.subr.bf16.mxu0 0
        %2028 = vmatpush1.bf16.msra.mxu0 0
        %2029 = vmatprep.subr.bf16.mxu0 0
        %2030 = vmatpush1.bf16.msra.mxu0 0
        %2031 = vmatprep.subr.bf16.mxu0 0
        %2032 = vmatpush1.bf16.msra.mxu0 0
        %2033 = vmatprep.mubr.bf16.mxu0 0
        %2034 = vmatmul.mubr.bf16.gmra.mrb[0].mxu0 %v1078
        %v2035 = vpop.f32.mrb[0].mxu0
        %v2036 = vadd.f32 0.0, %v2035
        %v2037 = vpop.f32.mrb[0].mxu0
        %v2038 = vpop.f32.mrb[0].mxu0
        %v2039 = vadd.f32 0.0, %v2038
        %v2040 = vpop.f32.mrb[0].mxu0
        %2041 = vdwg.mxu0
        %v2042 = vmul.f32 %v2036, 2.0
        %v2043 = vmul.f32 %v2039, 2.0
        %v2044 = vsub.f32 %v2042, %v1495
        %v2045 = vsub.f32 %v2043, %v1498
        %v2046 = vpack.c.bf16 %v2045, %v2044
        %s2047 = scalar_lea.vmem [#allocation4], 256
        %v2048 = vld [vmem:[%s2047] sm:$0xf]
        %v2049 = vld [vmem:[%s2047 + $0x4] sm:$0xf]
        %v2050 = vld [vmem:[%s2047 + $0x8] sm:$0xf]
        %v2051 = vld [vmem:[%s2047 + $0xc] sm:$0xf]
        %v2052 = vld [vmem:[%s2047 + $0x10] sm:$0xf]
        %v2053 = vld [vmem:[%s2047 + $0x14] sm:$0xf]
        %v2054 = vld [vmem:[%s2047 + $0x18] sm:$0xf]
        %v2055 = vld [vmem:[%s2047 + $0x1c] sm:$0xf]
        %v2056 = vld [vmem:[%s2047 + $0x20] sm:$0xf]
        %v2057 = vld [vmem:[%s2047 + $0x24] sm:$0xf]
        %v2058 = vld [vmem:[%s2047 + $0x28] sm:$0xf]
        %v2059 = vld [vmem:[%s2047 + $0x2c] sm:$0xf]
        %v2060 = vld [vmem:[%s2047 + $0x30] sm:$0xf]
        %v2061 = vld [vmem:[%s2047 + $0x34] sm:$0xf]
        %v2062 = vld [vmem:[%s2047 + $0x38] sm:$0xf]
        %v2063 = vld [vmem:[%s2047 + $0x3c] sm:$0xf]
        %v2080 = vunpack.c.l.b16 %v2048
        %v2081 = vunpack.c.l.b16 %v2049
        %v2082 = vunpack.c.l.b16 %v2050
        %v2083 = vunpack.c.l.b16 %v2051
        %v2084 = vunpack.c.l.b16 %v2052
        %v2085 = vunpack.c.l.b16 %v2053
        %v2086 = vunpack.c.l.b16 %v2054
        %v2087 = vunpack.c.l.b16 %v2055
        %v2088 = vunpack.c.l.b16 %v2056
        %v2089 = vunpack.c.l.b16 %v2057
        %v2090 = vunpack.c.l.b16 %v2058
        %v2091 = vunpack.c.l.b16 %v2059
        %v2092 = vunpack.c.l.b16 %v2060
        %v2093 = vunpack.c.l.b16 %v2061
        %v2094 = vunpack.c.l.b16 %v2062
        %v2095 = vunpack.c.l.b16 %v2063
        %v2096 = vpack.c.b16 %v2081, %v2080
        %v2097 = vpack.c.b16 %v2083, %v2082
        %v2098 = vpack.c.b16 %v2085, %v2084
        %v2099 = vpack.c.b16 %v2087, %v2086
        %v2100 = vpack.c.b16 %v2089, %v2088
        %v2101 = vpack.c.b16 %v2091, %v2090
        %v2102 = vpack.c.b16 %v2093, %v2092
        %v2103 = vpack.c.b16 %v2095, %v2094
        %2112 = vmatprep.subr.bf16.mxu0 0
        %2113 = vmatpush1.bf16.msra.mxu0 %v2096
        %2114 = vmatprep.subr.bf16.mxu0 0
        %2115 = vmatpush1.bf16.msra.mxu0 %v2097
        %2116 = vmatprep.subr.bf16.mxu0 0
        %2117 = vmatpush1.bf16.msra.mxu0 %v2098
        %2118 = vmatprep.subr.bf16.mxu0 0
        %2119 = vmatpush1.bf16.msra.mxu0 %v2099
        %2120 = vmatprep.subr.bf16.mxu0 0
        %2121 = vmatpush1.bf16.msra.mxu0 %v2100
        %2122 = vmatprep.subr.bf16.mxu0 0
        %2123 = vmatpush1.bf16.msra.mxu0 %v2101
        %2124 = vmatprep.subr.bf16.mxu0 0
        %2125 = vmatpush1.bf16.msra.mxu0 %v2102
        %2126 = vmatprep.subr.bf16.mxu0 0
        %2127 = vmatpush1.bf16.msra.mxu0 %v2103
        %2128 = vmatprep.subr.bf16.mxu0 0
        %2129 = vmatpush1.bf16.msra.mxu0 0
        %2130 = vmatprep.subr.bf16.mxu0 0
        %2131 = vmatpush1.bf16.msra.mxu0 0
        %2132 = vmatprep.subr.bf16.mxu0 0
        %2133 = vmatpush1.bf16.msra.mxu0 0
        %2134 = vmatprep.subr.bf16.mxu0 0
        %2135 = vmatpush1.bf16.msra.mxu0 0
        %2136 = vmatprep.subr.bf16.mxu0 0
        %2137 = vmatpush1.bf16.msra.mxu0 0
        %2138 = vmatprep.subr.bf16.mxu0 0
        %2139 = vmatpush1.bf16.msra.mxu0 0
        %2140 = vmatprep.subr.bf16.mxu0 0
        %2141 = vmatpush1.bf16.msra.mxu0 0
        %2142 = vmatprep.subr.bf16.mxu0 0
        %2143 = vmatpush1.bf16.msra.mxu0 0
        %2144 = vmatprep.mubr.bf16.mxu0 0
        %2145 = vmatmul.mubr.bf16.gmra.mrb[0].mxu0 %v2046
        %v2146 = vpop.f32.mrb[0].mxu0
        %v2147 = vadd.f32 0.0, %v2146
        %v2148 = vpop.f32.mrb[0].mxu0
        %v2149 = vpop.f32.mrb[0].mxu0
        %v2150 = vadd.f32 0.0, %v2149
        %v2151 = vpop.f32.mrb[0].mxu0
        %2152 = vdwg.mxu0
        %v2153 = vadd.f32 %v1999, %v2147
        %v2154 = vadd.f32 %v2000, %v2150
        %v2155 = vld [vmem:[%s8] sm:$0x1]
        %v2157 = vlaneseq
        %v2158 = vshrl.u32 %v2157, 7
        %v2159 = vsub.s32 0, %v2158
        %v2160 = vrot.slane %v2155, %v2159
        %v2162 = vadd.f32 %v2153, %v2160
        %v2163 = vadd.f32 %v2154, %v2160
        %v2164 = vmax.f32 %v2162, 0.0
        %v2165 = vmax.f32 %v2163, 0.0
        %v2166 = vadd.f32 %v2164, %v1441
        %v2167 = vadd.f32 %v2165, %v1442
        %2168 = vadd.xlane.f32.xlu0 %v2166
        %v2169 = vpop.xlane.xlu0 %2168
        %2170 = vadd.xlane.f32.xlu0 %v2167
        %v2171 = vpop.xlane.xlu0 %2170
        %v2172 = vmul.f32 %v2169, 0.03125
        %v2173 = vmul.f32 %v2171, 0.03125
        %v2174 = vsub.f32 %v2166, %v2172
        %v2175 = vsub.f32 %v2167, %v2173
        %v2176 = vmul.f32 %v2174, %v1407
        %v2177 = vmul.f32 %v2175, %v1407
        %v2178 = vmul.f32 %v2176, %v2176
        %v2179 = vmul.f32 %v2177, %v2177
        %2180 = vadd.xlane.f32.xlu0 %v2178
        %v2181 = vpop.xlane.xlu0 %2180
        %2182 = vadd.xlane.f32.xlu0 %v2179
        %v2183 = vpop.xlane.xlu0 %2182
        %v2184 = vmul.f32 %v2181, 0.03125
        %v2185 = vmul.f32 %v2183, 0.03125
        %v2186 = vadd.f32 %v2184, 1e-05
        %v2187 = vadd.f32 %v2185, 1e-05
        %v2188 = vrsqrt.pop %v2186
        %v2189 = vrsqrt.pop %v2187
        %v2190 = vmul.f32 %v2176, %v2188
        %v2191 = vmul.f32 %v2177, %v2189
        %v2192 = vld [vmem:[%s9] sm:$0x1]
        %v2194 = vlaneseq
        %v2195 = vshrl.u32 %v2194, 7
        %v2196 = vsub.s32 0, %v2195
        %v2197 = vrot.slane %v2192, %v2196
        %v2199 = vmul.f32 %v2190, %v2197
        %v2200 = vmul.f32 %v2191, %v2197
        %v2201 = vld [vmem:[%s10] sm:$0x1]
        %v2203 = vlaneseq
        %v2204 = vshrl.u32 %v2203, 7
        %v2205 = vsub.s32 0, %v2204
        %v2206 = vrot.slane %v2201, %v2205
        %v2208 = vadd.f32 %v2199, %v2206
        %v2209 = vadd.f32 %v2200, %v2206
        %v2210 = vpack.c.bf16 %v2209, %v2208
        %v2211 = vld [vmem:[#allocation6] sm:$0xf]
        %v2212 = vld [vmem:[#allocation6 + $0x4] sm:$0xf]
        %v2213 = vld [vmem:[#allocation6 + $0x8] sm:$0xf]
        %v2214 = vld [vmem:[#allocation6 + $0xc] sm:$0xf]
        %v2215 = vld [vmem:[#allocation6 + $0x10] sm:$0xf]
        %v2216 = vld [vmem:[#allocation6 + $0x14] sm:$0xf]
        %v2217 = vld [vmem:[#allocation6 + $0x18] sm:$0xf]
        %v2218 = vld [vmem:[#allocation6 + $0x1c] sm:$0xf]
        %v2219 = vld [vmem:[#allocation6 + $0x20] sm:$0xf]
        %v2220 = vld [vmem:[#allocation6 + $0x24] sm:$0xf]
        %v2221 = vld [vmem:[#allocation6 + $0x28] sm:$0xf]
        %v2222 = vld [vmem:[#allocation6 + $0x2c] sm:$0xf]
        %v2223 = vld [vmem:[#allocation6 + $0x30] sm:$0xf]
        %v2224 = vld [vmem:[#allocation6 + $0x34] sm:$0xf]
        %v2225 = vld [vmem:[#allocation6 + $0x38] sm:$0xf]
        %v2226 = vld [vmem:[#allocation6 + $0x3c] sm:$0xf]
        %2227 = vmatprep.subr.bf16.mxu0 0
        %2228 = vmatpush1.bf16.msra.mxu0 %v2210
        %2229 = vmatprep.subr.bf16.mxu0 0
        %2230 = vmatpush1.bf16.msra.mxu0 0
        %2231 = vmatprep.subr.bf16.mxu0 0
        %2232 = vmatpush1.bf16.msra.mxu0 0
        %2233 = vmatprep.subr.bf16.mxu0 0
        %2234 = vmatpush1.bf16.msra.mxu0 0
        %2235 = vmatprep.subr.bf16.mxu0 0
        %2236 = vmatpush1.bf16.msra.mxu0 0
        %2237 = vmatprep.subr.bf16.mxu0 0
        %2238 = vmatpush1.bf16.msra.mxu0 0
        %2239 = vmatprep.subr.bf16.mxu0 0
        %2240 = vmatpush1.bf16.msra.mxu0 0
        %2241 = vmatprep.subr.bf16.mxu0 0
        %2242 = vmatpush1.bf16.msra.mxu0 0
        %2243 = vmatprep.subr.bf16.mxu0 0
        %2244 = vmatpush1.bf16.msra.mxu0 0
        %2245 = vmatprep.subr.bf16.mxu0 0
        %2246 = vmatpush1.bf16.msra.mxu0 0
        %2247 = vmatprep.subr.bf16.mxu0 0
        %2248 = vmatpush1.bf16.msra.mxu0 0
        %2249 = vmatprep.subr.bf16.mxu0 0
        %2250 = vmatpush1.bf16.msra.mxu0 0
        %2251 = vmatprep.subr.bf16.mxu0 0
        %2252 = vmatpush1.bf16.msra.mxu0 0
        %2253 = vmatprep.subr.bf16.mxu0 0
        %2254 = vmatpush1.bf16.msra.mxu0 0
        %2255 = vmatprep.subr.bf16.mxu0 0
        %2256 = vmatpush1.bf16.msra.mxu0 0
        %2257 = vmatprep.subr.bf16.mxu0 0
        %2258 = vmatpush1.bf16.msra.mxu0 0
        %2259 = vmatprep.mubr.bf16.mxu0 0
        %2260 = vmatmul.mubr.bf16.gmra.mrb[0].mxu0 %v679
        %v2261 = vpop.f32.mrb[0].mxu0
        %v2262 = vadd.f32 0.0, %v2261
        %v2263 = vpop.f32.mrb[0].mxu0
        %v2264 = vpop.f32.mrb[0].mxu0
        %v2265 = vadd.f32 0.0, %v2264
        %v2266 = vpop.f32.mrb[0].mxu0
        %2267 = vdwg.mxu0
        %v2268 = vpack.c.bf16 %v2265, %v2262
        %s2269 = scalar_lea.vmem [#allocation6], 64
        %v2270 = vld [vmem:[%s2269] sm:$0xf]
        %v2271 = vld [vmem:[%s2269 + $0x4] sm:$0xf]
        %v2272 = vld [vmem:[%s2269 + $0x8] sm:$0xf]
        %v2273 = vld [vmem:[%s2269 + $0xc] sm:$0xf]
        %v2274 = vld [vmem:[%s2269 + $0x10] sm:$0xf]
        %v2275 = vld [vmem:[%s2269 + $0x14] sm:$0xf]
        %v2276 = vld [vmem:[%s2269 + $0x18] sm:$0xf]
        %v2277 = vld [vmem:[%s2269 + $0x1c] sm:$0xf]
        %v2278 = vld [vmem:[%s2269 + $0x20] sm:$0xf]
        %v2279 = vld [vmem:[%s2269 + $0x24] sm:$0xf]
        %v2280 = vld [vmem:[%s2269 + $0x28] sm:$0xf]
        %v2281 = vld [vmem:[%s2269 + $0x2c] sm:$0xf]
        %v2282 = vld [vmem:[%s2269 + $0x30] sm:$0xf]
        %v2283 = vld [vmem:[%s2269 + $0x34] sm:$0xf]
        %v2284 = vld [vmem:[%s2269 + $0x38] sm:$0xf]
        %v2285 = vld [vmem:[%s2269 + $0x3c] sm:$0xf]
        %v2302 = vunpack.c.l.b16 %v2270
        %v2303 = vunpack.c.l.b16 %v2271
        %v2304 = vunpack.c.l.b16 %v2272
        %v2305 = vunpack.c.l.b16 %v2273
        %v2306 = vunpack.c.l.b16 %v2274
        %v2307 = vunpack.c.l.b16 %v2275
        %v2308 = vunpack.c.l.b16 %v2276
        %v2309 = vunpack.c.l.b16 %v2277
        %v2310 = vunpack.c.l.b16 %v2278
        %v2311 = vunpack.c.l.b16 %v2279
        %v2312 = vunpack.c.l.b16 %v2280
        %v2313 = vunpack.c.l.b16 %v2281
        %v2314 = vunpack.c.l.b16 %v2282
        %v2315 = vunpack.c.l.b16 %v2283
        %v2316 = vunpack.c.l.b16 %v2284
        %v2317 = vunpack.c.l.b16 %v2285
        %v2318 = vpack.c.b16 %v2303, %v2302
        %v2319 = vpack.c.b16 %v2305, %v2304
        %v2320 = vpack.c.b16 %v2307, %v2306
        %v2321 = vpack.c.b16 %v2309, %v2308
        %v2322 = vpack.c.b16 %v2311, %v2310
        %v2323 = vpack.c.b16 %v2313, %v2312
        %v2324 = vpack.c.b16 %v2315, %v2314
        %v2325 = vpack.c.b16 %v2317, %v2316
        %2334 = vmatprep.subr.bf16.mxu0 0
        %2335 = vmatpush1.bf16.msra.mxu0 %v2318
        %2336 = vmatprep.subr.bf16.mxu0 0
        %2337 = vmatpush1.bf16.msra.mxu0 %v2319
        %2338 = vmatprep.subr.bf16.mxu0 0
        %2339 = vmatpush1.bf16.msra.mxu0 %v2320
        %2340 = vmatprep.subr.bf16.mxu0 0
        %2341 = vmatpush1.bf16.msra.mxu0 %v2321
        %2342 = vmatprep.subr.bf16.mxu0 0
        %2343 = vmatpush1.bf16.msra.mxu0 %v2322
        %2344 = vmatprep.subr.bf16.mxu0 0
        %2345 = vmatpush1.bf16.msra.mxu0 %v2323
        %2346 = vmatprep.subr.bf16.mxu0 0
        %2347 = vmatpush1.bf16.msra.mxu0 %v2324
        %2348 = vmatprep.subr.bf16.mxu0 0
        %2349 = vmatpush1.bf16.msra.mxu0 %v2325
        %2350 = vmatprep.subr.bf16.mxu0 0
        %2351 = vmatpush1.bf16.msra.mxu0 0
        %2352 = vmatprep.subr.bf16.mxu0 0
        %2353 = vmatpush1.bf16.msra.mxu0 0
        %2354 = vmatprep.subr.bf16.mxu0 0
        %2355 = vmatpush1.bf16.msra.mxu0 0
        %2356 = vmatprep.subr.bf16.mxu0 0
        %2357 = vmatpush1.bf16.msra.mxu0 0
        %2358 = vmatprep.subr.bf16.mxu0 0
        %2359 = vmatpush1.bf16.msra.mxu0 0
        %2360 = vmatprep.subr.bf16.mxu0 0
        %2361 = vmatpush1.bf16.msra.mxu0 0
        %2362 = vmatprep.subr.bf16.mxu0 0
        %2363 = vmatpush1.bf16.msra.mxu0 0
        %2364 = vmatprep.subr.bf16.mxu0 0
        %2365 = vmatpush1.bf16.msra.mxu0 0
        %2366 = vmatprep.mubr.bf16.mxu0 0
        %2367 = vmatmul.mubr.bf16.gmra.mrb[0].mxu0 %v2268
        %v2368 = vpop.f32.mrb[0].mxu0
        %v2369 = vadd.f32 0.0, %v2368
        %v2370 = vpop.f32.mrb[0].mxu0
        %v2371 = vpop.f32.mrb[0].mxu0
        %v2372 = vadd.f32 0.0, %v2371
        %v2373 = vpop.f32.mrb[0].mxu0
        %2374 = vdwg.mxu0
        %v2391 = vunpack.c.l.b16 %v2211
        %v2392 = vunpack.c.l.b16 %v2212
        %v2393 = vunpack.c.l.b16 %v2213
        %v2394 = vunpack.c.l.b16 %v2214
        %v2395 = vunpack.c.l.b16 %v2215
        %v2396 = vunpack.c.l.b16 %v2216
        %v2397 = vunpack.c.l.b16 %v2217
        %v2398 = vunpack.c.l.b16 %v2218
        %v2399 = vunpack.c.l.b16 %v2219
        %v2400 = vunpack.c.l.b16 %v2220
        %v2401 = vunpack.c.l.b16 %v2221
        %v2402 = vunpack.c.l.b16 %v2222
        %v2403 = vunpack.c.l.b16 %v2223
        %v2404 = vunpack.c.l.b16 %v2224
        %v2405 = vunpack.c.l.b16 %v2225
        %v2406 = vunpack.c.l.b16 %v2226
        %v2407 = vpack.c.b16 %v2392, %v2391
        %v2408 = vpack.c.b16 %v2394, %v2393
        %v2409 = vpack.c.b16 %v2396, %v2395
        %v2410 = vpack.c.b16 %v2398, %v2397
        %v2411 = vpack.c.b16 %v2400, %v2399
        %v2412 = vpack.c.b16 %v2402, %v2401
        %v2413 = vpack.c.b16 %v2404, %v2403
        %v2414 = vpack.c.b16 %v2406, %v2405
        %2423 = vmatprep.subr.bf16.mxu0 0
        %2424 = vmatpush1.bf16.msra.mxu0 %v2407
        %2425 = vmatprep.subr.bf16.mxu0 0
        %2426 = vmatpush1.bf16.msra.mxu0 %v2408
        %2427 = vmatprep.subr.bf16.mxu0 0
        %2428 = vmatpush1.bf16.msra.mxu0 %v2409
        %2429 = vmatprep.subr.bf16.mxu0 0
        %2430 = vmatpush1.bf16.msra.mxu0 %v2410
        %2431 = vmatprep.subr.bf16.mxu0 0
        %2432 = vmatpush1.bf16.msra.mxu0 %v2411
        %2433 = vmatprep.subr.bf16.mxu0 0
        %2434 = vmatpush1.bf16.msra.mxu0 %v2412
        %2435 = vmatprep.subr.bf16.mxu0 0
        %2436 = vmatpush1.bf16.msra.mxu0 %v2413
        %2437 = vmatprep.subr.bf16.mxu0 0
        %2438 = vmatpush1.bf16.msra.mxu0 %v2414
        %2439 = vmatprep.subr.bf16.mxu0 0
        %2440 = vmatpush1.bf16.msra.mxu0 0
        %2441 = vmatprep.subr.bf16.mxu0 0
        %2442 = vmatpush1.bf16.msra.mxu0 0
        %2443 = vmatprep.subr.bf16.mxu0 0
        %2444 = vmatpush1.bf16.msra.mxu0 0
        %2445 = vmatprep.subr.bf16.mxu0 0
        %2446 = vmatpush1.bf16.msra.mxu0 0
        %2447 = vmatprep.subr.bf16.mxu0 0
        %2448 = vmatpush1.bf16.msra.mxu0 0
        %2449 = vmatprep.subr.bf16.mxu0 0
        %2450 = vmatpush1.bf16.msra.mxu0 0
        %2451 = vmatprep.subr.bf16.mxu0 0
        %2452 = vmatpush1.bf16.msra.mxu0 0
        %2453 = vmatprep.subr.bf16.mxu0 0
        %2454 = vmatpush1.bf16.msra.mxu0 0
        %2455 = vmatprep.mubr.bf16.mxu0 0
        %2456 = vmatmul.mubr.bf16.gmra.mrb[0].mxu0 %v2210
        %v2457 = vpop.f32.mrb[0].mxu0
        %v2458 = vadd.f32 %v2369, %v2457
        %v2459 = vpop.f32.mrb[0].mxu0
        %v2460 = vpop.f32.mrb[0].mxu0
        %v2461 = vadd.f32 %v2372, %v2460
        %v2462 = vpop.f32.mrb[0].mxu0
        %2463 = vdwg.mxu0
        %2464 = vmatprep.subr.bf16.mxu0 0
        %2465 = vmatpush1.bf16.msra.mxu0 %v2268
        %2466 = vmatprep.subr.bf16.mxu0 0
        %2467 = vmatpush1.bf16.msra.mxu0 0
        %2468 = vmatprep.subr.bf16.mxu0 0
        %2469 = vmatpush1.bf16.msra.mxu0 0
        %2470 = vmatprep.subr.bf16.mxu0 0
        %2471 = vmatpush1.bf16.msra.mxu0 0
        %2472 = vmatprep.subr.bf16.mxu0 0
        %2473 = vmatpush1.bf16.msra.mxu0 0
        %2474 = vmatprep.subr.bf16.mxu0 0
        %2475 = vmatpush1.bf16.msra.mxu0 0
        %2476 = vmatprep.subr.bf16.mxu0 0
        %2477 = vmatpush1.bf16.msra.mxu0 0
        %2478 = vmatprep.subr.bf16.mxu0 0
        %2479 = vmatpush1.bf16.msra.mxu0 0
        %2480 = vmatprep.subr.bf16.mxu0 0
        %2481 = vmatpush1.bf16.msra.mxu0 0
        %2482 = vmatprep.subr.bf16.mxu0 0
        %2483 = vmatpush1.bf16.msra.mxu0 0
        %2484 = vmatprep.subr.bf16.mxu0 0
        %2485 = vmatpush1.bf16.msra.mxu0 0
        %2486 = vmatprep.subr.bf16.mxu0 0
        %2487 = vmatpush1.bf16.msra.mxu0 0
        %2488 = vmatprep.subr.bf16.mxu0 0
        %2489 = vmatpush1.bf16.msra.mxu0 0
        %2490 = vmatprep.subr.bf16.mxu0 0
        %2491 = vmatpush1.bf16.msra.mxu0 0
        %2492 = vmatprep.subr.bf16.mxu0 0
        %2493 = vmatpush1.bf16.msra.mxu0 0
        %2494 = vmatprep.subr.bf16.mxu0 0
        %2495 = vmatpush1.bf16.msra.mxu0 0
        %2496 = vmatprep.mubr.bf16.mxu0 0
        %2497 = vmatmul.mubr.bf16.gmra.mrb[0].mxu0 %v679
        %v2498 = vpop.f32.mrb[0].mxu0
        %v2499 = vadd.f32 0.0, %v2498
        %v2500 = vpop.f32.mrb[0].mxu0
        %v2501 = vpop.f32.mrb[0].mxu0
        %v2502 = vadd.f32 0.0, %v2501
        %v2503 = vpop.f32.mrb[0].mxu0
        %2504 = vdwg.mxu0
        %v2505 = vmul.f32 %v2499, 2.0
        %v2506 = vmul.f32 %v2502, 2.0
        %v2507 = vsub.f32 %v2505, %v2208
        %v2508 = vsub.f32 %v2506, %v2209
        %v2509 = vpack.c.bf16 %v2508, %v2507
        %s2510 = scalar_lea.vmem [#allocation6], 128
        %v2511 = vld [vmem:[%s2510] sm:$0xf]
        %v2512 = vld [vmem:[%s2510 + $0x4] sm:$0xf]
        %v2513 = vld [vmem:[%s2510 + $0x8] sm:$0xf]
        %v2514 = vld [vmem:[%s2510 + $0xc] sm:$0xf]
        %v2515 = vld [vmem:[%s2510 + $0x10] sm:$0xf]
        %v2516 = vld [vmem:[%s2510 + $0x14] sm:$0xf]
        %v2517 = vld [vmem:[%s2510 + $0x18] sm:$0xf]
        %v2518 = vld [vmem:[%s2510 + $0x1c] sm:$0xf]
        %v2519 = vld [vmem:[%s2510 + $0x20] sm:$0xf]
        %v2520 = vld [vmem:[%s2510 + $0x24] sm:$0xf]
        %v2521 = vld [vmem:[%s2510 + $0x28] sm:$0xf]
        %v2522 = vld [vmem:[%s2510 + $0x2c] sm:$0xf]
        %v2523 = vld [vmem:[%s2510 + $0x30] sm:$0xf]
        %v2524 = vld [vmem:[%s2510 + $0x34] sm:$0xf]
        %v2525 = vld [vmem:[%s2510 + $0x38] sm:$0xf]
        %v2526 = vld [vmem:[%s2510 + $0x3c] sm:$0xf]
        %v2543 = vunpack.c.l.b16 %v2511
        %v2544 = vunpack.c.l.b16 %v2512
        %v2545 = vunpack.c.l.b16 %v2513
        %v2546 = vunpack.c.l.b16 %v2514
        %v2547 = vunpack.c.l.b16 %v2515
        %v2548 = vunpack.c.l.b16 %v2516
        %v2549 = vunpack.c.l.b16 %v2517
        %v2550 = vunpack.c.l.b16 %v2518
        %v2551 = vunpack.c.l.b16 %v2519
        %v2552 = vunpack.c.l.b16 %v2520
        %v2553 = vunpack.c.l.b16 %v2521
        %v2554 = vunpack.c.l.b16 %v2522
        %v2555 = vunpack.c.l.b16 %v2523
        %v2556 = vunpack.c.l.b16 %v2524
        %v2557 = vunpack.c.l.b16 %v2525
        %v2558 = vunpack.c.l.b16 %v2526
        %v2559 = vpack.c.b16 %v2544, %v2543
        %v2560 = vpack.c.b16 %v2546, %v2545
        %v2561 = vpack.c.b16 %v2548, %v2547
        %v2562 = vpack.c.b16 %v2550, %v2549
        %v2563 = vpack.c.b16 %v2552, %v2551
        %v2564 = vpack.c.b16 %v2554, %v2553
        %v2565 = vpack.c.b16 %v2556, %v2555
        %v2566 = vpack.c.b16 %v2558, %v2557
        %2575 = vmatprep.subr.bf16.mxu0 0
        %2576 = vmatpush1.bf16.msra.mxu0 %v2559
        %2577 = vmatprep.subr.bf16.mxu0 0
        %2578 = vmatpush1.bf16.msra.mxu0 %v2560
        %2579 = vmatprep.subr.bf16.mxu0 0
        %2580 = vmatpush1.bf16.msra.mxu0 %v2561
        %2581 = vmatprep.subr.bf16.mxu0 0
        %2582 = vmatpush1.bf16.msra.mxu0 %v2562
        %2583 = vmatprep.subr.bf16.mxu0 0
        %2584 = vmatpush1.bf16.msra.mxu0 %v2563
        %2585 = vmatprep.subr.bf16.mxu0 0
        %2586 = vmatpush1.bf16.msra.mxu0 %v2564
        %2587 = vmatprep.subr.bf16.mxu0 0
        %2588 = vmatpush1.bf16.msra.mxu0 %v2565
        %2589 = vmatprep.subr.bf16.mxu0 0
        %2590 = vmatpush1.bf16.msra.mxu0 %v2566
        %2591 = vmatprep.subr.bf16.mxu0 0
        %2592 = vmatpush1.bf16.msra.mxu0 0
        %2593 = vmatprep.subr.bf16.mxu0 0
        %2594 = vmatpush1.bf16.msra.mxu0 0
        %2595 = vmatprep.subr.bf16.mxu0 0
        %2596 = vmatpush1.bf16.msra.mxu0 0
        %2597 = vmatprep.subr.bf16.mxu0 0
        %2598 = vmatpush1.bf16.msra.mxu0 0
        %2599 = vmatprep.subr.bf16.mxu0 0
        %2600 = vmatpush1.bf16.msra.mxu0 0
        %2601 = vmatprep.subr.bf16.mxu0 0
        %2602 = vmatpush1.bf16.msra.mxu0 0
        %2603 = vmatprep.subr.bf16.mxu0 0
        %2604 = vmatpush1.bf16.msra.mxu0 0
        %2605 = vmatprep.subr.bf16.mxu0 0
        %2606 = vmatpush1.bf16.msra.mxu0 0
        %2607 = vmatprep.mubr.bf16.mxu0 0
        %2608 = vmatmul.mubr.bf16.gmra.mrb[0].mxu0 %v2509
        %v2609 = vpop.f32.mrb[0].mxu0
        %v2610 = vadd.f32 0.0, %v2609
        %v2611 = vpop.f32.mrb[0].mxu0
        %v2612 = vpop.f32.mrb[0].mxu0
        %v2613 = vadd.f32 0.0, %v2612
        %v2614 = vpop.f32.mrb[0].mxu0
        %2615 = vdwg.mxu0
        %v2616 = vadd.f32 %v2458, %v2610
        %v2617 = vadd.f32 %v2461, %v2613
        %2618 = vmatprep.subr.bf16.mxu0 0
        %2619 = vmatpush1.bf16.msra.mxu0 %v2268
        %2620 = vmatprep.subr.bf16.mxu0 0
        %2621 = vmatpush1.bf16.msra.mxu0 0
        %2622 = vmatprep.subr.bf16.mxu0 0
        %2623 = vmatpush1.bf16.msra.mxu0 0
        %2624 = vmatprep.subr.bf16.mxu0 0
        %2625 = vmatpush1.bf16.msra.mxu0 0
        %2626 = vmatprep.subr.bf16.mxu0 0
        %2627 = vmatpush1.bf16.msra.mxu0 0
        %2628 = vmatprep.subr.bf16.mxu0 0
        %2629 = vmatpush1.bf16.msra.mxu0 0
        %2630 = vmatprep.subr.bf16.mxu0 0
        %2631 = vmatpush1.bf16.msra.mxu0 0
        %2632 = vmatprep.subr.bf16.mxu0 0
        %2633 = vmatpush1.bf16.msra.mxu0 0
        %2634 = vmatprep.subr.bf16.mxu0 0
        %2635 = vmatpush1.bf16.msra.mxu0 0
        %2636 = vmatprep.subr.bf16.mxu0 0
        %2637 = vmatpush1.bf16.msra.mxu0 0
        %2638 = vmatprep.subr.bf16.mxu0 0
        %2639 = vmatpush1.bf16.msra.mxu0 0
        %2640 = vmatprep.subr.bf16.mxu0 0
        %2641 = vmatpush1.bf16.msra.mxu0 0
        %2642 = vmatprep.subr.bf16.mxu0 0
        %2643 = vmatpush1.bf16.msra.mxu0 0
        %2644 = vmatprep.subr.bf16.mxu0 0
        %2645 = vmatpush1.bf16.msra.mxu0 0
        %2646 = vmatprep.subr.bf16.mxu0 0
        %2647 = vmatpush1.bf16.msra.mxu0 0
        %2648 = vmatprep.subr.bf16.mxu0 0
        %2649 = vmatpush1.bf16.msra.mxu0 0
        %2650 = vmatprep.mubr.bf16.mxu0 0
        %2651 = vmatmul.mubr.bf16.gmra.mrb[0].mxu0 %v1078
        %v2652 = vpop.f32.mrb[0].mxu0
        %v2653 = vadd.f32 0.0, %v2652
        %v2654 = vpop.f32.mrb[0].mxu0
        %v2655 = vpop.f32.mrb[0].mxu0
        %v2656 = vadd.f32 0.0, %v2655
        %v2657 = vpop.f32.mrb[0].mxu0
        %2658 = vdwg.mxu0
        %v2659 = vpack.c.bf16 %v2656, %v2653
        %s2660 = scalar_lea.vmem [#allocation6], 192
        %v2661 = vld [vmem:[%s2660] sm:$0xf]
        %v2662 = vld [vmem:[%s2660 + $0x4] sm:$0xf]
        %v2663 = vld [vmem:[%s2660 + $0x8] sm:$0xf]
        %v2664 = vld [vmem:[%s2660 + $0xc] sm:$0xf]
        %v2665 = vld [vmem:[%s2660 + $0x10] sm:$0xf]
        %v2666 = vld [vmem:[%s2660 + $0x14] sm:$0xf]
        %v2667 = vld [vmem:[%s2660 + $0x18] sm:$0xf]
        %v2668 = vld [vmem:[%s2660 + $0x1c] sm:$0xf]
        %v2669 = vld [vmem:[%s2660 + $0x20] sm:$0xf]
        %v2670 = vld [vmem:[%s2660 + $0x24] sm:$0xf]
        %v2671 = vld [vmem:[%s2660 + $0x28] sm:$0xf]
        %v2672 = vld [vmem:[%s2660 + $0x2c] sm:$0xf]
        %v2673 = vld [vmem:[%s2660 + $0x30] sm:$0xf]
        %v2674 = vld [vmem:[%s2660 + $0x34] sm:$0xf]
        %v2675 = vld [vmem:[%s2660 + $0x38] sm:$0xf]
        %v2676 = vld [vmem:[%s2660 + $0x3c] sm:$0xf]
        %v2693 = vunpack.c.l.b16 %v2661
        %v2694 = vunpack.c.l.b16 %v2662
        %v2695 = vunpack.c.l.b16 %v2663
        %v2696 = vunpack.c.l.b16 %v2664
        %v2697 = vunpack.c.l.b16 %v2665
        %v2698 = vunpack.c.l.b16 %v2666
        %v2699 = vunpack.c.l.b16 %v2667
        %v2700 = vunpack.c.l.b16 %v2668
        %v2701 = vunpack.c.l.b16 %v2669
        %v2702 = vunpack.c.l.b16 %v2670
        %v2703 = vunpack.c.l.b16 %v2671
        %v2704 = vunpack.c.l.b16 %v2672
        %v2705 = vunpack.c.l.b16 %v2673
        %v2706 = vunpack.c.l.b16 %v2674
        %v2707 = vunpack.c.l.b16 %v2675
        %v2708 = vunpack.c.l.b16 %v2676
        %v2709 = vpack.c.b16 %v2694, %v2693
        %v2710 = vpack.c.b16 %v2696, %v2695
        %v2711 = vpack.c.b16 %v2698, %v2697
        %v2712 = vpack.c.b16 %v2700, %v2699
        %v2713 = vpack.c.b16 %v2702, %v2701
        %v2714 = vpack.c.b16 %v2704, %v2703
        %v2715 = vpack.c.b16 %v2706, %v2705
        %v2716 = vpack.c.b16 %v2708, %v2707
        %2725 = vmatprep.subr.bf16.mxu0 0
        %2726 = vmatpush1.bf16.msra.mxu0 %v2709
        %2727 = vmatprep.subr.bf16.mxu0 0
        %2728 = vmatpush1.bf16.msra.mxu0 %v2710
        %2729 = vmatprep.subr.bf16.mxu0 0
        %2730 = vmatpush1.bf16.msra.mxu0 %v2711
        %2731 = vmatprep.subr.bf16.mxu0 0
        %2732 = vmatpush1.bf16.msra.mxu0 %v2712
        %2733 = vmatprep.subr.bf16.mxu0 0
        %2734 = vmatpush1.bf16.msra.mxu0 %v2713
        %2735 = vmatprep.subr.bf16.mxu0 0
        %2736 = vmatpush1.bf16.msra.mxu0 %v2714
        %2737 = vmatprep.subr.bf16.mxu0 0
        %2738 = vmatpush1.bf16.msra.mxu0 %v2715
        %2739 = vmatprep.subr.bf16.mxu0 0
        %2740 = vmatpush1.bf16.msra.mxu0 %v2716
        %2741 = vmatprep.subr.bf16.mxu0 0
        %2742 = vmatpush1.bf16.msra.mxu0 0
        %2743 = vmatprep.subr.bf16.mxu0 0
        %2744 = vmatpush1.bf16.msra.mxu0 0
        %2745 = vmatprep.subr.bf16.mxu0 0
        %2746 = vmatpush1.bf16.msra.mxu0 0
        %2747 = vmatprep.subr.bf16.mxu0 0
        %2748 = vmatpush1.bf16.msra.mxu0 0
        %2749 = vmatprep.subr.bf16.mxu0 0
        %2750 = vmatpush1.bf16.msra.mxu0 0
        %2751 = vmatprep.subr.bf16.mxu0 0
        %2752 = vmatpush1.bf16.msra.mxu0 0
        %2753 = vmatprep.subr.bf16.mxu0 0
        %2754 = vmatpush1.bf16.msra.mxu0 0
        %2755 = vmatprep.subr.bf16.mxu0 0
        %2756 = vmatpush1.bf16.msra.mxu0 0
        %2757 = vmatprep.mubr.bf16.mxu0 0
        %2758 = vmatmul.mubr.bf16.gmra.mrb[0].mxu0 %v2659
        %v2759 = vpop.f32.mrb[0].mxu0
        %v2760 = vadd.f32 0.0, %v2759
        %v2761 = vpop.f32.mrb[0].mxu0
        %v2762 = vpop.f32.mrb[0].mxu0
        %v2763 = vadd.f32 0.0, %v2762
        %v2764 = vpop.f32.mrb[0].mxu0
        %2765 = vdwg.mxu0
        %v2766 = vadd.f32 %v2616, %v2760
        %v2767 = vadd.f32 %v2617, %v2763
        %2768 = vmatprep.subr.bf16.mxu0 0
        %2769 = vmatpush1.bf16.msra.mxu0 %v2659
        %2770 = vmatprep.subr.bf16.mxu0 0
        %2771 = vmatpush1.bf16.msra.mxu0 0
        %2772 = vmatprep.subr.bf16.mxu0 0
        %2773 = vmatpush1.bf16.msra.mxu0 0
        %2774 = vmatprep.subr.bf16.mxu0 0
        %2775 = vmatpush1.bf16.msra.mxu0 0
        %2776 = vmatprep.subr.bf16.mxu0 0
        %2777 = vmatpush1.bf16.msra.mxu0 0
        %2778 = vmatprep.subr.bf16.mxu0 0
        %2779 = vmatpush1.bf16.msra.mxu0 0
        %2780 = vmatprep.subr.bf16.mxu0 0
        %2781 = vmatpush1.bf16.msra.mxu0 0
        %2782 = vmatprep.subr.bf16.mxu0 0
        %2783 = vmatpush1.bf16.msra.mxu0 0
        %2784 = vmatprep.subr.bf16.mxu0 0
        %2785 = vmatpush1.bf16.msra.mxu0 0
        %2786 = vmatprep.subr.bf16.mxu0 0
        %2787 = vmatpush1.bf16.msra.mxu0 0
        %2788 = vmatprep.subr.bf16.mxu0 0
        %2789 = vmatpush1.bf16.msra.mxu0 0
        %2790 = vmatprep.subr.bf16.mxu0 0
        %2791 = vmatpush1.bf16.msra.mxu0 0
        %2792 = vmatprep.subr.bf16.mxu0 0
        %2793 = vmatpush1.bf16.msra.mxu0 0
        %2794 = vmatprep.subr.bf16.mxu0 0
        %2795 = vmatpush1.bf16.msra.mxu0 0
        %2796 = vmatprep.subr.bf16.mxu0 0
        %2797 = vmatpush1.bf16.msra.mxu0 0
        %2798 = vmatprep.subr.bf16.mxu0 0
        %2799 = vmatpush1.bf16.msra.mxu0 0
        %2800 = vmatprep.mubr.bf16.mxu0 0
        %2801 = vmatmul.mubr.bf16.gmra.mrb[0].mxu0 %v1078
        %v2802 = vpop.f32.mrb[0].mxu0
        %v2803 = vadd.f32 0.0, %v2802
        %v2804 = vpop.f32.mrb[0].mxu0
        %v2805 = vpop.f32.mrb[0].mxu0
        %v2806 = vadd.f32 0.0, %v2805
        %v2807 = vpop.f32.mrb[0].mxu0
        %2808 = vdwg.mxu0
        %v2809 = vmul.f32 %v2803, 2.0
        %v2810 = vmul.f32 %v2806, 2.0
        %v2811 = vsub.f32 %v2809, %v2262
        %v2812 = vsub.f32 %v2810, %v2265
        %v2813 = vpack.c.bf16 %v2812, %v2811
        %s2814 = scalar_lea.vmem [#allocation6], 256
        %v2815 = vld [vmem:[%s2814] sm:$0xf]
        %v2816 = vld [vmem:[%s2814 + $0x4] sm:$0xf]
        %v2817 = vld [vmem:[%s2814 + $0x8] sm:$0xf]
        %v2818 = vld [vmem:[%s2814 + $0xc] sm:$0xf]
        %v2819 = vld [vmem:[%s2814 + $0x10] sm:$0xf]
        %v2820 = vld [vmem:[%s2814 + $0x14] sm:$0xf]
        %v2821 = vld [vmem:[%s2814 + $0x18] sm:$0xf]
        %v2822 = vld [vmem:[%s2814 + $0x1c] sm:$0xf]
        %v2823 = vld [vmem:[%s2814 + $0x20] sm:$0xf]
        %v2824 = vld [vmem:[%s2814 + $0x24] sm:$0xf]
        %v2825 = vld [vmem:[%s2814 + $0x28] sm:$0xf]
        %v2826 = vld [vmem:[%s2814 + $0x2c] sm:$0xf]
        %v2827 = vld [vmem:[%s2814 + $0x30] sm:$0xf]
        %v2828 = vld [vmem:[%s2814 + $0x34] sm:$0xf]
        %v2829 = vld [vmem:[%s2814 + $0x38] sm:$0xf]
        %v2830 = vld [vmem:[%s2814 + $0x3c] sm:$0xf]
        %v2847 = vunpack.c.l.b16 %v2815
        %v2848 = vunpack.c.l.b16 %v2816
        %v2849 = vunpack.c.l.b16 %v2817
        %v2850 = vunpack.c.l.b16 %v2818
        %v2851 = vunpack.c.l.b16 %v2819
        %v2852 = vunpack.c.l.b16 %v2820
        %v2853 = vunpack.c.l.b16 %v2821
        %v2854 = vunpack.c.l.b16 %v2822
        %v2855 = vunpack.c.l.b16 %v2823
        %v2856 = vunpack.c.l.b16 %v2824
        %v2857 = vunpack.c.l.b16 %v2825
        %v2858 = vunpack.c.l.b16 %v2826
        %v2859 = vunpack.c.l.b16 %v2827
        %v2860 = vunpack.c.l.b16 %v2828
        %v2861 = vunpack.c.l.b16 %v2829
        %v2862 = vunpack.c.l.b16 %v2830
        %v2863 = vpack.c.b16 %v2848, %v2847
        %v2864 = vpack.c.b16 %v2850, %v2849
        %v2865 = vpack.c.b16 %v2852, %v2851
        %v2866 = vpack.c.b16 %v2854, %v2853
        %v2867 = vpack.c.b16 %v2856, %v2855
        %v2868 = vpack.c.b16 %v2858, %v2857
        %v2869 = vpack.c.b16 %v2860, %v2859
        %v2870 = vpack.c.b16 %v2862, %v2861
        %2879 = vmatprep.subr.bf16.mxu0 0
        %2880 = vmatpush1.bf16.msra.mxu0 %v2863
        %2881 = vmatprep.subr.bf16.mxu0 0
        %2882 = vmatpush1.bf16.msra.mxu0 %v2864
        %2883 = vmatprep.subr.bf16.mxu0 0
        %2884 = vmatpush1.bf16.msra.mxu0 %v2865
        %2885 = vmatprep.subr.bf16.mxu0 0
        %2886 = vmatpush1.bf16.msra.mxu0 %v2866
        %2887 = vmatprep.subr.bf16.mxu0 0
        %2888 = vmatpush1.bf16.msra.mxu0 %v2867
        %2889 = vmatprep.subr.bf16.mxu0 0
        %2890 = vmatpush1.bf16.msra.mxu0 %v2868
        %2891 = vmatprep.subr.bf16.mxu0 0
        %2892 = vmatpush1.bf16.msra.mxu0 %v2869
        %2893 = vmatprep.subr.bf16.mxu0 0
        %2894 = vmatpush1.bf16.msra.mxu0 %v2870
        %2895 = vmatprep.subr.bf16.mxu0 0
        %2896 = vmatpush1.bf16.msra.mxu0 0
        %2897 = vmatprep.subr.bf16.mxu0 0
        %2898 = vmatpush1.bf16.msra.mxu0 0
        %2899 = vmatprep.subr.bf16.mxu0 0
        %2900 = vmatpush1.bf16.msra.mxu0 0
        %2901 = vmatprep.subr.bf16.mxu0 0
        %2902 = vmatpush1.bf16.msra.mxu0 0
        %2903 = vmatprep.subr.bf16.mxu0 0
        %2904 = vmatpush1.bf16.msra.mxu0 0
        %2905 = vmatprep.subr.bf16.mxu0 0
        %2906 = vmatpush1.bf16.msra.mxu0 0
        %2907 = vmatprep.subr.bf16.mxu0 0
        %2908 = vmatpush1.bf16.msra.mxu0 0
        %2909 = vmatprep.subr.bf16.mxu0 0
        %2910 = vmatpush1.bf16.msra.mxu0 0
        %2911 = vmatprep.mubr.bf16.mxu0 0
        %2912 = vmatmul.mubr.bf16.gmra.mrb[0].mxu0 %v2813
        %v2913 = vpop.f32.mrb[0].mxu0
        %v2914 = vadd.f32 0.0, %v2913
        %v2915 = vpop.f32.mrb[0].mxu0
        %v2916 = vpop.f32.mrb[0].mxu0
        %v2917 = vadd.f32 0.0, %v2916
        %v2918 = vpop.f32.mrb[0].mxu0
        %2919 = vdwg.mxu0
        %v2920 = vadd.f32 %v2766, %v2914
        %v2921 = vadd.f32 %v2767, %v2917
        %v2922 = vld [vmem:[%s12] sm:$0x1]
        %v2924 = vlaneseq
        %v2925 = vshrl.u32 %v2924, 7
        %v2926 = vsub.s32 0, %v2925
        %v2927 = vrot.slane %v2922, %v2926
        %v2929 = vadd.f32 %v2920, %v2927
        %v2930 = vadd.f32 %v2921, %v2927
        %v2931 = vmax.f32 %v2929, 0.0
        %v2932 = vmax.f32 %v2930, 0.0
        %2933 = vadd.xlane.f32.xlu0 %v2931
        %v2934 = vpop.xlane.xlu0 %2933
        %2935 = vadd.xlane.f32.xlu0 %v2932
        %v2936 = vpop.xlane.xlu0 %2935
        %v2937 = vmul.f32 %v2934, 0.03125
        %v2938 = vmul.f32 %v2936, 0.03125
        %v2939 = vsub.f32 %v2931, %v2937
        %v2940 = vsub.f32 %v2932, %v2938
        %v2941 = vmul.f32 %v2939, %v1407
        %v2942 = vmul.f32 %v2940, %v1407
        %v2943 = vmul.f32 %v2941, %v2941
        %v2944 = vmul.f32 %v2942, %v2942
        %2945 = vadd.xlane.f32.xlu0 %v2943
        %v2946 = vpop.xlane.xlu0 %2945
        %2947 = vadd.xlane.f32.xlu0 %v2944
        %v2948 = vpop.xlane.xlu0 %2947
        %v2949 = vmul.f32 %v2946, 0.03125
        %v2950 = vmul.f32 %v2948, 0.03125
        %v2951 = vadd.f32 %v2949, 1e-05
        %v2952 = vadd.f32 %v2950, 1e-05
        %v2953 = vrsqrt.pop %v2951
        %v2954 = vrsqrt.pop %v2952
        %v2955 = vmul.f32 %v2941, %v2953
        %v2956 = vmul.f32 %v2942, %v2954
        %v2957 = vld [vmem:[%s13] sm:$0x1]
        %v2959 = vlaneseq
        %v2960 = vshrl.u32 %v2959, 7
        %v2961 = vsub.s32 0, %v2960
        %v2962 = vrot.slane %v2957, %v2961
        %v2964 = vmul.f32 %v2955, %v2962
        %v2965 = vmul.f32 %v2956, %v2962
        %v2966 = vld [vmem:[%s14] sm:$0x1]
        %v2968 = vlaneseq
        %v2969 = vshrl.u32 %v2968, 7
        %v2970 = vsub.s32 0, %v2969
        %v2971 = vrot.slane %v2966, %v2970
        %v2973 = vadd.f32 %v2964, %v2971
        %v2974 = vadd.f32 %v2965, %v2971
        %v2975 = vpack.c.bf16 %v2974, %v2973
        %v2976 = vld [vmem:[%s15] sm:$0xf]
        %v2977 = vld [vmem:[%s15 + $0x4] sm:$0xf]
        %v2978 = vld [vmem:[%s15 + $0x8] sm:$0xf]
        %v2979 = vld [vmem:[%s15 + $0xc] sm:$0xf]
        %v2980 = vld [vmem:[%s15 + $0x10] sm:$0xf]
        %v2981 = vld [vmem:[%s15 + $0x14] sm:$0xf]
        %v2982 = vld [vmem:[%s15 + $0x18] sm:$0xf]
        %v2983 = vld [vmem:[%s15 + $0x1c] sm:$0xf]
        %v2984 = vld [vmem:[%s15 + $0x20] sm:$0xf]
        %v2985 = vld [vmem:[%s15 + $0x24] sm:$0xf]
        %v2986 = vld [vmem:[%s15 + $0x28] sm:$0xf]
        %v2987 = vld [vmem:[%s15 + $0x2c] sm:$0xf]
        %v2988 = vld [vmem:[%s15 + $0x30] sm:$0xf]
        %v2989 = vld [vmem:[%s15 + $0x34] sm:$0xf]
        %v2990 = vld [vmem:[%s15 + $0x38] sm:$0xf]
        %v2991 = vld [vmem:[%s15 + $0x3c] sm:$0xf]
        %v2992 = vld [vmem:[%s16] sm:$0x1]
        %v2994 = vlaneseq
        %v2995 = vshrl.u32 %v2994, 7
        %v2996 = vsub.s32 0, %v2995
        %v2997 = vrot.slane %v2992, %v2996
        %v3015 = vunpack.c.l.b16 %v2976
        %v3016 = vunpack.c.l.b16 %v2977
        %v3017 = vunpack.c.l.b16 %v2978
        %v3018 = vunpack.c.l.b16 %v2979
        %v3019 = vunpack.c.l.b16 %v2980
        %v3020 = vunpack.c.l.b16 %v2981
        %v3021 = vunpack.c.l.b16 %v2982
        %v3022 = vunpack.c.l.b16 %v2983
        %v3023 = vunpack.c.l.b16 %v2984
        %v3024 = vunpack.c.l.b16 %v2985
        %v3025 = vunpack.c.l.b16 %v2986
        %v3026 = vunpack.c.l.b16 %v2987
        %v3027 = vunpack.c.l.b16 %v2988
        %v3028 = vunpack.c.l.b16 %v2989
        %v3029 = vunpack.c.l.b16 %v2990
        %v3030 = vunpack.c.l.b16 %v2991
        %v3031 = vpack.c.b16 %v3016, %v3015
        %v3032 = vpack.c.b16 %v3018, %v3017
        %v3033 = vpack.c.b16 %v3020, %v3019
        %v3034 = vpack.c.b16 %v3022, %v3021
        %v3035 = vpack.c.b16 %v3024, %v3023
        %v3036 = vpack.c.b16 %v3026, %v3025
        %v3037 = vpack.c.b16 %v3028, %v3027
        %v3038 = vpack.c.b16 %v3030, %v3029
        %3047 = vmatprep.subr.bf16.mxu0 0
        %3048 = vmatpush1.bf16.msra.mxu0 %v3031
        %3049 = vmatprep.subr.bf16.mxu0 0
        %3050 = vmatpush1.bf16.msra.mxu0 %v3032
        %3051 = vmatprep.subr.bf16.mxu0 0
        %3052 = vmatpush1.bf16.msra.mxu0 %v3033
        %3053 = vmatprep.subr.bf16.mxu0 0
        %3054 = vmatpush1.bf16.msra.mxu0 %v3034
        %3055 = vmatprep.subr.bf16.mxu0 0
        %3056 = vmatpush1.bf16.msra.mxu0 %v3035
        %3057 = vmatprep.subr.bf16.mxu0 0
        %3058 = vmatpush1.bf16.msra.mxu0 %v3036
        %3059 = vmatprep.subr.bf16.mxu0 0
        %3060 = vmatpush1.bf16.msra.mxu0 %v3037
        %3061 = vmatprep.subr.bf16.mxu0 0
        %3062 = vmatpush1.bf16.msra.mxu0 %v3038
        %3063 = vmatprep.subr.bf16.mxu0 0
        %3064 = vmatpush1.bf16.msra.mxu0 0
        %3065 = vmatprep.subr.bf16.mxu0 0
        %3066 = vmatpush1.bf16.msra.mxu0 0
        %3067 = vmatprep.subr.bf16.mxu0 0
        %3068 = vmatpush1.bf16.msra.mxu0 0
        %3069 = vmatprep.subr.bf16.mxu0 0
        %3070 = vmatpush1.bf16.msra.mxu0 0
        %3071 = vmatprep.subr.bf16.mxu0 0
        %3072 = vmatpush1.bf16.msra.mxu0 0
        %3073 = vmatprep.subr.bf16.mxu0 0
        %3074 = vmatpush1.bf16.msra.mxu0 0
        %3075 = vmatprep.subr.bf16.mxu0 0
        %3076 = vmatpush1.bf16.msra.mxu0 0
        %3077 = vmatprep.subr.bf16.mxu0 0
        %3078 = vmatpush1.bf16.msra.mxu0 0
        %3079 = vmatprep.mubr.bf16.mxu0 0
        %3080 = vmatmul.mubr.bf16.gmra.mrb[0].mxu0 %v2975
        %v3081 = vpop.f32.mrb[0].mxu0
        %v3082 = vadd.f32 %v2997, %v3081
        %v3083 = vpop.f32.mrb[0].mxu0
        %v3084 = vpop.f32.mrb[0].mxu0
        %v3085 = vadd.f32 %v2997, %v3084
        %v3086 = vpop.f32.mrb[0].mxu0
        %3087 = vdwg.mxu0
        %v3088 = vand.u32 2147483647, %v3082
        %v3089 = vand.u32 2147483647, %v3085
        %v3090 = vsub.f32 0.0, %v3088
        %v3091 = vsub.f32 0.0, %v3089
        %v3092 = vmul.f32 %v3090, 1.442695
        %v3093 = vpow.pop %v3092
        %v3094 = vmul.f32 %v3091, 1.442695
        %v3095 = vpow.pop %v3094
        %v3096 = vmax.f32 %v3082, 0.0
        %v3097 = vmax.f32 %v3085, 0.0
        %v3098 = vadd.f32 %v3093, 1.0
        %v3099 = vadd.f32 %v3095, 1.0
        %v3100 = vlog2.pop %v3098
        %v3101 = vmul.f32 %v3100, 0.6931472
        %v3102 = vlog2.pop %v3099
        %v3103 = vmul.f32 %v3102, 0.6931472
        %v3104 = vadd.f32 %v3096, %v3101
        %v3105 = vadd.f32 %v3097, %v3103
        %v3106 = vrcp.pop %v3098
        %v3107 = vmul.f32 1.0, %v3106
        %v3108 = vrcp.pop %v3099
        %v3109 = vmul.f32 1.0, %v3108
        %vm3110 = vcmp.ge.f32.partialorder %v3082, 0.0
        %vm3111 = vcmp.ge.f32.partialorder %v3085, 0.0
        %v3112 = vmul.f32 %v3093, %v3107
        %v3113 = vmul.f32 %v3095, %v3109
        %v3114 = vsel %vm3110, %v3107, %v3112
        %v3115 = vsel %vm3111, %v3109, %v3113
        %v3116 = vld [vmem:[%s17] sm:$0x1]
        %vm3117 = vcmp.gt.f32.partialorder %v3116, 0.5
        %v3118 = vsel %vm3117, 1, 0
        %v3119 = vlaneseq
        %v3120 = vshrl.u32 %v3119, 7
        %v3121 = vsub.s32 0, %v3120
        %v3122 = vrot.slane %v3118, %v3121
        %vm3123 = vcmp.eq.s32.totalorder %v3122, 1
        %v3124 = vsel %vm3123, %v3104, %v3114
        %v3125 = vsel %vm3123, %v3105, %v3115
        %3126 = vst [vmem:[%s646] sm:$0xff] %v3124
        %3127 = vst [vmem:[%s646 + $0x8] sm:$0xff] %v3125
        %p3128 = scmp.lt.s32.totalorder %s32, 1
        %s3129 = scalar_select %p3128, %s32, 1
        %s3130 = smul.addr %s3129, 2
        %s3131 = smul.addr %s3130, 8
        %s3132 = scalar_lea.vmem %s19, %s3131
        // Predicated region
        $region109: #{gnnui_zinb_forward.1} parent=95 // pred_check
          %p3133 = pneg %p454
        $region110: #{gnnui_zinb_forward.1} parent=95 // pred_check_branch
          %3135 = sbr.rel (%p3133) target = $region112
        $region111: #{gnnui_zinb_forward.1} parent=95 // pred_region
          _
        $region112: #{gnnui_zinb_forward.1} parent=95 // pred_fallthru
          _
      $region96: #{gnnui_zinb_forward.1} parent=5 // pred_fallthru
        _
      %p3136 = scmp.le.s32.totalorder 2, %s27
      // Predicated region
      $region113: #{gnnui_zinb_forward.1} parent=5 // pred_check
        %p3137 = pneg %p3136
      $region114: #{gnnui_zinb_forward.1} parent=5 // pred_check_branch
        %3139 = sbr.rel (%p3137) target = $region116
      $region115: #{gnnui_zinb_forward.1} parent=5 // pred_region
        %s3140 = ssub.s32 %s27, 2
        // Predicated region
        $region117: #{gnnui_zinb_forward.1} parent=115 // pred_check
          %p3141 = pneg %p460
        $region118: #{gnnui_zinb_forward.1} parent=115 // pred_check_branch
          %3143 = sbr.rel (%p3141) target = $region120
        $region119: #{gnnui_zinb_forward.1} parent=115 // pred_region
          %p3144 = scmp.lt.s32.totalorder %s33, 1
          %s3145 = scalar_select %p3144, %s33, 1
          %s3146 = smul.addr %s3145, 2
          %s3147 = smul.addr %s3146, 8
          %s3148 = scalar_lea.vmem %s19, %s3147
        $region120: #{gnnui_zinb_forward.1} parent=115 // pred_fallthru
          _
      $region116: #{gnnui_zinb_forward.1} parent=5 // pred_fallthru
        _
    $region6: #{gnnui_zinb_forward.1} parent=1 // loop_footer
      %s31 = sadd.s32 1, %s27
    $region7: #{gnnui_zinb_forward.1} parent=1 // loop_footer_branch
      %26 = sbr.rel target = $region3
    $region8: #{gnnui_zinb_forward.1} parent=1 // loop_exit
      _
    %3149 = vsyncpa [#allocation3], 1
    %s3150 = scalar_lea.sflag [#allocation3], 1
    %3151 = vsyncpa %s3150, 1
    %3152 = vsyncpa [#allocation5], 1

</llo_original>
